<compile_context>
chip_gen: v7x
topology: tpu7x:2x2x1
jax: 0.10.0
libtpu: 0.0.40
codegen_flags: <defaults>
</compile_context>

<pallas_src>
import functools
import math

import jax
import jax.numpy as jnp
from jax.experimental import pallas as pl
from jax.experimental.pallas import tpu as pltpu

# Hyperparameters mirroring
# GRUModel(input_dim, output_dim, sequence_dim, mid_dim=32, hidden_layers=3,
#          dropout_rate=0.5, bidirectional=False, MCDropout=0.5)
INPUT_DIM = 8
OUTPUT_DIM = 4
SEQ_LEN = 8          # sequence_dim
MID_DIM = 32         # hidden size (mid_dim)
NUM_LAYERS = 3       # hidden_layers
MC_DROPOUT_P = 0.5

# Packed gate width: r|z|n contiguous (3*H lanes) padded up to a 128-lane tile.
GATE_W = ((3 * MID_DIM + 127) // 128) * 128
assert GATE_W == 128


# ---------------------------------------------------------------------------
# Kernel
# ---------------------------------------------------------------------------
def gru_kernel(x_ref, drop_ref, wih0_ref, wihr_ref, whh_ref,
               gbias_ref, bhn_ref, wpred_ref, bpred_ref, out_ref, hseq_ref):
    """Full GRU stack + MC dropout + linear head for one batch shard.

    x_ref:     (T, Bs, I)  bf16   time-major input shard
    drop_ref:  (Bs, H)     f32    pre-scaled dropout mask (0 or 1/(1-p))
    wih0_ref:  (I, GW)     bf16   layer-0 input weights (transposed, gate-packed)
    wihr_ref:  (L-1, H, GW) bf16  layers 1.. input weights
    whh_ref:   (L, H, GW)  bf16   hidden weights
    gbias_ref: (L, 1, GW)  f32    b_ih + [b_hr, b_hz, 0] (folded, gate-packed)
    bhn_ref:   (L, 1, H)   f32    b_hn per layer
    wpred_ref: (H, O) f32, bpred_ref: (1, O) f32
    out_ref:   (Bs, O) f32
    hseq_ref:  (T*Bs, H) f32 VMEM scratch: per-layer hidden-state sequence
    """
    T, Bs, I = x_ref.shape
    L = whh_ref.shape[0]
    H = whh_ref.shape[1]         # real hidden size (32)

    # Layer-0 input flattened to (T*Bs, I) so the input->hidden matmul of the
    # whole sequence is ONE MXU op instead of T tiny per-step matmuls.
    seq_in = x_ref[...].reshape(T * Bs, I)          # bf16

    h = jnp.zeros((Bs, H), jnp.float32)
    for layer in range(L):                          # L static -> unrolled
        w_ih = wih0_ref[...] if layer == 0 else wihr_ref[layer - 1]
        w_hh = whh_ref[layer]
        last = (layer == L - 1)

        # Hoisted input->hidden matmul (bf16 operands, f32 accumulation),
        # biases b_ih + b_hr/b_hz folded in.
        gi = (jnp.dot(seq_in, w_ih, preferred_element_type=jnp.float32)
              + gbias_ref[layer])                   # (T*Bs, GW) f32

        # Hoist the b_hn broadcast out of the unrolled time loop (JAX does not
        # CSE broadcast_in_dim).
        b_hn = jnp.broadcast_to(bhn_ref[layer], (Bs, H))

        h = jnp.zeros((Bs, H), jnp.float32)
        h_bf = jnp.zeros((Bs, H), jnp.bfloat16)
        for t in range(T):                          # T static -> fully unrolled
            gi_t = gi[t * Bs:(t + 1) * Bs, :]
            # Recurrent matmul: (Bs, H) @ (H, GW) -> one 128-lane output tile.
            gh = jnp.dot(h_bf, w_hh, preferred_element_type=jnp.float32)
            # PyTorch gate order r, z, n packed contiguously in the lane dim.
            rz = jax.nn.sigmoid(gi_t[:, :2 * H] + gh[:, :2 * H])
            r = rz[:, :H]
            z = rz[:, H:2 * H]
            n = jnp.tanh(gi_t[:, 2 * H:3 * H] + r * (gh[:, 2 * H:3 * H] + b_hn))
            h = n + z * (h - n)                     # == (1-z)*n + z*h
            h_bf = h.astype(jnp.bfloat16)
            if not last:
                hseq_ref[t * Bs:(t + 1) * Bs, :] = h

        if not last:
            # The hidden-state sequence feeds the next layer's hoisted matmul.
            seq_in = hseq_ref[...].astype(jnp.bfloat16)

    # ---- MC dropout (always active, p=0.5) ----
    # Only the last time step feeds the Linear head, so dropping out the
    # last-step top-layer hidden state is equivalent to the PyTorch code.
    # TODO(synk): nn.GRU inter-layer dropout is training-mode only; this kernel
    # models the eval-mode GRU (inter-layer dropout off). MC dropout stays active.
    h_drop = h * drop_ref[...]

    # ---- linear head on the last time step (tiny, kept in f32) ----
    out_ref[...] = (jnp.dot(h_drop, wpred_ref[...],
                            preferred_element_type=jnp.float32)
                    + bpred_ref[...])


# ---------------------------------------------------------------------------
# pallas_call builder
# ---------------------------------------------------------------------------
def _default_num_blocks(beff):
    """1 on single-TensorCore chips (v5e/v6e: the grid is a sequential loop),
    2 on v7x (two TensorCores) when each shard keeps a multiple of 8 rows."""
    try:
        kind = jax.devices()[0].device_kind.lower()
    except Exception:
        return 1
    if "7" in kind and beff >= 16 and beff % 16 == 0:
        return 2
    return 1


def _build_call(T, Beff, I, O, num_blocks, vmem_limit_bytes=None):
    assert Beff % num_blocks == 0, (Beff, num_blocks)
    Bs = Beff // num_blocks
    assert Bs == Beff or Bs % 8 == 0, "batch shard must be a multiple of 8"

    # Rough per-shard VMEM need: x block (double-buffered, bf16), gi (f32,
    # live one layer at a time), hidden-sequence scratch (f32), weights/margin.
    est = (2 * T * Bs * I * 2
           + T * Bs * GATE_W * 4
           + T * Bs * MID_DIM * 4
           + (1 << 20))
    assert est <= (48 << 20), (
        "per-shard VMEM estimate too large for v7x (64 MiB physical); "
        "increase num_blocks or reduce the MC fold")
    if vmem_limit_bytes is None and est > (12 << 20):
        # Large MC folds can exceed the default scoped-VMEM limit (16 MiB on
        # v5e); raise it explicitly but stay well under v7x's 64 MiB physical.
        vmem_limit_bytes = min(int(1.5 * est) + (8 << 20), 56 << 20)

    vmem = pl.BlockSpec(memory_space=pltpu.MemorySpace.VMEM)
    return pl.pallas_call(
        gru_kernel,
        out_shape=jax.ShapeDtypeStruct((Beff, O), jnp.float32),
        grid=(num_blocks,),
        in_specs=[
            pl.BlockSpec((T, Bs, I), lambda s: (0, s, 0)),       # x (time-major)
            pl.BlockSpec((Bs, MID_DIM), lambda s: (s, 0)),       # dropout scale
            vmem,  # w_ih0
            vmem,  # w_ih_rest
            vmem,  # w_hh
            vmem,  # g_bias
            vmem,  # b_hn
            vmem,  # w_pred
            vmem,  # b_pred
        ],
        out_specs=pl.BlockSpec((Bs, O), lambda s: (s, 0)),
        scratch_shapes=[pltpu.VMEM((T * Bs, MID_DIM), jnp.float32)],
        compiler_params=pltpu.CompilerParams(
            dimension_semantics=("parallel",),
            vmem_limit_bytes=vmem_limit_bytes),
    )


# ---------------------------------------------------------------------------
# Parameters (PyTorch-shaped init + packing to the packed bf16 kernel layout)
# ---------------------------------------------------------------------------
def init_torch_params(key, input_dim=INPUT_DIM, output_dim=OUTPUT_DIM,
                      hidden=MID_DIM, layers=NUM_LAYERS):
    """PyTorch-style shapes/init: W_ih (3H,in), W_hh (3H,H), U(-1/sqrt(H),1/sqrt(H))."""
    k = 1.0 / math.sqrt(hidden)
    keys = jax.random.split(key, 4 * layers + 2)
    u = lambda kk, shape: jax.random.uniform(kk, shape, jnp.float32, -k, k)
    p = {"w_ih": [], "w_hh": [], "b_ih": [], "b_hh": []}
    idx = 0
    for l in range(layers):
        in_l = input_dim if l == 0 else hidden
        p["w_ih"].append(u(keys[idx], (3 * hidden, in_l))); idx += 1
        p["w_hh"].append(u(keys[idx], (3 * hidden, hidden))); idx += 1
        p["b_ih"].append(u(keys[idx], (3 * hidden,))); idx += 1
        p["b_hh"].append(u(keys[idx], (3 * hidden,))); idx += 1
    p["w_pred"] = u(keys[idx], (output_dim, hidden)); idx += 1
    p["b_pred"] = u(keys[idx], (output_dim,))
    return p


def pack_params(p, hidden=MID_DIM):
    """Transpose, pack the 3 gates contiguously into one 128-lane block, cast
    GRU weights to bf16, and fold biases for the hoisted input->hidden matmul."""
    H = hidden
    L = len(p["w_hh"])

    def pack_cols(w_t):      # (rows, 3H) -> (rows, GATE_W): [r|z|n|pad]
        return jnp.pad(w_t, ((0, 0), (0, GATE_W - 3 * H)))

    w_ih0 = pack_cols(p["w_ih"][0].T).astype(jnp.bfloat16)               # (I, GW)
    w_ih_rest = jnp.stack([pack_cols(p["w_ih"][l].T)
                           for l in range(1, L)]).astype(jnp.bfloat16)   # (L-1, H, GW)
    w_hh = jnp.stack([pack_cols(p["w_hh"][l].T)
                      for l in range(L)]).astype(jnp.bfloat16)           # (L, H, GW)

    def gate_bias(l):        # b_ih + [b_hr, b_hz, 0]; b_hn stays separate (mult. by r)
        b_ih, b_hh = p["b_ih"][l], p["b_hh"][l]
        b = b_ih + jnp.concatenate([b_hh[:2 * H], jnp.zeros((H,), jnp.float32)])
        return jnp.pad(b, (0, GATE_W - 3 * H))[None, :]

    g_bias = jnp.stack([gate_bias(l) for l in range(L)])                 # (L, 1, GW) f32
    b_hn = jnp.stack([p["b_hh"][l][2 * H:][None, :] for l in range(L)])  # (L, 1, H) f32

    w_pred = p["w_pred"].T                                               # (H, O) f32
    b_pred = p["b_pred"][None, :]                                        # (1, O) f32
    return dict(w_ih0=w_ih0, w_ih_rest=w_ih_rest, w_hh=w_hh,
                g_bias=g_bias, b_hn=b_hn, w_pred=w_pred, b_pred=b_pred)


def mc_dropout_scale(key, rows):
    """Fresh MC-dropout keep-mask, pre-scaled by 1/(1-p). Shape (rows, MID_DIM)."""
    keep = jax.random.bernoulli(key, 1.0 - MC_DROPOUT_P, (rows, MID_DIM))
    return keep.astype(jnp.float32) * (1.0 / (1.0 - MC_DROPOUT_P))


# ---------------------------------------------------------------------------
# Forward wrappers
# ---------------------------------------------------------------------------
@functools.partial(jax.jit, static_argnames=("num_blocks",))
def _gru_forward_impl(x, packed, dropout_key, num_blocks):
    B, T, I = x.shape
    O = packed["w_pred"].shape[1]
    x_tm = jnp.transpose(x, (1, 0, 2)).astype(jnp.bfloat16)   # (T, B, I) time-major
    drop = mc_dropout_scale(dropout_key, B)
    call = _build_call(T, B, I, O, num_blocks)
    return call(x_tm, drop, packed["w_ih0"], packed["w_ih_rest"], packed["w_hh"],
                packed["g_bias"], packed["b_hn"], packed["w_pred"], packed["b_pred"])


def gru_model_forward(x, packed, dropout_key, num_blocks=None):
    """x: (B, T, input_dim) float32, batch_first like PyTorch. Returns (B, output_dim)."""
    if num_blocks is None:
        num_blocks = _default_num_blocks(x.shape[0])
    return _gru_forward_impl(x, packed, dropout_key, num_blocks)


@functools.partial(jax.jit, static_argnames=("num_samples", "num_blocks"))
def _gru_forward_mc_impl(x, packed, dropout_key, num_samples, num_blocks):
    B, T, I = x.shape
    O = packed["w_pred"].shape[1]
    Beff = num_samples * B
    x_tm = jnp.transpose(x, (1, 0, 2)).astype(jnp.bfloat16)   # (T, B, I)
    x_tm = jnp.tile(x_tm, (1, num_samples, 1))                # (T, S*B, I), sample-major
    drop = mc_dropout_scale(dropout_key, Beff)                # distinct mask per row
    call = _build_call(T, Beff, I, O, num_blocks)
    out = call(x_tm, drop, packed["w_ih0"], packed["w_ih_rest"], packed["w_hh"],
               packed["g_bias"], packed["b_hn"], packed["w_pred"], packed["b_pred"])
    return out.reshape(num_samples, B, O)


def gru_model_forward_mc(x, packed, dropout_key, num_samples, num_blocks=None):
    """Monte-Carlo batched forward: folds `num_samples` MC samples into the
    batch (sublane/MXU-M) dimension so one serial recurrence serves all samples.
    For best MXU utilization size num_samples*B toward ~256 rows per shard.
    Returns (num_samples, B, output_dim)."""
    if num_blocks is None:
        num_blocks = _default_num_blocks(num_samples * x.shape[0])
    return _gru_forward_mc_impl(x, packed, dropout_key, num_samples, num_blocks)


# ---------------------------------------------------------------------------
# Pure-JAX reference (unpadded f32, PyTorch equations) for correctness checking
# ---------------------------------------------------------------------------
def gru_reference(x, tp, drop_scale):
    B, T, _ = x.shape
    H = tp["w_hh"][0].shape[1]
    seq = jnp.transpose(x, (1, 0, 2)).astype(jnp.float32)
    hp = jax.lax.Precision.HIGHEST
    for l in range(len(tp["w_hh"])):
        w_ih, w_hh = tp["w_ih"][l], tp["w_hh"][l]
        b_ih, b_hh = tp["b_ih"][l], tp["b_hh"][l]
        h = jnp.zeros((B, H), jnp.float32)
        outs = []
        for t in range(T):
            gi = jnp.dot(seq[t], w_ih.T, precision=hp) + b_ih
            gh = jnp.dot(h, w_hh.T, precision=hp) + b_hh
            r = jax.nn.sigmoid(gi[:, :H] + gh[:, :H])
            z = jax.nn.sigmoid(gi[:, H:2 * H] + gh[:, H:2 * H])
            n = jnp.tanh(gi[:, 2 * H:] + r * gh[:, 2 * H:])
            h = (1.0 - z) * n + z * h
            outs.append(h)
        seq = jnp.stack(outs, axis=0)
    h_drop = seq[-1] * drop_scale
    return jnp.dot(h_drop, tp["w_pred"].T, precision=hp) + tp["b_pred"][None, :]


if __name__ == "__main__":
    key = jax.random.PRNGKey(0)
    pkey, xkey, dkey, mckey = jax.random.split(key, 4)

    tparams = init_torch_params(pkey)
    packed = pack_params(tparams)

    B = 8
    x = jax.random.normal(xkey, (B, SEQ_LEN, INPUT_DIM), jnp.float32)

    # Single forward pass (one MC sample), matching the PyTorch module semantics.
    y = gru_model_forward(x, packed, dkey)
    jax.block_until_ready(y)
    assert y.shape == (B, OUTPUT_DIM), y.shape
    assert bool(jnp.all(jnp.isfinite(y)))

    # Check against the f32 pure-JAX reference with the identical dropout mask
    # (bf16 MXU operands -> slightly looser tolerance than pure f32).
    drop_full = mc_dropout_scale(dkey, B)
    y_ref = gru_reference(x, tparams, drop_full)
    err = float(jnp.max(jnp.abs(y - y_ref)))
    assert err < 3e-2, err

    # MC-batched path: 4 samples folded into the batch dim; exercise the
    # 2-shard "parallel" grid explicitly so it is covered on every chip.
    y_mc = gru_model_forward_mc(x, packed, mckey, num_samples=4, num_blocks=2)
    jax.block_until_ready(y_mc)
    assert y_mc.shape == (4, B, OUTPUT_DIM), y_mc.shape
    assert bool(jnp.all(jnp.isfinite(y_mc)))
    drop_mc = mc_dropout_scale(mckey, 4 * B).reshape(4, B, MID_DIM)
    for s in range(4):
        ref_s = gru_reference(x, tparams, drop_mc[s])
        err_s = float(jnp.max(jnp.abs(y_mc[s] - ref_s)))
        assert err_s < 3e-2, (s, err_s)

    # Generation-aware default num_blocks (1 on v5e/v6e, 2 on v7x) must give
    # the same numbers as the explicit 2-shard run.
    y_mc2 = gru_model_forward_mc(x, packed, mckey, num_samples=4)
    jax.block_until_ready(y_mc2)
    assert bool(jnp.allclose(y_mc, y_mc2, atol=1e-5)), "sharding changed results"

    print("KERNEL_OK")
</pallas_src>

<mosaic_0001>
module attributes {stable_mosaic.version = 11 : i64} {
  func.func @gru_kernel(%arg0: i32, %arg1: memref<8x8x8xbf16, #tpu.memory_space<vmem>>, %arg2: memref<8x32xf32, #tpu.memory_space<vmem>>, %arg3: memref<8x128xbf16, #tpu.memory_space<vmem>>, %arg4: memref<2x32x128xbf16, #tpu.memory_space<vmem>>, %arg5: memref<3x32x128xbf16, #tpu.memory_space<vmem>>, %arg6: memref<3x1x128xf32, #tpu.memory_space<vmem>>, %arg7: memref<3x1x32xf32, #tpu.memory_space<vmem>>, %arg8: memref<32x4xf32, #tpu.memory_space<vmem>>, %arg9: memref<1x4xf32, #tpu.memory_space<vmem>>, %arg10: memref<8x4xf32, #tpu.memory_space<vmem>>, %arg11: memref<64x32xf32, #tpu.memory_space<vmem>>) attributes {dimension_semantics = [#tpu.dimension_semantics<parallel>], iteration_bounds = array<i64: 1>, scalar_prefetch = 0 : i64, scratch_operands = 1 : i64, tpu.core_type = #tpu.core_type<tc>, window_params = [{transform_indices = @transform_0, window_bounds = array<i64: 8, 8, 8>}, {transform_indices = @transform_1, window_bounds = array<i64: 8, 32>}, {pipeline_mode = #tpu.pipeline_mode<synchronous>, transform_indices = @transform_2, window_bounds = array<i64: 8, 128>}, {pipeline_mode = #tpu.pipeline_mode<synchronous>, transform_indices = @transform_3, window_bounds = array<i64: 2, 32, 128>}, {pipeline_mode = #tpu.pipeline_mode<synchronous>, transform_indices = @transform_4, window_bounds = array<i64: 3, 32, 128>}, {pipeline_mode = #tpu.pipeline_mode<synchronous>, transform_indices = @transform_5, window_bounds = array<i64: 3, 1, 128>}, {pipeline_mode = #tpu.pipeline_mode<synchronous>, transform_indices = @transform_6, window_bounds = array<i64: 3, 1, 32>}, {pipeline_mode = #tpu.pipeline_mode<synchronous>, transform_indices = @transform_7, window_bounds = array<i64: 32, 4>}, {pipeline_mode = #tpu.pipeline_mode<synchronous>, transform_indices = @transform_8, window_bounds = array<i64: 1, 4>}, {transform_indices = @transform_9, window_bounds = array<i64: 8, 4>}]} {
    %c0 = arith.constant 0 : index
    %c0_0 = arith.constant 0 : index
    %c0_1 = arith.constant 0 : index
    %0 = vector.load %arg1[%c0, %c0_0, %c0_1] : memref<8x8x8xbf16, #tpu.memory_space<vmem>>, vector<8x8x8xbf16>
    %1 = vector.shape_cast %0 : vector<8x8x8xbf16> to vector<64x8xbf16>
    %c0_2 = arith.constant 0 : index
    %c0_3 = arith.constant 0 : index
    %2 = vector.load %arg3[%c0_2, %c0_3] : memref<8x128xbf16, #tpu.memory_space<vmem>>, vector<8x128xbf16>
    %c0_4 = arith.constant 0 : index
    %c0_5 = arith.constant 0 : index
    %c0_6 = arith.constant 0 : index
    %3 = vector.load %arg5[%c0_4, %c0_5, %c0_6] : memref<3x32x128xbf16, #tpu.memory_space<vmem>>, vector<1x32x128xbf16>
    %4 = vector.shape_cast %3 : vector<1x32x128xbf16> to vector<32x128xbf16>
    %cst = arith.constant dense<0.000000e+00> : vector<64x128xf32>
    %5 = tpu.matmul %1, %2, %cst {dimension_numbers = #tpu.dot_dimension_numbers<[1], [0], [0], [1], [0, 0, 1, 1], [], []>} : vector<64x8xbf16>, vector<8x128xbf16>, vector<64x128xf32> -> vector<64x128xf32>
    %c0_7 = arith.constant 0 : index
    %c0_8 = arith.constant 0 : index
    %c0_9 = arith.constant 0 : index
    %6 = vector.load %arg6[%c0_7, %c0_8, %c0_9] : memref<3x1x128xf32, #tpu.memory_space<vmem>>, vector<1x1x128xf32>
    %7 = vector.shape_cast %6 : vector<1x1x128xf32> to vector<1x128xf32>
    %8 = vector.broadcast %7 : vector<1x128xf32> to vector<64x128xf32>
    %9 = arith.addf %5, %8 : vector<64x128xf32>
    %c0_10 = arith.constant 0 : index
    %c0_11 = arith.constant 0 : index
    %c0_12 = arith.constant 0 : index
    %10 = vector.load %arg7[%c0_10, %c0_11, %c0_12] : memref<3x1x32xf32, #tpu.memory_space<vmem>>, vector<1x1x32xf32>
    %11 = vector.shape_cast %10 : vector<1x1x32xf32> to vector<1x32xf32>
    %12 = vector.shape_cast %11 : vector<1x32xf32> to vector<1x32xf32>
    %13 = vector.broadcast %12 : vector<1x32xf32> to vector<8x32xf32>
    %cst_13 = arith.constant 0.000000e+00 : f32
    %14 = vector.broadcast %cst_13 : f32 to vector<8x32xf32>
    %cst_14 = arith.constant 0.000000e+00 : bf16
    %15 = vector.broadcast %cst_14 : bf16 to vector<8x32xbf16>
    %16 = vector.extract_strided_slice %9 {offsets = [0, 0], sizes = [8, 128], strides = [1, 1]} : vector<64x128xf32> to vector<8x128xf32>
    %cst_15 = arith.constant dense<0.000000e+00> : vector<8x128xf32>
    %17 = tpu.matmul %15, %4, %cst_15 {dimension_numbers = #tpu.dot_dimension_numbers<[1], [0], [0], [1], [0, 0, 1, 1], [], []>} : vector<8x32xbf16>, vector<32x128xbf16>, vector<8x128xf32> -> vector<8x128xf32>
    %18 = vector.extract_strided_slice %16 {offsets = [0, 0], sizes = [8, 64], strides = [1, 1]} : vector<8x128xf32> to vector<8x64xf32>
    %19 = vector.extract_strided_slice %17 {offsets = [0, 0], sizes = [8, 64], strides = [1, 1]} : vector<8x128xf32> to vector<8x64xf32>
    %20 = arith.addf %18, %19 : vector<8x64xf32>
    %21 = arith.negf %20 : vector<8x64xf32>
    %22 = math.exp %21 : vector<8x64xf32>
    %cst_16 = arith.constant 1.000000e+00 : f32
    %23 = vector.broadcast %cst_16 : f32 to vector<8x64xf32>
    %24 = arith.addf %23, %22 : vector<8x64xf32>
    %25 = arith.divf %23, %24 : vector<8x64xf32>
    %26 = vector.extract_strided_slice %25 {offsets = [0, 0], sizes = [8, 32], strides = [1, 1]} : vector<8x64xf32> to vector<8x32xf32>
    %27 = vector.extract_strided_slice %25 {offsets = [0, 32], sizes = [8, 32], strides = [1, 1]} : vector<8x64xf32> to vector<8x32xf32>
    %28 = vector.extract_strided_slice %16 {offsets = [0, 64], sizes = [8, 32], strides = [1, 1]} : vector<8x128xf32> to vector<8x32xf32>
    %29 = vector.extract_strided_slice %17 {offsets = [0, 64], sizes = [8, 32], strides = [1, 1]} : vector<8x128xf32> to vector<8x32xf32>
    %30 = arith.addf %29, %13 : vector<8x32xf32>
    %31 = arith.mulf %26, %30 : vector<8x32xf32>
    %32 = arith.addf %28, %31 : vector<8x32xf32>
    %33 = math.tanh %32 : vector<8x32xf32>
    %34 = arith.subf %14, %33 : vector<8x32xf32>
    %35 = arith.mulf %27, %34 : vector<8x32xf32>
    %36 = arith.addf %33, %35 : vector<8x32xf32>
    %37 = arith.truncf %36 : vector<8x32xf32> to vector<8x32xbf16>
    %c0_17 = arith.constant 0 : index
    %c0_18 = arith.constant 0 : index
    %38 = vector.load %arg11[%c0_17, %c0_18] : memref<64x32xf32, #tpu.memory_space<vmem>>, vector<8x32xf32>
    tpu.vector_store %arg11[%c0_17, %c0_18], %36 {strides = array<i32>} : memref<64x32xf32, #tpu.memory_space<vmem>>, vector<8x32xf32>,
    %39 = vector.extract_strided_slice %9 {offsets = [8, 0], sizes = [8, 128], strides = [1, 1]} : vector<64x128xf32> to vector<8x128xf32>
    %cst_19 = arith.constant dense<0.000000e+00> : vector<8x128xf32>
    %40 = tpu.matmul %37, %4, %cst_19 {dimension_numbers = #tpu.dot_dimension_numbers<[1], [0], [0], [1], [0, 0, 1, 1], [], []>} : vector<8x32xbf16>, vector<32x128xbf16>, vector<8x128xf32> -> vector<8x128xf32>
    %41 = vector.extract_strided_slice %39 {offsets = [0, 0], sizes = [8, 64], strides = [1, 1]} : vector<8x128xf32> to vector<8x64xf32>
    %42 = vector.extract_strided_slice %40 {offsets = [0, 0], sizes = [8, 64], strides = [1, 1]} : vector<8x128xf32> to vector<8x64xf32>
    %43 = arith.addf %41, %42 : vector<8x64xf32>
    %44 = arith.negf %43 : vector<8x64xf32>
    %45 = math.exp %44 : vector<8x64xf32>
    %cst_20 = arith.constant 1.000000e+00 : f32
    %46 = vector.broadcast %cst_20 : f32 to vector<8x64xf32>
    %47 = arith.addf %46, %45 : vector<8x64xf32>
    %48 = arith.divf %46, %47 : vector<8x64xf32>
    %49 = vector.extract_strided_slice %48 {offsets = [0, 0], sizes = [8, 32], strides = [1, 1]} : vector<8x64xf32> to vector<8x32xf32>
    %50 = vector.extract_strided_slice %48 {offsets = [0, 32], sizes = [8, 32], strides = [1, 1]} : vector<8x64xf32> to vector<8x32xf32>
    %51 = vector.extract_strided_slice %39 {offsets = [0, 64], sizes = [8, 32], strides = [1, 1]} : vector<8x128xf32> to vector<8x32xf32>
    %52 = vector.extract_strided_slice %40 {offsets = [0, 64], sizes = [8, 32], strides = [1, 1]} : vector<8x128xf32> to vector<8x32xf32>
    %53 = arith.addf %52, %13 : vector<8x32xf32>
    %54 = arith.mulf %49, %53 : vector<8x32xf32>
    %55 = arith.addf %51, %54 : vector<8x32xf32>
    %56 = math.tanh %55 : vector<8x32xf32>
    %57 = arith.subf %36, %56 : vector<8x32xf32>
    %58 = arith.mulf %50, %57 : vector<8x32xf32>
    %59 = arith.addf %56, %58 : vector<8x32xf32>
    %60 = arith.truncf %59 : vector<8x32xf32> to vector<8x32xbf16>
    %c8 = arith.constant 8 : index
    %c0_21 = arith.constant 0 : index
    %61 = vector.load %arg11[%c8, %c0_21] : memref<64x32xf32, #tpu.memory_space<vmem>>, vector<8x32xf32>
    tpu.vector_store %arg11[%c8, %c0_21], %59 {strides = array<i32>} : memref<64x32xf32, #tpu.memory_space<vmem>>, vector<8x32xf32>,
    %62 = vector.extract_strided_slice %9 {offsets = [16, 0], sizes = [8, 128], strides = [1, 1]} : vector<64x128xf32> to vector<8x128xf32>
    %cst_22 = arith.constant dense<0.000000e+00> : vector<8x128xf32>
    %63 = tpu.matmul %60, %4, %cst_22 {dimension_numbers = #tpu.dot_dimension_numbers<[1], [0], [0], [1], [0, 0, 1, 1], [], []>} : vector<8x32xbf16>, vector<32x128xbf16>, vector<8x128xf32> -> vector<8x128xf32>
    %64 = vector.extract_strided_slice %62 {offsets = [0, 0], sizes = [8, 64], strides = [1, 1]} : vector<8x128xf32> to vector<8x64xf32>
    %65 = vector.extract_strided_slice %63 {offsets = [0, 0], sizes = [8, 64], strides = [1, 1]} : vector<8x128xf32> to vector<8x64xf32>
    %66 = arith.addf %64, %65 : vector<8x64xf32>
    %67 = arith.negf %66 : vector<8x64xf32>
    %68 = math.exp %67 : vector<8x64xf32>
    %cst_23 = arith.constant 1.000000e+00 : f32
    %69 = vector.broadcast %cst_23 : f32 to vector<8x64xf32>
    %70 = arith.addf %69, %68 : vector<8x64xf32>
    %71 = arith.divf %69, %70 : vector<8x64xf32>
    %72 = vector.extract_strided_slice %71 {offsets = [0, 0], sizes = [8, 32], strides = [1, 1]} : vector<8x64xf32> to vector<8x32xf32>
    %73 = vector.extract_strided_slice %71 {offsets = [0, 32], sizes = [8, 32], strides = [1, 1]} : vector<8x64xf32> to vector<8x32xf32>
    %74 = vector.extract_strided_slice %62 {offsets = [0, 64], sizes = [8, 32], strides = [1, 1]} : vector<8x128xf32> to vector<8x32xf32>
    %75 = vector.extract_strided_slice %63 {offsets = [0, 64], sizes = [8, 32], strides = [1, 1]} : vector<8x128xf32> to vector<8x32xf32>
    %76 = arith.addf %75, %13 : vector<8x32xf32>
    %77 = arith.mulf %72, %76 : vector<8x32xf32>
    %78 = arith.addf %74, %77 : vector<8x32xf32>
    %79 = math.tanh %78 : vector<8x32xf32>
    %80 = arith.subf %59, %79 : vector<8x32xf32>
    %81 = arith.mulf %73, %80 : vector<8x32xf32>
    %82 = arith.addf %79, %81 : vector<8x32xf32>
    %83 = arith.truncf %82 : vector<8x32xf32> to vector<8x32xbf16>
    %c16 = arith.constant 16 : index
    %c0_24 = arith.constant 0 : index
    %84 = vector.load %arg11[%c16, %c0_24] : memref<64x32xf32, #tpu.memory_space<vmem>>, vector<8x32xf32>
    tpu.vector_store %arg11[%c16, %c0_24], %82 {strides = array<i32>} : memref<64x32xf32, #tpu.memory_space<vmem>>, vector<8x32xf32>,
    %85 = vector.extract_strided_slice %9 {offsets = [24, 0], sizes = [8, 128], strides = [1, 1]} : vector<64x128xf32> to vector<8x128xf32>
    %cst_25 = arith.constant dense<0.000000e+00> : vector<8x128xf32>
    %86 = tpu.matmul %83, %4, %cst_25 {dimension_numbers = #tpu.dot_dimension_numbers<[1], [0], [0], [1], [0, 0, 1, 1], [], []>} : vector<8x32xbf16>, vector<32x128xbf16>, vector<8x128xf32> -> vector<8x128xf32>
    %87 = vector.extract_strided_slice %85 {offsets = [0, 0], sizes = [8, 64], strides = [1, 1]} : vector<8x128xf32> to vector<8x64xf32>
    %88 = vector.extract_strided_slice %86 {offsets = [0, 0], sizes = [8, 64], strides = [1, 1]} : vector<8x128xf32> to vector<8x64xf32>
    %89 = arith.addf %87, %88 : vector<8x64xf32>
    %90 = arith.negf %89 : vector<8x64xf32>
    %91 = math.exp %90 : vector<8x64xf32>
    %cst_26 = arith.constant 1.000000e+00 : f32
    %92 = vector.broadcast %cst_26 : f32 to vector<8x64xf32>
    %93 = arith.addf %92, %91 : vector<8x64xf32>
    %94 = arith.divf %92, %93 : vector<8x64xf32>
    %95 = vector.extract_strided_slice %94 {offsets = [0, 0], sizes = [8, 32], strides = [1, 1]} : vector<8x64xf32> to vector<8x32xf32>
    %96 = vector.extract_strided_slice %94 {offsets = [0, 32], sizes = [8, 32], strides = [1, 1]} : vector<8x64xf32> to vector<8x32xf32>
    %97 = vector.extract_strided_slice %85 {offsets = [0, 64], sizes = [8, 32], strides = [1, 1]} : vector<8x128xf32> to vector<8x32xf32>
    %98 = vector.extract_strided_slice %86 {offsets = [0, 64], sizes = [8, 32], strides = [1, 1]} : vector<8x128xf32> to vector<8x32xf32>
    %99 = arith.addf %98, %13 : vector<8x32xf32>
    %100 = arith.mulf %95, %99 : vector<8x32xf32>
    %101 = arith.addf %97, %100 : vector<8x32xf32>
    %102 = math.tanh %101 : vector<8x32xf32>
    %103 = arith.subf %82, %102 : vector<8x32xf32>
    %104 = arith.mulf %96, %103 : vector<8x32xf32>
    %105 = arith.addf %102, %104 : vector<8x32xf32>
    %106 = arith.truncf %105 : vector<8x32xf32> to vector<8x32xbf16>
    %c24 = arith.constant 24 : index
    %c0_27 = arith.constant 0 : index
    %107 = vector.load %arg11[%c24, %c0_27] : memref<64x32xf32, #tpu.memory_space<vmem>>, vector<8x32xf32>
    tpu.vector_store %arg11[%c24, %c0_27], %105 {strides = array<i32>} : memref<64x32xf32, #tpu.memory_space<vmem>>, vector<8x32xf32>,
    %108 = vector.extract_strided_slice %9 {offsets = [32, 0], sizes = [8, 128], strides = [1, 1]} : vector<64x128xf32> to vector<8x128xf32>
    %cst_28 = arith.constant dense<0.000000e+00> : vector<8x128xf32>
    %109 = tpu.matmul %106, %4, %cst_28 {dimension_numbers = #tpu.dot_dimension_numbers<[1], [0], [0], [1], [0, 0, 1, 1], [], []>} : vector<8x32xbf16>, vector<32x128xbf16>, vector<8x128xf32> -> vector<8x128xf32>
    %110 = vector.extract_strided_slice %108 {offsets = [0, 0], sizes = [8, 64], strides = [1, 1]} : vector<8x128xf32> to vector<8x64xf32>
    %111 = vector.extract_strided_slice %109 {offsets = [0, 0], sizes = [8, 64], strides = [1, 1]} : vector<8x128xf32> to vector<8x64xf32>
    %112 = arith.addf %110, %111 : vector<8x64xf32>
    %113 = arith.negf %112 : vector<8x64xf32>
    %114 = math.exp %113 : vector<8x64xf32>
    %cst_29 = arith.constant 1.000000e+00 : f32
    %115 = vector.broadcast %cst_29 : f32 to vector<8x64xf32>
    %116 = arith.addf %115, %114 : vector<8x64xf32>
    %117 = arith.divf %115, %116 : vector<8x64xf32>
    %118 = vector.extract_strided_slice %117 {offsets = [0, 0], sizes = [8, 32], strides = [1, 1]} : vector<8x64xf32> to vector<8x32xf32>
    %119 = vector.extract_strided_slice %117 {offsets = [0, 32], sizes = [8, 32], strides = [1, 1]} : vector<8x64xf32> to vector<8x32xf32>
    %120 = vector.extract_strided_slice %108 {offsets = [0, 64], sizes = [8, 32], strides = [1, 1]} : vector<8x128xf32> to vector<8x32xf32>
    %121 = vector.extract_strided_slice %109 {offsets = [0, 64], sizes = [8, 32], strides = [1, 1]} : vector<8x128xf32> to vector<8x32xf32>
    %122 = arith.addf %121, %13 : vector<8x32xf32>
    %123 = arith.mulf %118, %122 : vector<8x32xf32>
    %124 = arith.addf %120, %123 : vector<8x32xf32>
    %125 = math.tanh %124 : vector<8x32xf32>
    %126 = arith.subf %105, %125 : vector<8x32xf32>
    %127 = arith.mulf %119, %126 : vector<8x32xf32>
    %128 = arith.addf %125, %127 : vector<8x32xf32>
    %129 = arith.truncf %128 : vector<8x32xf32> to vector<8x32xbf16>
    %c32 = arith.constant 32 : index
    %c0_30 = arith.constant 0 : index
    %130 = vector.load %arg11[%c32, %c0_30] : memref<64x32xf32, #tpu.memory_space<vmem>>, vector<8x32xf32>
    tpu.vector_store %arg11[%c32, %c0_30], %128 {strides = array<i32>} : memref<64x32xf32, #tpu.memory_space<vmem>>, vector<8x32xf32>,
    %131 = vector.extract_strided_slice %9 {offsets = [40, 0], sizes = [8, 128], strides = [1, 1]} : vector<64x128xf32> to vector<8x128xf32>
    %cst_31 = arith.constant dense<0.000000e+00> : vector<8x128xf32>
    %132 = tpu.matmul %129, %4, %cst_31 {dimension_numbers = #tpu.dot_dimension_numbers<[1], [0], [0], [1], [0, 0, 1, 1], [], []>} : vector<8x32xbf16>, vector<32x128xbf16>, vector<8x128xf32> -> vector<8x128xf32>
    %133 = vector.extract_strided_slice %131 {offsets = [0, 0], sizes = [8, 64], strides = [1, 1]} : vector<8x128xf32> to vector<8x64xf32>
    %134 = vector.extract_strided_slice %132 {offsets = [0, 0], sizes = [8, 64], strides = [1, 1]} : vector<8x128xf32> to vector<8x64xf32>
    %135 = arith.addf %133, %134 : vector<8x64xf32>
    %136 = arith.negf %135 : vector<8x64xf32>
    %137 = math.exp %136 : vector<8x64xf32>
    %cst_32 = arith.constant 1.000000e+00 : f32
    %138 = vector.broadcast %cst_32 : f32 to vector<8x64xf32>
    %139 = arith.addf %138, %137 : vector<8x64xf32>
    %140 = arith.divf %138, %139 : vector<8x64xf32>
    %141 = vector.extract_strided_slice %140 {offsets = [0, 0], sizes = [8, 32], strides = [1, 1]} : vector<8x64xf32> to vector<8x32xf32>
    %142 = vector.extract_strided_slice %140 {offsets = [0, 32], sizes = [8, 32], strides = [1, 1]} : vector<8x64xf32> to vector<8x32xf32>
    %143 = vector.extract_strided_slice %131 {offsets = [0, 64], sizes = [8, 32], strides = [1, 1]} : vector<8x128xf32> to vector<8x32xf32>
    %144 = vector.extract_strided_slice %132 {offsets = [0, 64], sizes = [8, 32], strides = [1, 1]} : vector<8x128xf32> to vector<8x32xf32>
    %145 = arith.addf %144, %13 : vector<8x32xf32>
    %146 = arith.mulf %141, %145 : vector<8x32xf32>
    %147 = arith.addf %143, %146 : vector<8x32xf32>
    %148 = math.tanh %147 : vector<8x32xf32>
    %149 = arith.subf %128, %148 : vector<8x32xf32>
    %150 = arith.mulf %142, %149 : vector<8x32xf32>
    %151 = arith.addf %148, %150 : vector<8x32xf32>
    %152 = arith.truncf %151 : vector<8x32xf32> to vector<8x32xbf16>
    %c40 = arith.constant 40 : index
    %c0_33 = arith.constant 0 : index
    %153 = vector.load %arg11[%c40, %c0_33] : memref<64x32xf32, #tpu.memory_space<vmem>>, vector<8x32xf32>
    tpu.vector_store %arg11[%c40, %c0_33], %151 {strides = array<i32>} : memref<64x32xf32, #tpu.memory_space<vmem>>, vector<8x32xf32>,
    %154 = vector.extract_strided_slice %9 {offsets = [48, 0], sizes = [8, 128], strides = [1, 1]} : vector<64x128xf32> to vector<8x128xf32>
    %cst_34 = arith.constant dense<0.000000e+00> : vector<8x128xf32>
    %155 = tpu.matmul %152, %4, %cst_34 {dimension_numbers = #tpu.dot_dimension_numbers<[1], [0], [0], [1], [0, 0, 1, 1], [], []>} : vector<8x32xbf16>, vector<32x128xbf16>, vector<8x128xf32> -> vector<8x128xf32>
    %156 = vector.extract_strided_slice %154 {offsets = [0, 0], sizes = [8, 64], strides = [1, 1]} : vector<8x128xf32> to vector<8x64xf32>
    %157 = vector.extract_strided_slice %155 {offsets = [0, 0], sizes = [8, 64], strides = [1, 1]} : vector<8x128xf32> to vector<8x64xf32>
    %158 = arith.addf %156, %157 : vector<8x64xf32>
    %159 = arith.negf %158 : vector<8x64xf32>
    %160 = math.exp %159 : vector<8x64xf32>
    %cst_35 = arith.constant 1.000000e+00 : f32
    %161 = vector.broadcast %cst_35 : f32 to vector<8x64xf32>
    %162 = arith.addf %161, %160 : vector<8x64xf32>
    %163 = arith.divf %161, %162 : vector<8x64xf32>
    %164 = vector.extract_strided_slice %163 {offsets = [0, 0], sizes = [8, 32], strides = [1, 1]} : vector<8x64xf32> to vector<8x32xf32>
    %165 = vector.extract_strided_slice %163 {offsets = [0, 32], sizes = [8, 32], strides = [1, 1]} : vector<8x64xf32> to vector<8x32xf32>
    %166 = vector.extract_strided_slice %154 {offsets = [0, 64], sizes = [8, 32], strides = [1, 1]} : vector<8x128xf32> to vector<8x32xf32>
    %167 = vector.extract_strided_slice %155 {offsets = [0, 64], sizes = [8, 32], strides = [1, 1]} : vector<8x128xf32> to vector<8x32xf32>
    %168 = arith.addf %167, %13 : vector<8x32xf32>
    %169 = arith.mulf %164, %168 : vector<8x32xf32>
    %170 = arith.addf %166, %169 : vector<8x32xf32>
    %171 = math.tanh %170 : vector<8x32xf32>
    %172 = arith.subf %151, %171 : vector<8x32xf32>
    %173 = arith.mulf %165, %172 : vector<8x32xf32>
    %174 = arith.addf %171, %173 : vector<8x32xf32>
    %175 = arith.truncf %174 : vector<8x32xf32> to vector<8x32xbf16>
    %c48 = arith.constant 48 : index
    %c0_36 = arith.constant 0 : index
    %176 = vector.load %arg11[%c48, %c0_36] : memref<64x32xf32, #tpu.memory_space<vmem>>, vector<8x32xf32>
    tpu.vector_store %arg11[%c48, %c0_36], %174 {strides = array<i32>} : memref<64x32xf32, #tpu.memory_space<vmem>>, vector<8x32xf32>,
    %177 = vector.extract_strided_slice %9 {offsets = [56, 0], sizes = [8, 128], strides = [1, 1]} : vector<64x128xf32> to vector<8x128xf32>
    %cst_37 = arith.constant dense<0.000000e+00> : vector<8x128xf32>
    %178 = tpu.matmul %175, %4, %cst_37 {dimension_numbers = #tpu.dot_dimension_numbers<[1], [0], [0], [1], [0, 0, 1, 1], [], []>} : vector<8x32xbf16>, vector<32x128xbf16>, vector<8x128xf32> -> vector<8x128xf32>
    %179 = vector.extract_strided_slice %177 {offsets = [0, 0], sizes = [8, 64], strides = [1, 1]} : vector<8x128xf32> to vector<8x64xf32>
    %180 = vector.extract_strided_slice %178 {offsets = [0, 0], sizes = [8, 64], strides = [1, 1]} : vector<8x128xf32> to vector<8x64xf32>
    %181 = arith.addf %179, %180 : vector<8x64xf32>
    %182 = arith.negf %181 : vector<8x64xf32>
    %183 = math.exp %182 : vector<8x64xf32>
    %cst_38 = arith.constant 1.000000e+00 : f32
    %184 = vector.broadcast %cst_38 : f32 to vector<8x64xf32>
    %185 = arith.addf %184, %183 : vector<8x64xf32>
    %186 = arith.divf %184, %185 : vector<8x64xf32>
    %187 = vector.extract_strided_slice %186 {offsets = [0, 0], sizes = [8, 32], strides = [1, 1]} : vector<8x64xf32> to vector<8x32xf32>
    %188 = vector.extract_strided_slice %186 {offsets = [0, 32], sizes = [8, 32], strides = [1, 1]} : vector<8x64xf32> to vector<8x32xf32>
    %189 = vector.extract_strided_slice %177 {offsets = [0, 64], sizes = [8, 32], strides = [1, 1]} : vector<8x128xf32> to vector<8x32xf32>
    %190 = vector.extract_strided_slice %178 {offsets = [0, 64], sizes = [8, 32], strides = [1, 1]} : vector<8x128xf32> to vector<8x32xf32>
    %191 = arith.addf %190, %13 : vector<8x32xf32>
    %192 = arith.mulf %187, %191 : vector<8x32xf32>
    %193 = arith.addf %189, %192 : vector<8x32xf32>
    %194 = math.tanh %193 : vector<8x32xf32>
    %195 = arith.subf %174, %194 : vector<8x32xf32>
    %196 = arith.mulf %188, %195 : vector<8x32xf32>
    %197 = arith.addf %194, %196 : vector<8x32xf32>
    %c56 = arith.constant 56 : index
    %c0_39 = arith.constant 0 : index
    %198 = vector.load %arg11[%c56, %c0_39] : memref<64x32xf32, #tpu.memory_space<vmem>>, vector<8x32xf32>
    tpu.vector_store %arg11[%c56, %c0_39], %197 {strides = array<i32>} : memref<64x32xf32, #tpu.memory_space<vmem>>, vector<8x32xf32>,
    %c0_40 = arith.constant 0 : index
    %c0_41 = arith.constant 0 : index
    %199 = vector.load %arg11[%c0_40, %c0_41] : memref<64x32xf32, #tpu.memory_space<vmem>>, vector<64x32xf32>
    %200 = arith.truncf %199 : vector<64x32xf32> to vector<64x32xbf16>
    %c0_42 = arith.constant 0 : index
    %c0_43 = arith.constant 0 : index
    %c0_44 = arith.constant 0 : index
    %201 = vector.load %arg4[%c0_42, %c0_43, %c0_44] : memref<2x32x128xbf16, #tpu.memory_space<vmem>>, vector<1x32x128xbf16>
    %202 = vector.shape_cast %201 : vector<1x32x128xbf16> to vector<32x128xbf16>
    %c1 = arith.constant 1 : index
    %c0_45 = arith.constant 0 : index
    %c0_46 = arith.constant 0 : index
    %203 = vector.load %arg5[%c1, %c0_45, %c0_46] : memref<3x32x128xbf16, #tpu.memory_space<vmem>>, vector<1x32x128xbf16>
    %204 = vector.shape_cast %203 : vector<1x32x128xbf16> to vector<32x128xbf16>
    %cst_47 = arith.constant dense<0.000000e+00> : vector<64x128xf32>
    %205 = tpu.matmul %200, %202, %cst_47 {dimension_numbers = #tpu.dot_dimension_numbers<[1], [0], [0], [1], [0, 0, 1, 1], [], []>} : vector<64x32xbf16>, vector<32x128xbf16>, vector<64x128xf32> -> vector<64x128xf32>
    %c1_48 = arith.constant 1 : index
    %c0_49 = arith.constant 0 : index
    %c0_50 = arith.constant 0 : index
    %206 = vector.load %arg6[%c1_48, %c0_49, %c0_50] : memref<3x1x128xf32, #tpu.memory_space<vmem>>, vector<1x1x128xf32>
    %207 = vector.shape_cast %206 : vector<1x1x128xf32> to vector<1x128xf32>
    %208 = vector.broadcast %207 : vector<1x128xf32> to vector<64x128xf32>
    %209 = arith.addf %205, %208 : vector<64x128xf32>
    %c1_51 = arith.constant 1 : index
    %c0_52 = arith.constant 0 : index
    %c0_53 = arith.constant 0 : index
    %210 = vector.load %arg7[%c1_51, %c0_52, %c0_53] : memref<3x1x32xf32, #tpu.memory_space<vmem>>, vector<1x1x32xf32>
    %211 = vector.shape_cast %210 : vector<1x1x32xf32> to vector<1x32xf32>
    %212 = vector.shape_cast %211 : vector<1x32xf32> to vector<1x32xf32>
    %213 = vector.broadcast %212 : vector<1x32xf32> to vector<8x32xf32>
    %cst_54 = arith.constant 0.000000e+00 : f32
    %214 = vector.broadcast %cst_54 : f32 to vector<8x32xf32>
    %cst_55 = arith.constant 0.000000e+00 : bf16
    %215 = vector.broadcast %cst_55 : bf16 to vector<8x32xbf16>
    %216 = vector.extract_strided_slice %209 {offsets = [0, 0], sizes = [8, 128], strides = [1, 1]} : vector<64x128xf32> to vector<8x128xf32>
    %cst_56 = arith.constant dense<0.000000e+00> : vector<8x128xf32>
    %217 = tpu.matmul %215, %204, %cst_56 {dimension_numbers = #tpu.dot_dimension_numbers<[1], [0], [0], [1], [0, 0, 1, 1], [], []>} : vector<8x32xbf16>, vector<32x128xbf16>, vector<8x128xf32> -> vector<8x128xf32>
    %218 = vector.extract_strided_slice %216 {offsets = [0, 0], sizes = [8, 64], strides = [1, 1]} : vector<8x128xf32> to vector<8x64xf32>
    %219 = vector.extract_strided_slice %217 {offsets = [0, 0], sizes = [8, 64], strides = [1, 1]} : vector<8x128xf32> to vector<8x64xf32>
    %220 = arith.addf %218, %219 : vector<8x64xf32>
    %221 = arith.negf %220 : vector<8x64xf32>
    %222 = math.exp %221 : vector<8x64xf32>
    %cst_57 = arith.constant 1.000000e+00 : f32
    %223 = vector.broadcast %cst_57 : f32 to vector<8x64xf32>
    %224 = arith.addf %223, %222 : vector<8x64xf32>
    %225 = arith.divf %223, %224 : vector<8x64xf32>
    %226 = vector.extract_strided_slice %225 {offsets = [0, 0], sizes = [8, 32], strides = [1, 1]} : vector<8x64xf32> to vector<8x32xf32>
    %227 = vector.extract_strided_slice %225 {offsets = [0, 32], sizes = [8, 32], strides = [1, 1]} : vector<8x64xf32> to vector<8x32xf32>
    %228 = vector.extract_strided_slice %216 {offsets = [0, 64], sizes = [8, 32], strides = [1, 1]} : vector<8x128xf32> to vector<8x32xf32>
    %229 = vector.extract_strided_slice %217 {offsets = [0, 64], sizes = [8, 32], strides = [1, 1]} : vector<8x128xf32> to vector<8x32xf32>
    %230 = arith.addf %229, %213 : vector<8x32xf32>
    %231 = arith.mulf %226, %230 : vector<8x32xf32>
    %232 = arith.addf %228, %231 : vector<8x32xf32>
    %233 = math.tanh %232 : vector<8x32xf32>
    %234 = arith.subf %214, %233 : vector<8x32xf32>
    %235 = arith.mulf %227, %234 : vector<8x32xf32>
    %236 = arith.addf %233, %235 : vector<8x32xf32>
    %237 = arith.truncf %236 : vector<8x32xf32> to vector<8x32xbf16>
    %c0_58 = arith.constant 0 : index
    %c0_59 = arith.constant 0 : index
    %238 = vector.load %arg11[%c0_58, %c0_59] : memref<64x32xf32, #tpu.memory_space<vmem>>, vector<8x32xf32>
    tpu.vector_store %arg11[%c0_58, %c0_59], %236 {strides = array<i32>} : memref<64x32xf32, #tpu.memory_space<vmem>>, vector<8x32xf32>,
    %239 = vector.extract_strided_slice %209 {offsets = [8, 0], sizes = [8, 128], strides = [1, 1]} : vector<64x128xf32> to vector<8x128xf32>
    %cst_60 = arith.constant dense<0.000000e+00> : vector<8x128xf32>
    %240 = tpu.matmul %237, %204, %cst_60 {dimension_numbers = #tpu.dot_dimension_numbers<[1], [0], [0], [1], [0, 0, 1, 1], [], []>} : vector<8x32xbf16>, vector<32x128xbf16>, vector<8x128xf32> -> vector<8x128xf32>
    %241 = vector.extract_strided_slice %239 {offsets = [0, 0], sizes = [8, 64], strides = [1, 1]} : vector<8x128xf32> to vector<8x64xf32>
    %242 = vector.extract_strided_slice %240 {offsets = [0, 0], sizes = [8, 64], strides = [1, 1]} : vector<8x128xf32> to vector<8x64xf32>
    %243 = arith.addf %241, %242 : vector<8x64xf32>
    %244 = arith.negf %243 : vector<8x64xf32>
    %245 = math.exp %244 : vector<8x64xf32>
    %cst_61 = arith.constant 1.000000e+00 : f32
    %246 = vector.broadcast %cst_61 : f32 to vector<8x64xf32>
    %247 = arith.addf %246, %245 : vector<8x64xf32>
    %248 = arith.divf %246, %247 : vector<8x64xf32>
    %249 = vector.extract_strided_slice %248 {offsets = [0, 0], sizes = [8, 32], strides = [1, 1]} : vector<8x64xf32> to vector<8x32xf32>
    %250 = vector.extract_strided_slice %248 {offsets = [0, 32], sizes = [8, 32], strides = [1, 1]} : vector<8x64xf32> to vector<8x32xf32>
    %251 = vector.extract_strided_slice %239 {offsets = [0, 64], sizes = [8, 32], strides = [1, 1]} : vector<8x128xf32> to vector<8x32xf32>
    %252 = vector.extract_strided_slice %240 {offsets = [0, 64], sizes = [8, 32], strides = [1, 1]} : vector<8x128xf32> to vector<8x32xf32>
    %253 = arith.addf %252, %213 : vector<8x32xf32>
    %254 = arith.mulf %249, %253 : vector<8x32xf32>
    %255 = arith.addf %251, %254 : vector<8x32xf32>
    %256 = math.tanh %255 : vector<8x32xf32>
    %257 = arith.subf %236, %256 : vector<8x32xf32>
    %258 = arith.mulf %250, %257 : vector<8x32xf32>
    %259 = arith.addf %256, %258 : vector<8x32xf32>
    %260 = arith.truncf %259 : vector<8x32xf32> to vector<8x32xbf16>
    %c8_62 = arith.constant 8 : index
    %c0_63 = arith.constant 0 : index
    %261 = vector.load %arg11[%c8_62, %c0_63] : memref<64x32xf32, #tpu.memory_space<vmem>>, vector<8x32xf32>
    tpu.vector_store %arg11[%c8_62, %c0_63], %259 {strides = array<i32>} : memref<64x32xf32, #tpu.memory_space<vmem>>, vector<8x32xf32>,
    %262 = vector.extract_strided_slice %209 {offsets = [16, 0], sizes = [8, 128], strides = [1, 1]} : vector<64x128xf32> to vector<8x128xf32>
    %cst_64 = arith.constant dense<0.000000e+00> : vector<8x128xf32>
    %263 = tpu.matmul %260, %204, %cst_64 {dimension_numbers = #tpu.dot_dimension_numbers<[1], [0], [0], [1], [0, 0, 1, 1], [], []>} : vector<8x32xbf16>, vector<32x128xbf16>, vector<8x128xf32> -> vector<8x128xf32>
    %264 = vector.extract_strided_slice %262 {offsets = [0, 0], sizes = [8, 64], strides = [1, 1]} : vector<8x128xf32> to vector<8x64xf32>
    %265 = vector.extract_strided_slice %263 {offsets = [0, 0], sizes = [8, 64], strides = [1, 1]} : vector<8x128xf32> to vector<8x64xf32>
    %266 = arith.addf %264, %265 : vector<8x64xf32>
    %267 = arith.negf %266 : vector<8x64xf32>
    %268 = math.exp %267 : vector<8x64xf32>
    %cst_65 = arith.constant 1.000000e+00 : f32
    %269 = vector.broadcast %cst_65 : f32 to vector<8x64xf32>
    %270 = arith.addf %269, %268 : vector<8x64xf32>
    %271 = arith.divf %269, %270 : vector<8x64xf32>
    %272 = vector.extract_strided_slice %271 {offsets = [0, 0], sizes = [8, 32], strides = [1, 1]} : vector<8x64xf32> to vector<8x32xf32>
    %273 = vector.extract_strided_slice %271 {offsets = [0, 32], sizes = [8, 32], strides = [1, 1]} : vector<8x64xf32> to vector<8x32xf32>
    %274 = vector.extract_strided_slice %262 {offsets = [0, 64], sizes = [8, 32], strides = [1, 1]} : vector<8x128xf32> to vector<8x32xf32>
    %275 = vector.extract_strided_slice %263 {offsets = [0, 64], sizes = [8, 32], strides = [1, 1]} : vector<8x128xf32> to vector<8x32xf32>
    %276 = arith.addf %275, %213 : vector<8x32xf32>
    %277 = arith.mulf %272, %276 : vector<8x32xf32>
    %278 = arith.addf %274, %277 : vector<8x32xf32>
    %279 = math.tanh %278 : vector<8x32xf32>
    %280 = arith.subf %259, %279 : vector<8x32xf32>
    %281 = arith.mulf %273, %280 : vector<8x32xf32>
    %282 = arith.addf %279, %281 : vector<8x32xf32>
    %283 = arith.truncf %282 : vector<8x32xf32> to vector<8x32xbf16>
    %c16_66 = arith.constant 16 : index
    %c0_67 = arith.constant 0 : index
    %284 = vector.load %arg11[%c16_66, %c0_67] : memref<64x32xf32, #tpu.memory_space<vmem>>, vector<8x32xf32>
    tpu.vector_store %arg11[%c16_66, %c0_67], %282 {strides = array<i32>} : memref<64x32xf32, #tpu.memory_space<vmem>>, vector<8x32xf32>,
    %285 = vector.extract_strided_slice %209 {offsets = [24, 0], sizes = [8, 128], strides = [1, 1]} : vector<64x128xf32> to vector<8x128xf32>
    %cst_68 = arith.constant dense<0.000000e+00> : vector<8x128xf32>
    %286 = tpu.matmul %283, %204, %cst_68 {dimension_numbers = #tpu.dot_dimension_numbers<[1], [0], [0], [1], [0, 0, 1, 1], [], []>} : vector<8x32xbf16>, vector<32x128xbf16>, vector<8x128xf32> -> vector<8x128xf32>
    %287 = vector.extract_strided_slice %285 {offsets = [0, 0], sizes = [8, 64], strides = [1, 1]} : vector<8x128xf32> to vector<8x64xf32>
    %288 = vector.extract_strided_slice %286 {offsets = [0, 0], sizes = [8, 64], strides = [1, 1]} : vector<8x128xf32> to vector<8x64xf32>
    %289 = arith.addf %287, %288 : vector<8x64xf32>
    %290 = arith.negf %289 : vector<8x64xf32>
    %291 = math.exp %290 : vector<8x64xf32>
    %cst_69 = arith.constant 1.000000e+00 : f32
    %292 = vector.broadcast %cst_69 : f32 to vector<8x64xf32>
    %293 = arith.addf %292, %291 : vector<8x64xf32>
    %294 = arith.divf %292, %293 : vector<8x64xf32>
    %295 = vector.extract_strided_slice %294 {offsets = [0, 0], sizes = [8, 32], strides = [1, 1]} : vector<8x64xf32> to vector<8x32xf32>
    %296 = vector.extract_strided_slice %294 {offsets = [0, 32], sizes = [8, 32], strides = [1, 1]} : vector<8x64xf32> to vector<8x32xf32>
    %297 = vector.extract_strided_slice %285 {offsets = [0, 64], sizes = [8, 32], strides = [1, 1]} : vector<8x128xf32> to vector<8x32xf32>
    %298 = vector.extract_strided_slice %286 {offsets = [0, 64], sizes = [8, 32], strides = [1, 1]} : vector<8x128xf32> to vector<8x32xf32>
    %299 = arith.addf %298, %213 : vector<8x32xf32>
    %300 = arith.mulf %295, %299 : vector<8x32xf32>
    %301 = arith.addf %297, %300 : vector<8x32xf32>
    %302 = math.tanh %301 : vector<8x32xf32>
    %303 = arith.subf %282, %302 : vector<8x32xf32>
    %304 = arith.mulf %296, %303 : vector<8x32xf32>
    %305 = arith.addf %302, %304 : vector<8x32xf32>
    %306 = arith.truncf %305 : vector<8x32xf32> to vector<8x32xbf16>
    %c24_70 = arith.constant 24 : index
    %c0_71 = arith.constant 0 : index
    %307 = vector.load %arg11[%c24_70, %c0_71] : memref<64x32xf32, #tpu.memory_space<vmem>>, vector<8x32xf32>
    tpu.vector_store %arg11[%c24_70, %c0_71], %305 {strides = array<i32>} : memref<64x32xf32, #tpu.memory_space<vmem>>, vector<8x32xf32>,
    %308 = vector.extract_strided_slice %209 {offsets = [32, 0], sizes = [8, 128], strides = [1, 1]} : vector<64x128xf32> to vector<8x128xf32>
    %cst_72 = arith.constant dense<0.000000e+00> : vector<8x128xf32>
    %309 = tpu.matmul %306, %204, %cst_72 {dimension_numbers = #tpu.dot_dimension_numbers<[1], [0], [0], [1], [0, 0, 1, 1], [], []>} : vector<8x32xbf16>, vector<32x128xbf16>, vector<8x128xf32> -> vector<8x128xf32>
    %310 = vector.extract_strided_slice %308 {offsets = [0, 0], sizes = [8, 64], strides = [1, 1]} : vector<8x128xf32> to vector<8x64xf32>
    %311 = vector.extract_strided_slice %309 {offsets = [0, 0], sizes = [8, 64], strides = [1, 1]} : vector<8x128xf32> to vector<8x64xf32>
    %312 = arith.addf %310, %311 : vector<8x64xf32>
    %313 = arith.negf %312 : vector<8x64xf32>
    %314 = math.exp %313 : vector<8x64xf32>
    %cst_73 = arith.constant 1.000000e+00 : f32
    %315 = vector.broadcast %cst_73 : f32 to vector<8x64xf32>
    %316 = arith.addf %315, %314 : vector<8x64xf32>
    %317 = arith.divf %315, %316 : vector<8x64xf32>
    %318 = vector.extract_strided_slice %317 {offsets = [0, 0], sizes = [8, 32], strides = [1, 1]} : vector<8x64xf32> to vector<8x32xf32>
    %319 = vector.extract_strided_slice %317 {offsets = [0, 32], sizes = [8, 32], strides = [1, 1]} : vector<8x64xf32> to vector<8x32xf32>
    %320 = vector.extract_strided_slice %308 {offsets = [0, 64], sizes = [8, 32], strides = [1, 1]} : vector<8x128xf32> to vector<8x32xf32>
    %321 = vector.extract_strided_slice %309 {offsets = [0, 64], sizes = [8, 32], strides = [1, 1]} : vector<8x128xf32> to vector<8x32xf32>
    %322 = arith.addf %321, %213 : vector<8x32xf32>
    %323 = arith.mulf %318, %322 : vector<8x32xf32>
    %324 = arith.addf %320, %323 : vector<8x32xf32>
    %325 = math.tanh %324 : vector<8x32xf32>
    %326 = arith.subf %305, %325 : vector<8x32xf32>
    %327 = arith.mulf %319, %326 : vector<8x32xf32>
    %328 = arith.addf %325, %327 : vector<8x32xf32>
    %329 = arith.truncf %328 : vector<8x32xf32> to vector<8x32xbf16>
    %c32_74 = arith.constant 32 : index
    %c0_75 = arith.constant 0 : index
    %330 = vector.load %arg11[%c32_74, %c0_75] : memref<64x32xf32, #tpu.memory_space<vmem>>, vector<8x32xf32>
    tpu.vector_store %arg11[%c32_74, %c0_75], %328 {strides = array<i32>} : memref<64x32xf32, #tpu.memory_space<vmem>>, vector<8x32xf32>,
    %331 = vector.extract_strided_slice %209 {offsets = [40, 0], sizes = [8, 128], strides = [1, 1]} : vector<64x128xf32> to vector<8x128xf32>
    %cst_76 = arith.constant dense<0.000000e+00> : vector<8x128xf32>
    %332 = tpu.matmul %329, %204, %cst_76 {dimension_numbers = #tpu.dot_dimension_numbers<[1], [0], [0], [1], [0, 0, 1, 1], [], []>} : vector<8x32xbf16>, vector<32x128xbf16>, vector<8x128xf32> -> vector<8x128xf32>
    %333 = vector.extract_strided_slice %331 {offsets = [0, 0], sizes = [8, 64], strides = [1, 1]} : vector<8x128xf32> to vector<8x64xf32>
    %334 = vector.extract_strided_slice %332 {offsets = [0, 0], sizes = [8, 64], strides = [1, 1]} : vector<8x128xf32> to vector<8x64xf32>
    %335 = arith.addf %333, %334 : vector<8x64xf32>
    %336 = arith.negf %335 : vector<8x64xf32>
    %337 = math.exp %336 : vector<8x64xf32>
    %cst_77 = arith.constant 1.000000e+00 : f32
    %338 = vector.broadcast %cst_77 : f32 to vector<8x64xf32>
    %339 = arith.addf %338, %337 : vector<8x64xf32>
    %340 = arith.divf %338, %339 : vector<8x64xf32>
    %341 = vector.extract_strided_slice %340 {offsets = [0, 0], sizes = [8, 32], strides = [1, 1]} : vector<8x64xf32> to vector<8x32xf32>
    %342 = vector.extract_strided_slice %340 {offsets = [0, 32], sizes = [8, 32], strides = [1, 1]} : vector<8x64xf32> to vector<8x32xf32>
    %343 = vector.extract_strided_slice %331 {offsets = [0, 64], sizes = [8, 32], strides = [1, 1]} : vector<8x128xf32> to vector<8x32xf32>
    %344 = vector.extract_strided_slice %332 {offsets = [0, 64], sizes = [8, 32], strides = [1, 1]} : vector<8x128xf32> to vector<8x32xf32>
    %345 = arith.addf %344, %213 : vector<8x32xf32>
    %346 = arith.mulf %341, %345 : vector<8x32xf32>
    %347 = arith.addf %343, %346 : vector<8x32xf32>
    %348 = math.tanh %347 : vector<8x32xf32>
    %349 = arith.subf %328, %348 : vector<8x32xf32>
    %350 = arith.mulf %342, %349 : vector<8x32xf32>
    %351 = arith.addf %348, %350 : vector<8x32xf32>
    %352 = arith.truncf %351 : vector<8x32xf32> to vector<8x32xbf16>
    %c40_78 = arith.constant 40 : index
    %c0_79 = arith.constant 0 : index
    %353 = vector.load %arg11[%c40_78, %c0_79] : memref<64x32xf32, #tpu.memory_space<vmem>>, vector<8x32xf32>
    tpu.vector_store %arg11[%c40_78, %c0_79], %351 {strides = array<i32>} : memref<64x32xf32, #tpu.memory_space<vmem>>, vector<8x32xf32>,
    %354 = vector.extract_strided_slice %209 {offsets = [48, 0], sizes = [8, 128], strides = [1, 1]} : vector<64x128xf32> to vector<8x128xf32>
    %cst_80 = arith.constant dense<0.000000e+00> : vector<8x128xf32>
    %355 = tpu.matmul %352, %204, %cst_80 {dimension_numbers = #tpu.dot_dimension_numbers<[1], [0], [0], [1], [0, 0, 1, 1], [], []>} : vector<8x32xbf16>, vector<32x128xbf16>, vector<8x128xf32> -> vector<8x128xf32>
    %356 = vector.extract_strided_slice %354 {offsets = [0, 0], sizes = [8, 64], strides = [1, 1]} : vector<8x128xf32> to vector<8x64xf32>
    %357 = vector.extract_strided_slice %355 {offsets = [0, 0], sizes = [8, 64], strides = [1, 1]} : vector<8x128xf32> to vector<8x64xf32>
    %358 = arith.addf %356, %357 : vector<8x64xf32>
    %359 = arith.negf %358 : vector<8x64xf32>
    %360 = math.exp %359 : vector<8x64xf32>
    %cst_81 = arith.constant 1.000000e+00 : f32
    %361 = vector.broadcast %cst_81 : f32 to vector<8x64xf32>
    %362 = arith.addf %361, %360 : vector<8x64xf32>
    %363 = arith.divf %361, %362 : vector<8x64xf32>
    %364 = vector.extract_strided_slice %363 {offsets = [0, 0], sizes = [8, 32], strides = [1, 1]} : vector<8x64xf32> to vector<8x32xf32>
    %365 = vector.extract_strided_slice %363 {offsets = [0, 32], sizes = [8, 32], strides = [1, 1]} : vector<8x64xf32> to vector<8x32xf32>
    %366 = vector.extract_strided_slice %354 {offsets = [0, 64], sizes = [8, 32], strides = [1, 1]} : vector<8x128xf32> to vector<8x32xf32>
    %367 = vector.extract_strided_slice %355 {offsets = [0, 64], sizes = [8, 32], strides = [1, 1]} : vector<8x128xf32> to vector<8x32xf32>
    %368 = arith.addf %367, %213 : vector<8x32xf32>
    %369 = arith.mulf %364, %368 : vector<8x32xf32>
    %370 = arith.addf %366, %369 : vector<8x32xf32>
    %371 = math.tanh %370 : vector<8x32xf32>
    %372 = arith.subf %351, %371 : vector<8x32xf32>
    %373 = arith.mulf %365, %372 : vector<8x32xf32>
    %374 = arith.addf %371, %373 : vector<8x32xf32>
    %375 = arith.truncf %374 : vector<8x32xf32> to vector<8x32xbf16>
    %c48_82 = arith.constant 48 : index
    %c0_83 = arith.constant 0 : index
    %376 = vector.load %arg11[%c48_82, %c0_83] : memref<64x32xf32, #tpu.memory_space<vmem>>, vector<8x32xf32>
    tpu.vector_store %arg11[%c48_82, %c0_83], %374 {strides = array<i32>} : memref<64x32xf32, #tpu.memory_space<vmem>>, vector<8x32xf32>,
    %377 = vector.extract_strided_slice %209 {offsets = [56, 0], sizes = [8, 128], strides = [1, 1]} : vector<64x128xf32> to vector<8x128xf32>
    %cst_84 = arith.constant dense<0.000000e+00> : vector<8x128xf32>
    %378 = tpu.matmul %375, %204, %cst_84 {dimension_numbers = #tpu.dot_dimension_numbers<[1], [0], [0], [1], [0, 0, 1, 1], [], []>} : vector<8x32xbf16>, vector<32x128xbf16>, vector<8x128xf32> -> vector<8x128xf32>
    %379 = vector.extract_strided_slice %377 {offsets = [0, 0], sizes = [8, 64], strides = [1, 1]} : vector<8x128xf32> to vector<8x64xf32>
    %380 = vector.extract_strided_slice %378 {offsets = [0, 0], sizes = [8, 64], strides = [1, 1]} : vector<8x128xf32> to vector<8x64xf32>
    %381 = arith.addf %379, %380 : vector<8x64xf32>
    %382 = arith.negf %381 : vector<8x64xf32>
    %383 = math.exp %382 : vector<8x64xf32>
    %cst_85 = arith.constant 1.000000e+00 : f32
    %384 = vector.broadcast %cst_85 : f32 to vector<8x64xf32>
    %385 = arith.addf %384, %383 : vector<8x64xf32>
    %386 = arith.divf %384, %385 : vector<8x64xf32>
    %387 = vector.extract_strided_slice %386 {offsets = [0, 0], sizes = [8, 32], strides = [1, 1]} : vector<8x64xf32> to vector<8x32xf32>
    %388 = vector.extract_strided_slice %386 {offsets = [0, 32], sizes = [8, 32], strides = [1, 1]} : vector<8x64xf32> to vector<8x32xf32>
    %389 = vector.extract_strided_slice %377 {offsets = [0, 64], sizes = [8, 32], strides = [1, 1]} : vector<8x128xf32> to vector<8x32xf32>
    %390 = vector.extract_strided_slice %378 {offsets = [0, 64], sizes = [8, 32], strides = [1, 1]} : vector<8x128xf32> to vector<8x32xf32>
    %391 = arith.addf %390, %213 : vector<8x32xf32>
    %392 = arith.mulf %387, %391 : vector<8x32xf32>
    %393 = arith.addf %389, %392 : vector<8x32xf32>
    %394 = math.tanh %393 : vector<8x32xf32>
    %395 = arith.subf %374, %394 : vector<8x32xf32>
    %396 = arith.mulf %388, %395 : vector<8x32xf32>
    %397 = arith.addf %394, %396 : vector<8x32xf32>
    %c56_86 = arith.constant 56 : index
    %c0_87 = arith.constant 0 : index
    %398 = vector.load %arg11[%c56_86, %c0_87] : memref<64x32xf32, #tpu.memory_space<vmem>>, vector<8x32xf32>
    tpu.vector_store %arg11[%c56_86, %c0_87], %397 {strides = array<i32>} : memref<64x32xf32, #tpu.memory_space<vmem>>, vector<8x32xf32>,
    %c0_88 = arith.constant 0 : index
    %c0_89 = arith.constant 0 : index
    %399 = vector.load %arg11[%c0_88, %c0_89] : memref<64x32xf32, #tpu.memory_space<vmem>>, vector<64x32xf32>
    %400 = arith.truncf %399 : vector<64x32xf32> to vector<64x32xbf16>
    %c1_90 = arith.constant 1 : index
    %c0_91 = arith.constant 0 : index
    %c0_92 = arith.constant 0 : index
    %401 = vector.load %arg4[%c1_90, %c0_91, %c0_92] : memref<2x32x128xbf16, #tpu.memory_space<vmem>>, vector<1x32x128xbf16>
    %402 = vector.shape_cast %401 : vector<1x32x128xbf16> to vector<32x128xbf16>
    %c2 = arith.constant 2 : index
    %c0_93 = arith.constant 0 : index
    %c0_94 = arith.constant 0 : index
    %403 = vector.load %arg5[%c2, %c0_93, %c0_94] : memref<3x32x128xbf16, #tpu.memory_space<vmem>>, vector<1x32x128xbf16>
    %404 = vector.shape_cast %403 : vector<1x32x128xbf16> to vector<32x128xbf16>
    %cst_95 = arith.constant dense<0.000000e+00> : vector<64x128xf32>
    %405 = tpu.matmul %400, %402, %cst_95 {dimension_numbers = #tpu.dot_dimension_numbers<[1], [0], [0], [1], [0, 0, 1, 1], [], []>} : vector<64x32xbf16>, vector<32x128xbf16>, vector<64x128xf32> -> vector<64x128xf32>
    %c2_96 = arith.constant 2 : index
    %c0_97 = arith.constant 0 : index
    %c0_98 = arith.constant 0 : index
    %406 = vector.load %arg6[%c2_96, %c0_97, %c0_98] : memref<3x1x128xf32, #tpu.memory_space<vmem>>, vector<1x1x128xf32>
    %407 = vector.shape_cast %406 : vector<1x1x128xf32> to vector<1x128xf32>
    %408 = vector.broadcast %407 : vector<1x128xf32> to vector<64x128xf32>
    %409 = arith.addf %405, %408 : vector<64x128xf32>
    %c2_99 = arith.constant 2 : index
    %c0_100 = arith.constant 0 : index
    %c0_101 = arith.constant 0 : index
    %410 = vector.load %arg7[%c2_99, %c0_100, %c0_101] : memref<3x1x32xf32, #tpu.memory_space<vmem>>, vector<1x1x32xf32>
    %411 = vector.shape_cast %410 : vector<1x1x32xf32> to vector<1x32xf32>
    %412 = vector.shape_cast %411 : vector<1x32xf32> to vector<1x32xf32>
    %413 = vector.broadcast %412 : vector<1x32xf32> to vector<8x32xf32>
    %cst_102 = arith.constant 0.000000e+00 : f32
    %414 = vector.broadcast %cst_102 : f32 to vector<8x32xf32>
    %cst_103 = arith.constant 0.000000e+00 : bf16
    %415 = vector.broadcast %cst_103 : bf16 to vector<8x32xbf16>
    %416 = vector.extract_strided_slice %409 {offsets = [0, 0], sizes = [8, 128], strides = [1, 1]} : vector<64x128xf32> to vector<8x128xf32>
    %cst_104 = arith.constant dense<0.000000e+00> : vector<8x128xf32>
    %417 = tpu.matmul %415, %404, %cst_104 {dimension_numbers = #tpu.dot_dimension_numbers<[1], [0], [0], [1], [0, 0, 1, 1], [], []>} : vector<8x32xbf16>, vector<32x128xbf16>, vector<8x128xf32> -> vector<8x128xf32>
    %418 = vector.extract_strided_slice %416 {offsets = [0, 0], sizes = [8, 64], strides = [1, 1]} : vector<8x128xf32> to vector<8x64xf32>
    %419 = vector.extract_strided_slice %417 {offsets = [0, 0], sizes = [8, 64], strides = [1, 1]} : vector<8x128xf32> to vector<8x64xf32>
    %420 = arith.addf %418, %419 : vector<8x64xf32>
    %421 = arith.negf %420 : vector<8x64xf32>
    %422 = math.exp %421 : vector<8x64xf32>
    %cst_105 = arith.constant 1.000000e+00 : f32
    %423 = vector.broadcast %cst_105 : f32 to vector<8x64xf32>
    %424 = arith.addf %423, %422 : vector<8x64xf32>
    %425 = arith.divf %423, %424 : vector<8x64xf32>
    %426 = vector.extract_strided_slice %425 {offsets = [0, 0], sizes = [8, 32], strides = [1, 1]} : vector<8x64xf32> to vector<8x32xf32>
    %427 = vector.extract_strided_slice %425 {offsets = [0, 32], sizes = [8, 32], strides = [1, 1]} : vector<8x64xf32> to vector<8x32xf32>
    %428 = vector.extract_strided_slice %416 {offsets = [0, 64], sizes = [8, 32], strides = [1, 1]} : vector<8x128xf32> to vector<8x32xf32>
    %429 = vector.extract_strided_slice %417 {offsets = [0, 64], sizes = [8, 32], strides = [1, 1]} : vector<8x128xf32> to vector<8x32xf32>
    %430 = arith.addf %429, %413 : vector<8x32xf32>
    %431 = arith.mulf %426, %430 : vector<8x32xf32>
    %432 = arith.addf %428, %431 : vector<8x32xf32>
    %433 = math.tanh %432 : vector<8x32xf32>
    %434 = arith.subf %414, %433 : vector<8x32xf32>
    %435 = arith.mulf %427, %434 : vector<8x32xf32>
    %436 = arith.addf %433, %435 : vector<8x32xf32>
    %437 = arith.truncf %436 : vector<8x32xf32> to vector<8x32xbf16>
    %438 = vector.extract_strided_slice %409 {offsets = [8, 0], sizes = [8, 128], strides = [1, 1]} : vector<64x128xf32> to vector<8x128xf32>
    %cst_106 = arith.constant dense<0.000000e+00> : vector<8x128xf32>
    %439 = tpu.matmul %437, %404, %cst_106 {dimension_numbers = #tpu.dot_dimension_numbers<[1], [0], [0], [1], [0, 0, 1, 1], [], []>} : vector<8x32xbf16>, vector<32x128xbf16>, vector<8x128xf32> -> vector<8x128xf32>
    %440 = vector.extract_strided_slice %438 {offsets = [0, 0], sizes = [8, 64], strides = [1, 1]} : vector<8x128xf32> to vector<8x64xf32>
    %441 = vector.extract_strided_slice %439 {offsets = [0, 0], sizes = [8, 64], strides = [1, 1]} : vector<8x128xf32> to vector<8x64xf32>
    %442 = arith.addf %440, %441 : vector<8x64xf32>
    %443 = arith.negf %442 : vector<8x64xf32>
    %444 = math.exp %443 : vector<8x64xf32>
    %cst_107 = arith.constant 1.000000e+00 : f32
    %445 = vector.broadcast %cst_107 : f32 to vector<8x64xf32>
    %446 = arith.addf %445, %444 : vector<8x64xf32>
    %447 = arith.divf %445, %446 : vector<8x64xf32>
    %448 = vector.extract_strided_slice %447 {offsets = [0, 0], sizes = [8, 32], strides = [1, 1]} : vector<8x64xf32> to vector<8x32xf32>
    %449 = vector.extract_strided_slice %447 {offsets = [0, 32], sizes = [8, 32], strides = [1, 1]} : vector<8x64xf32> to vector<8x32xf32>
    %450 = vector.extract_strided_slice %438 {offsets = [0, 64], sizes = [8, 32], strides = [1, 1]} : vector<8x128xf32> to vector<8x32xf32>
    %451 = vector.extract_strided_slice %439 {offsets = [0, 64], sizes = [8, 32], strides = [1, 1]} : vector<8x128xf32> to vector<8x32xf32>
    %452 = arith.addf %451, %413 : vector<8x32xf32>
    %453 = arith.mulf %448, %452 : vector<8x32xf32>
    %454 = arith.addf %450, %453 : vector<8x32xf32>
    %455 = math.tanh %454 : vector<8x32xf32>
    %456 = arith.subf %436, %455 : vector<8x32xf32>
    %457 = arith.mulf %449, %456 : vector<8x32xf32>
    %458 = arith.addf %455, %457 : vector<8x32xf32>
    %459 = arith.truncf %458 : vector<8x32xf32> to vector<8x32xbf16>
    %460 = vector.extract_strided_slice %409 {offsets = [16, 0], sizes = [8, 128], strides = [1, 1]} : vector<64x128xf32> to vector<8x128xf32>
    %cst_108 = arith.constant dense<0.000000e+00> : vector<8x128xf32>
    %461 = tpu.matmul %459, %404, %cst_108 {dimension_numbers = #tpu.dot_dimension_numbers<[1], [0], [0], [1], [0, 0, 1, 1], [], []>} : vector<8x32xbf16>, vector<32x128xbf16>, vector<8x128xf32> -> vector<8x128xf32>
    %462 = vector.extract_strided_slice %460 {offsets = [0, 0], sizes = [8, 64], strides = [1, 1]} : vector<8x128xf32> to vector<8x64xf32>
    %463 = vector.extract_strided_slice %461 {offsets = [0, 0], sizes = [8, 64], strides = [1, 1]} : vector<8x128xf32> to vector<8x64xf32>
    %464 = arith.addf %462, %463 : vector<8x64xf32>
    %465 = arith.negf %464 : vector<8x64xf32>
    %466 = math.exp %465 : vector<8x64xf32>
    %cst_109 = arith.constant 1.000000e+00 : f32
    %467 = vector.broadcast %cst_109 : f32 to vector<8x64xf32>
    %468 = arith.addf %467, %466 : vector<8x64xf32>
    %469 = arith.divf %467, %468 : vector<8x64xf32>
    %470 = vector.extract_strided_slice %469 {offsets = [0, 0], sizes = [8, 32], strides = [1, 1]} : vector<8x64xf32> to vector<8x32xf32>
    %471 = vector.extract_strided_slice %469 {offsets = [0, 32], sizes = [8, 32], strides = [1, 1]} : vector<8x64xf32> to vector<8x32xf32>
    %472 = vector.extract_strided_slice %460 {offsets = [0, 64], sizes = [8, 32], strides = [1, 1]} : vector<8x128xf32> to vector<8x32xf32>
    %473 = vector.extract_strided_slice %461 {offsets = [0, 64], sizes = [8, 32], strides = [1, 1]} : vector<8x128xf32> to vector<8x32xf32>
    %474 = arith.addf %473, %413 : vector<8x32xf32>
    %475 = arith.mulf %470, %474 : vector<8x32xf32>
    %476 = arith.addf %472, %475 : vector<8x32xf32>
    %477 = math.tanh %476 : vector<8x32xf32>
    %478 = arith.subf %458, %477 : vector<8x32xf32>
    %479 = arith.mulf %471, %478 : vector<8x32xf32>
    %480 = arith.addf %477, %479 : vector<8x32xf32>
    %481 = arith.truncf %480 : vector<8x32xf32> to vector<8x32xbf16>
    %482 = vector.extract_strided_slice %409 {offsets = [24, 0], sizes = [8, 128], strides = [1, 1]} : vector<64x128xf32> to vector<8x128xf32>
    %cst_110 = arith.constant dense<0.000000e+00> : vector<8x128xf32>
    %483 = tpu.matmul %481, %404, %cst_110 {dimension_numbers = #tpu.dot_dimension_numbers<[1], [0], [0], [1], [0, 0, 1, 1], [], []>} : vector<8x32xbf16>, vector<32x128xbf16>, vector<8x128xf32> -> vector<8x128xf32>
    %484 = vector.extract_strided_slice %482 {offsets = [0, 0], sizes = [8, 64], strides = [1, 1]} : vector<8x128xf32> to vector<8x64xf32>
    %485 = vector.extract_strided_slice %483 {offsets = [0, 0], sizes = [8, 64], strides = [1, 1]} : vector<8x128xf32> to vector<8x64xf32>
    %486 = arith.addf %484, %485 : vector<8x64xf32>
    %487 = arith.negf %486 : vector<8x64xf32>
    %488 = math.exp %487 : vector<8x64xf32>
    %cst_111 = arith.constant 1.000000e+00 : f32
    %489 = vector.broadcast %cst_111 : f32 to vector<8x64xf32>
    %490 = arith.addf %489, %488 : vector<8x64xf32>
    %491 = arith.divf %489, %490 : vector<8x64xf32>
    %492 = vector.extract_strided_slice %491 {offsets = [0, 0], sizes = [8, 32], strides = [1, 1]} : vector<8x64xf32> to vector<8x32xf32>
    %493 = vector.extract_strided_slice %491 {offsets = [0, 32], sizes = [8, 32], strides = [1, 1]} : vector<8x64xf32> to vector<8x32xf32>
    %494 = vector.extract_strided_slice %482 {offsets = [0, 64], sizes = [8, 32], strides = [1, 1]} : vector<8x128xf32> to vector<8x32xf32>
    %495 = vector.extract_strided_slice %483 {offsets = [0, 64], sizes = [8, 32], strides = [1, 1]} : vector<8x128xf32> to vector<8x32xf32>
    %496 = arith.addf %495, %413 : vector<8x32xf32>
    %497 = arith.mulf %492, %496 : vector<8x32xf32>
    %498 = arith.addf %494, %497 : vector<8x32xf32>
    %499 = math.tanh %498 : vector<8x32xf32>
    %500 = arith.subf %480, %499 : vector<8x32xf32>
    %501 = arith.mulf %493, %500 : vector<8x32xf32>
    %502 = arith.addf %499, %501 : vector<8x32xf32>
    %503 = arith.truncf %502 : vector<8x32xf32> to vector<8x32xbf16>
    %504 = vector.extract_strided_slice %409 {offsets = [32, 0], sizes = [8, 128], strides = [1, 1]} : vector<64x128xf32> to vector<8x128xf32>
    %cst_112 = arith.constant dense<0.000000e+00> : vector<8x128xf32>
    %505 = tpu.matmul %503, %404, %cst_112 {dimension_numbers = #tpu.dot_dimension_numbers<[1], [0], [0], [1], [0, 0, 1, 1], [], []>} : vector<8x32xbf16>, vector<32x128xbf16>, vector<8x128xf32> -> vector<8x128xf32>
    %506 = vector.extract_strided_slice %504 {offsets = [0, 0], sizes = [8, 64], strides = [1, 1]} : vector<8x128xf32> to vector<8x64xf32>
    %507 = vector.extract_strided_slice %505 {offsets = [0, 0], sizes = [8, 64], strides = [1, 1]} : vector<8x128xf32> to vector<8x64xf32>
    %508 = arith.addf %506, %507 : vector<8x64xf32>
    %509 = arith.negf %508 : vector<8x64xf32>
    %510 = math.exp %509 : vector<8x64xf32>
    %cst_113 = arith.constant 1.000000e+00 : f32
    %511 = vector.broadcast %cst_113 : f32 to vector<8x64xf32>
    %512 = arith.addf %511, %510 : vector<8x64xf32>
    %513 = arith.divf %511, %512 : vector<8x64xf32>
    %514 = vector.extract_strided_slice %513 {offsets = [0, 0], sizes = [8, 32], strides = [1, 1]} : vector<8x64xf32> to vector<8x32xf32>
    %515 = vector.extract_strided_slice %513 {offsets = [0, 32], sizes = [8, 32], strides = [1, 1]} : vector<8x64xf32> to vector<8x32xf32>
    %516 = vector.extract_strided_slice %504 {offsets = [0, 64], sizes = [8, 32], strides = [1, 1]} : vector<8x128xf32> to vector<8x32xf32>
    %517 = vector.extract_strided_slice %505 {offsets = [0, 64], sizes = [8, 32], strides = [1, 1]} : vector<8x128xf32> to vector<8x32xf32>
    %518 = arith.addf %517, %413 : vector<8x32xf32>
    %519 = arith.mulf %514, %518 : vector<8x32xf32>
    %520 = arith.addf %516, %519 : vector<8x32xf32>
    %521 = math.tanh %520 : vector<8x32xf32>
    %522 = arith.subf %502, %521 : vector<8x32xf32>
    %523 = arith.mulf %515, %522 : vector<8x32xf32>
    %524 = arith.addf %521, %523 : vector<8x32xf32>
    %525 = arith.truncf %524 : vector<8x32xf32> to vector<8x32xbf16>
    %526 = vector.extract_strided_slice %409 {offsets = [40, 0], sizes = [8, 128], strides = [1, 1]} : vector<64x128xf32> to vector<8x128xf32>
    %cst_114 = arith.constant dense<0.000000e+00> : vector<8x128xf32>
    %527 = tpu.matmul %525, %404, %cst_114 {dimension_numbers = #tpu.dot_dimension_numbers<[1], [0], [0], [1], [0, 0, 1, 1], [], []>} : vector<8x32xbf16>, vector<32x128xbf16>, vector<8x128xf32> -> vector<8x128xf32>
    %528 = vector.extract_strided_slice %526 {offsets = [0, 0], sizes = [8, 64], strides = [1, 1]} : vector<8x128xf32> to vector<8x64xf32>
    %529 = vector.extract_strided_slice %527 {offsets = [0, 0], sizes = [8, 64], strides = [1, 1]} : vector<8x128xf32> to vector<8x64xf32>
    %530 = arith.addf %528, %529 : vector<8x64xf32>
    %531 = arith.negf %530 : vector<8x64xf32>
    %532 = math.exp %531 : vector<8x64xf32>
    %cst_115 = arith.constant 1.000000e+00 : f32
    %533 = vector.broadcast %cst_115 : f32 to vector<8x64xf32>
    %534 = arith.addf %533, %532 : vector<8x64xf32>
    %535 = arith.divf %533, %534 : vector<8x64xf32>
    %536 = vector.extract_strided_slice %535 {offsets = [0, 0], sizes = [8, 32], strides = [1, 1]} : vector<8x64xf32> to vector<8x32xf32>
    %537 = vector.extract_strided_slice %535 {offsets = [0, 32], sizes = [8, 32], strides = [1, 1]} : vector<8x64xf32> to vector<8x32xf32>
    %538 = vector.extract_strided_slice %526 {offsets = [0, 64], sizes = [8, 32], strides = [1, 1]} : vector<8x128xf32> to vector<8x32xf32>
    %539 = vector.extract_strided_slice %527 {offsets = [0, 64], sizes = [8, 32], strides = [1, 1]} : vector<8x128xf32> to vector<8x32xf32>
    %540 = arith.addf %539, %413 : vector<8x32xf32>
    %541 = arith.mulf %536, %540 : vector<8x32xf32>
    %542 = arith.addf %538, %541 : vector<8x32xf32>
    %543 = math.tanh %542 : vector<8x32xf32>
    %544 = arith.subf %524, %543 : vector<8x32xf32>
    %545 = arith.mulf %537, %544 : vector<8x32xf32>
    %546 = arith.addf %543, %545 : vector<8x32xf32>
    %547 = arith.truncf %546 : vector<8x32xf32> to vector<8x32xbf16>
    %548 = vector.extract_strided_slice %409 {offsets = [48, 0], sizes = [8, 128], strides = [1, 1]} : vector<64x128xf32> to vector<8x128xf32>
    %cst_116 = arith.constant dense<0.000000e+00> : vector<8x128xf32>
    %549 = tpu.matmul %547, %404, %cst_116 {dimension_numbers = #tpu.dot_dimension_numbers<[1], [0], [0], [1], [0, 0, 1, 1], [], []>} : vector<8x32xbf16>, vector<32x128xbf16>, vector<8x128xf32> -> vector<8x128xf32>
    %550 = vector.extract_strided_slice %548 {offsets = [0, 0], sizes = [8, 64], strides = [1, 1]} : vector<8x128xf32> to vector<8x64xf32>
    %551 = vector.extract_strided_slice %549 {offsets = [0, 0], sizes = [8, 64], strides = [1, 1]} : vector<8x128xf32> to vector<8x64xf32>
    %552 = arith.addf %550, %551 : vector<8x64xf32>
    %553 = arith.negf %552 : vector<8x64xf32>
    %554 = math.exp %553 : vector<8x64xf32>
    %cst_117 = arith.constant 1.000000e+00 : f32
    %555 = vector.broadcast %cst_117 : f32 to vector<8x64xf32>
    %556 = arith.addf %555, %554 : vector<8x64xf32>
    %557 = arith.divf %555, %556 : vector<8x64xf32>
    %558 = vector.extract_strided_slice %557 {offsets = [0, 0], sizes = [8, 32], strides = [1, 1]} : vector<8x64xf32> to vector<8x32xf32>
    %559 = vector.extract_strided_slice %557 {offsets = [0, 32], sizes = [8, 32], strides = [1, 1]} : vector<8x64xf32> to vector<8x32xf32>
    %560 = vector.extract_strided_slice %548 {offsets = [0, 64], sizes = [8, 32], strides = [1, 1]} : vector<8x128xf32> to vector<8x32xf32>
    %561 = vector.extract_strided_slice %549 {offsets = [0, 64], sizes = [8, 32], strides = [1, 1]} : vector<8x128xf32> to vector<8x32xf32>
    %562 = arith.addf %561, %413 : vector<8x32xf32>
    %563 = arith.mulf %558, %562 : vector<8x32xf32>
    %564 = arith.addf %560, %563 : vector<8x32xf32>
    %565 = math.tanh %564 : vector<8x32xf32>
    %566 = arith.subf %546, %565 : vector<8x32xf32>
    %567 = arith.mulf %559, %566 : vector<8x32xf32>
    %568 = arith.addf %565, %567 : vector<8x32xf32>
    %569 = arith.truncf %568 : vector<8x32xf32> to vector<8x32xbf16>
    %570 = vector.extract_strided_slice %409 {offsets = [56, 0], sizes = [8, 128], strides = [1, 1]} : vector<64x128xf32> to vector<8x128xf32>
    %cst_118 = arith.constant dense<0.000000e+00> : vector<8x128xf32>
    %571 = tpu.matmul %569, %404, %cst_118 {dimension_numbers = #tpu.dot_dimension_numbers<[1], [0], [0], [1], [0, 0, 1, 1], [], []>} : vector<8x32xbf16>, vector<32x128xbf16>, vector<8x128xf32> -> vector<8x128xf32>
    %572 = vector.extract_strided_slice %570 {offsets = [0, 0], sizes = [8, 64], strides = [1, 1]} : vector<8x128xf32> to vector<8x64xf32>
    %573 = vector.extract_strided_slice %571 {offsets = [0, 0], sizes = [8, 64], strides = [1, 1]} : vector<8x128xf32> to vector<8x64xf32>
    %574 = arith.addf %572, %573 : vector<8x64xf32>
    %575 = arith.negf %574 : vector<8x64xf32>
    %576 = math.exp %575 : vector<8x64xf32>
    %cst_119 = arith.constant 1.000000e+00 : f32
    %577 = vector.broadcast %cst_119 : f32 to vector<8x64xf32>
    %578 = arith.addf %577, %576 : vector<8x64xf32>
    %579 = arith.divf %577, %578 : vector<8x64xf32>
    %580 = vector.extract_strided_slice %579 {offsets = [0, 0], sizes = [8, 32], strides = [1, 1]} : vector<8x64xf32> to vector<8x32xf32>
    %581 = vector.extract_strided_slice %579 {offsets = [0, 32], sizes = [8, 32], strides = [1, 1]} : vector<8x64xf32> to vector<8x32xf32>
    %582 = vector.extract_strided_slice %570 {offsets = [0, 64], sizes = [8, 32], strides = [1, 1]} : vector<8x128xf32> to vector<8x32xf32>
    %583 = vector.extract_strided_slice %571 {offsets = [0, 64], sizes = [8, 32], strides = [1, 1]} : vector<8x128xf32> to vector<8x32xf32>
    %584 = arith.addf %583, %413 : vector<8x32xf32>
    %585 = arith.mulf %580, %584 : vector<8x32xf32>
    %586 = arith.addf %582, %585 : vector<8x32xf32>
    %587 = math.tanh %586 : vector<8x32xf32>
    %588 = arith.subf %568, %587 : vector<8x32xf32>
    %589 = arith.mulf %581, %588 : vector<8x32xf32>
    %590 = arith.addf %587, %589 : vector<8x32xf32>
    %c0_120 = arith.constant 0 : index
    %c0_121 = arith.constant 0 : index
    %591 = vector.load %arg2[%c0_120, %c0_121] : memref<8x32xf32, #tpu.memory_space<vmem>>, vector<8x32xf32>
    %592 = arith.mulf %590, %591 : vector<8x32xf32>
    %c0_122 = arith.constant 0 : index
    %c0_123 = arith.constant 0 : index
    %593 = vector.load %arg8[%c0_122, %c0_123] : memref<32x4xf32, #tpu.memory_space<vmem>>, vector<32x4xf32>
    %cst_124 = arith.constant dense<0.000000e+00> : vector<8x4xf32>
    %594 = tpu.matmul %592, %593, %cst_124 {dimension_numbers = #tpu.dot_dimension_numbers<[1], [0], [0], [1], [0, 0, 1, 1], [], []>} : vector<8x32xf32>, vector<32x4xf32>, vector<8x4xf32> -> vector<8x4xf32>
    %c0_125 = arith.constant 0 : index
    %c0_126 = arith.constant 0 : index
    %595 = vector.load %arg9[%c0_125, %c0_126] : memref<1x4xf32, #tpu.memory_space<vmem>>, vector<1x4xf32>
    %596 = vector.broadcast %595 : vector<1x4xf32> to vector<8x4xf32>
    %597 = arith.addf %594, %596 : vector<8x4xf32>
    %c0_127 = arith.constant 0 : index
    %c0_128 = arith.constant 0 : index
    %598 = vector.load %arg10[%c0_127, %c0_128] : memref<8x4xf32, #tpu.memory_space<vmem>>, vector<8x4xf32>
    tpu.vector_store %arg10[%c0_127, %c0_128], %597 {strides = array<i32>} : memref<8x4xf32, #tpu.memory_space<vmem>>, vector<8x4xf32>,
    return
  }
  func.func @transform_0(%arg0: i32) -> (i32, i32, i32) {
    %c0_i32 = arith.constant 0 : i32
    %c0_i32_0 = arith.constant 0 : i32
    %c0_i32_1 = arith.constant 0 : i32
    return %c0_i32, %arg0, %c0_i32_0 : i32, i32, i32
  }
  func.func @transform_1(%arg0: i32) -> (i32, i32) {
    %c0_i32 = arith.constant 0 : i32
    %c0_i32_0 = arith.constant 0 : i32
    return %arg0, %c0_i32 : i32, i32
  }
  func.func @transform_2(%arg0: i32) -> (i32, i32) {
    %c0_i32 = arith.constant 0 : i32
    %c0_i32_0 = arith.constant 0 : i32
    %c0_i32_1 = arith.constant 0 : i32
    return %c0_i32, %c0_i32_0 : i32, i32
  }
  func.func @transform_3(%arg0: i32) -> (i32, i32, i32) {
    %c0_i32 = arith.constant 0 : i32
    %c0_i32_0 = arith.constant 0 : i32
    %c0_i32_1 = arith.constant 0 : i32
    %c0_i32_2 = arith.constant 0 : i32
    return %c0_i32, %c0_i32_0, %c0_i32_1 : i32, i32, i32
  }
  func.func @transform_4(%arg0: i32) -> (i32, i32, i32) {
    %c0_i32 = arith.constant 0 : i32
    %c0_i32_0 = arith.constant 0 : i32
    %c0_i32_1 = arith.constant 0 : i32
    %c0_i32_2 = arith.constant 0 : i32
    return %c0_i32, %c0_i32_0, %c0_i32_1 : i32, i32, i32
  }
  func.func @transform_5(%arg0: i32) -> (i32, i32, i32) {
    %c0_i32 = arith.constant 0 : i32
    %c0_i32_0 = arith.constant 0 : i32
    %c0_i32_1 = arith.constant 0 : i32
    %c0_i32_2 = arith.constant 0 : i32
    return %c0_i32, %c0_i32_0, %c0_i32_1 : i32, i32, i32
  }
  func.func @transform_6(%arg0: i32) -> (i32, i32, i32) {
    %c0_i32 = arith.constant 0 : i32
    %c0_i32_0 = arith.constant 0 : i32
    %c0_i32_1 = arith.constant 0 : i32
    %c0_i32_2 = arith.constant 0 : i32
    return %c0_i32, %c0_i32_0, %c0_i32_1 : i32, i32, i32
  }
  func.func @transform_7(%arg0: i32) -> (i32, i32) {
    %c0_i32 = arith.constant 0 : i32
    %c0_i32_0 = arith.constant 0 : i32
    %c0_i32_1 = arith.constant 0 : i32
    return %c0_i32, %c0_i32_0 : i32, i32
  }
  func.func @transform_8(%arg0: i32) -> (i32, i32) {
    %c0_i32 = arith.constant 0 : i32
    %c0_i32_0 = arith.constant 0 : i32
    %c0_i32_1 = arith.constant 0 : i32
    return %c0_i32, %c0_i32_0 : i32, i32
  }
  func.func @transform_9(%arg0: i32) -> (i32, i32) {
    %c0_i32 = arith.constant 0 : i32
    %c0_i32_0 = arith.constant 0 : i32
    return %arg0, %c0_i32 : i32, i32
  }
}

</mosaic_0001>

<llo_original>
// kernel: _gru_forward_impl.1
$region0: #{_gru_forward_impl.1}
  #allocation0 [shape = 'u32[]', space=smem, size = 0x4, offset = 0x4, fixed_abs, tag = 'smem constant byte address 0x4 - core index']
  #allocation1 [shape = 'u32[144,128]{1,0:T(1,128)}', space=vmem, size = 0x12000, scoped, tag = 'internal scratch']
  #allocation2 [shape = 'f32[64,32]{1,0:T(8,128)}', space=vmem, size = 0x8000, scoped, tag = 'scratch operand']
  %s0 = inlined_call_operand.vmem [shape: bf16[8,8,8], index: 0, kind: input, shape index: {}]
  %s1 = inlined_call_operand.vmem [shape: f32[8,32], index: 1, kind: input, shape index: {}]
  %s2 = inlined_call_operand.vmem [shape: bf16[8,128], index: 2, kind: input, shape index: {}]
  %s3 = inlined_call_operand.vmem [shape: bf16[2,32,128], index: 3, kind: input, shape index: {}]
  %s4 = inlined_call_operand.vmem [shape: bf16[3,32,128], index: 4, kind: input, shape index: {}]
  %s5 = inlined_call_operand.vmem [shape: f32[3,1,128], index: 5, kind: input, shape index: {}]
  %s6 = inlined_call_operand.vmem [shape: f32[3,1,32], index: 6, kind: input, shape index: {}]
  %s7 = inlined_call_operand.vmem [shape: f32[32,4], index: 7, kind: input, shape index: {}]
  %s8 = inlined_call_operand.vmem [shape: f32[1,4], index: 8, kind: input, shape index: {}]
  %s9 = inlined_call_operand.vmem [shape: f32[8,4], index: 9, kind: output, shape index: {}]
  %s10 = sld [smem:[#allocation0]]
  $region46: #{_gru_forward_impl.1} parent=0
    _
  %s12 = ssub.s32 1, %s10
  %s13 = scalar_select 0, %s12, %s10
  // Predicated region
  $region2: #{_gru_forward_impl.1} parent=0 // pred_check
    _
  $region3: #{_gru_forward_impl.1} parent=0 // pred_check_branch
    %15 = sbr.rel (0) target = $region5
  $region4: #{_gru_forward_impl.1} parent=0 // pred_region
    _
  $region5: #{_gru_forward_impl.1} parent=0 // pred_fallthru
    _
  // Predicated region
  $region6: #{_gru_forward_impl.1} parent=0 // pred_check
    _
  $region7: #{_gru_forward_impl.1} parent=0 // pred_check_branch
    %17 = sbr.rel (0) target = $region9
  $region8: #{_gru_forward_impl.1} parent=0 // pred_region
    _
  $region9: #{_gru_forward_impl.1} parent=0 // pred_fallthru
    _
  // Predicated region
  $region10: #{_gru_forward_impl.1} parent=0 // pred_check
    _
  $region11: #{_gru_forward_impl.1} parent=0 // pred_check_branch
    %19 = sbr.rel (0) target = $region13
  $region12: #{_gru_forward_impl.1} parent=0 // pred_region
    _
  $region13: #{_gru_forward_impl.1} parent=0 // pred_fallthru
    _
  // Predicated region
  $region14: #{_gru_forward_impl.1} parent=0 // pred_check
    _
  $region15: #{_gru_forward_impl.1} parent=0 // pred_check_branch
    %21 = sbr.rel (0) target = $region17
  $region16: #{_gru_forward_impl.1} parent=0 // pred_region
    _
  $region17: #{_gru_forward_impl.1} parent=0 // pred_fallthru
    _
  // Predicated region
  $region18: #{_gru_forward_impl.1} parent=0 // pred_check
    _
  $region19: #{_gru_forward_impl.1} parent=0 // pred_check_branch
    %23 = sbr.rel (0) target = $region21
  $region20: #{_gru_forward_impl.1} parent=0 // pred_region
    _
  $region21: #{_gru_forward_impl.1} parent=0 // pred_fallthru
    _
  // Predicated region
  $region22: #{_gru_forward_impl.1} parent=0 // pred_check
    _
  $region23: #{_gru_forward_impl.1} parent=0 // pred_check_branch
    %25 = sbr.rel (0) target = $region25
  $region24: #{_gru_forward_impl.1} parent=0 // pred_region
    _
  $region25: #{_gru_forward_impl.1} parent=0 // pred_fallthru
    _
  // Predicated region
  $region26: #{_gru_forward_impl.1} parent=0 // pred_check
    _
  $region27: #{_gru_forward_impl.1} parent=0 // pred_check_branch
    %27 = sbr.rel (0) target = $region29
  $region28: #{_gru_forward_impl.1} parent=0 // pred_region
    _
  $region29: #{_gru_forward_impl.1} parent=0 // pred_fallthru
    _
  // Predicated region
  $region30: #{_gru_forward_impl.1} parent=0 // pred_check
    _
  $region31: #{_gru_forward_impl.1} parent=0 // pred_check_branch
    %29 = sbr.rel (0) target = $region33
  $region32: #{_gru_forward_impl.1} parent=0 // pred_region
    _
  $region33: #{_gru_forward_impl.1} parent=0 // pred_fallthru
    _
  // Predicated region
  $region34: #{_gru_forward_impl.1} parent=0 // pred_check
    _
  $region35: #{_gru_forward_impl.1} parent=0 // pred_check_branch
    %31 = sbr.rel (0) target = $region37
  $region36: #{_gru_forward_impl.1} parent=0 // pred_region
    _
  $region37: #{_gru_forward_impl.1} parent=0 // pred_fallthru
    _
  %v33 = vld [vmem:[%s0] sm:$0xf]
  %v34 = vld [vmem:[%s0 + $0x4] sm:$0xf]
  %v35 = vld [vmem:[%s0 + $0x8] sm:$0xf]
  %v36 = vld [vmem:[%s0 + $0xc] sm:$0xf]
  %v37 = vld [vmem:[%s0 + $0x10] sm:$0xf]
  %v38 = vld [vmem:[%s0 + $0x14] sm:$0xf]
  %v39 = vld [vmem:[%s0 + $0x18] sm:$0xf]
  %v40 = vld [vmem:[%s0 + $0x1c] sm:$0xf]
  %v41 = vld [vmem:[%s2] sm:$0xf]
  %v42 = vld [vmem:[%s4] sm:$0xf]
  %v43 = vld [vmem:[%s4 + $0x4] sm:$0xf]
  %v44 = vld [vmem:[%s4 + $0x8] sm:$0xf]
  %v45 = vld [vmem:[%s4 + $0xc] sm:$0xf]
  %v46 = vld [vmem:[%s5] sm:$0x1]
  %v48 = vlaneseq
  %v49 = vshrl.u32 %v48, 7
  %v50 = vsub.s32 0, %v49
  %v51 = vrot.slane %v46, %v50
  %v61 = vunpack.c.l.b16 %v33
  %v62 = vunpack.c.l.b16 %v34
  %v63 = vunpack.c.l.b16 %v35
  %v64 = vunpack.c.l.b16 %v36
  %v65 = vunpack.c.l.b16 %v37
  %v66 = vunpack.c.l.b16 %v38
  %v67 = vunpack.c.l.b16 %v39
  %v68 = vunpack.c.l.b16 %v40
  %v69 = vpack.c.b16 %v62, %v61
  %v70 = vpack.c.b16 %v64, %v63
  %v71 = vpack.c.b16 %v66, %v65
  %v72 = vpack.c.b16 %v68, %v67
  %vm73 = vcmask 64512
  %v75 = vsel %vm73, %v69, 0
  %v78 = vsel %vm73, %v70, 0
  %v81 = vsel %vm73, %v71, 0
  %v84 = vsel %vm73, %v72, 0
  %vm86 = vcmask 1043456
  %v88 = vsel %vm86, %v41, 0
  %90 = vmatprep.subr.bf16.mxu0 0
  %91 = vmatpush1.bf16.msra.mxu0 %v88
  %92 = vmatprep.subr.bf16.mxu0 0
  %93 = vmatpush1.bf16.msra.mxu0 0
  %94 = vmatprep.subr.bf16.mxu0 0
  %95 = vmatpush1.bf16.msra.mxu0 0
  %96 = vmatprep.subr.bf16.mxu0 0
  %97 = vmatpush1.bf16.msra.mxu0 0
  %98 = vmatprep.subr.bf16.mxu0 0
  %99 = vmatpush1.bf16.msra.mxu0 0
  %100 = vmatprep.subr.bf16.mxu0 0
  %101 = vmatpush1.bf16.msra.mxu0 0
  %102 = vmatprep.subr.bf16.mxu0 0
  %103 = vmatpush1.bf16.msra.mxu0 0
  %104 = vmatprep.subr.bf16.mxu0 0
  %105 = vmatpush1.bf16.msra.mxu0 0
  %106 = vmatprep.subr.bf16.mxu0 0
  %107 = vmatpush1.bf16.msra.mxu0 0
  %108 = vmatprep.subr.bf16.mxu0 0
  %109 = vmatpush1.bf16.msra.mxu0 0
  %110 = vmatprep.subr.bf16.mxu0 0
  %111 = vmatpush1.bf16.msra.mxu0 0
  %112 = vmatprep.subr.bf16.mxu0 0
  %113 = vmatpush1.bf16.msra.mxu0 0
  %114 = vmatprep.subr.bf16.mxu0 0
  %115 = vmatpush1.bf16.msra.mxu0 0
  %116 = vmatprep.subr.bf16.mxu0 0
  %117 = vmatpush1.bf16.msra.mxu0 0
  %118 = vmatprep.subr.bf16.mxu0 0
  %119 = vmatpush1.bf16.msra.mxu0 0
  %120 = vmatprep.subr.bf16.mxu0 0
  %121 = vmatpush1.bf16.msra.mxu0 0
  %122 = vmatprep.mubr.bf16.mxu0 0
  %123 = vmatmul.mubr.bf16.gmra.mrb[0].mxu0 %v75
  %v124 = vpop.f32.mrb[0].mxu0
  %v125 = vadd.f32 %v51, %v124
  %v126 = vpop.f32.mrb[0].mxu0
  %v127 = vpop.f32.mrb[0].mxu0
  %v128 = vadd.f32 %v51, %v127
  %v129 = vpop.f32.mrb[0].mxu0
  %130 = vmatprep.mubr.bf16.mxu0 0
  %131 = vmatmul.mubr.bf16.gmra.mrb[0].mxu0 %v78
  %v132 = vpop.f32.mrb[0].mxu0
  %v133 = vadd.f32 %v51, %v132
  %v134 = vpop.f32.mrb[0].mxu0
  %v135 = vpop.f32.mrb[0].mxu0
  %v136 = vadd.f32 %v51, %v135
  %v137 = vpop.f32.mrb[0].mxu0
  %138 = vmatprep.mubr.bf16.mxu0 0
  %139 = vmatmul.mubr.bf16.gmra.mrb[0].mxu0 %v81
  %v140 = vpop.f32.mrb[0].mxu0
  %v141 = vadd.f32 %v51, %v140
  %v142 = vpop.f32.mrb[0].mxu0
  %v143 = vpop.f32.mrb[0].mxu0
  %v144 = vadd.f32 %v51, %v143
  %v145 = vpop.f32.mrb[0].mxu0
  %146 = vmatprep.mubr.bf16.mxu0 0
  %147 = vmatmul.mubr.bf16.gmra.mrb[0].mxu0 %v84
  %v148 = vpop.f32.mrb[0].mxu0
  %v149 = vadd.f32 %v51, %v148
  %v150 = vpop.f32.mrb[0].mxu0
  %v151 = vpop.f32.mrb[0].mxu0
  %v152 = vadd.f32 %v51, %v151
  %v153 = vpop.f32.mrb[0].mxu0
  %154 = vdwg.mxu0
  %v155 = vld [vmem:[%s6] sm:$0x1]
  %v157 = vlaneseq
  %v158 = vshrl.u32 %v157, 7
  %v159 = vsub.s32 0, %v158
  %v160 = vrot.slane %v155, %v159
  %v165 = vunpack.c.l.b16 %v42
  %v166 = vunpack.c.l.b16 %v43
  %v167 = vunpack.c.l.b16 %v44
  %v168 = vunpack.c.l.b16 %v45
  %v169 = vpack.c.b16 %v166, %v165
  %v170 = vpack.c.b16 %v168, %v167
  %vm173 = vcmask 261120
  %v175 = vsel %vm173, 0, 0
  %177 = vmatprep.subr.bf16.mxu0 0
  %178 = vmatpush1.bf16.msra.mxu0 %v169
  %179 = vmatprep.subr.bf16.mxu0 0
  %180 = vmatpush1.bf16.msra.mxu0 %v170
  %181 = vmatprep.subr.bf16.mxu0 0
  %182 = vmatpush1.bf16.msra.mxu0 0
  %183 = vmatprep.subr.bf16.mxu0 0
  %184 = vmatpush1.bf16.msra.mxu0 0
  %185 = vmatprep.subr.bf16.mxu0 0
  %186 = vmatpush1.bf16.msra.mxu0 0
  %187 = vmatprep.subr.bf16.mxu0 0
  %188 = vmatpush1.bf16.msra.mxu0 0
  %189 = vmatprep.subr.bf16.mxu0 0
  %190 = vmatpush1.bf16.msra.mxu0 0
  %191 = vmatprep.subr.bf16.mxu0 0
  %192 = vmatpush1.bf16.msra.mxu0 0
  %193 = vmatprep.subr.bf16.mxu0 0
  %194 = vmatpush1.bf16.msra.mxu0 0
  %195 = vmatprep.subr.bf16.mxu0 0
  %196 = vmatpush1.bf16.msra.mxu0 0
  %197 = vmatprep.subr.bf16.mxu0 0
  %198 = vmatpush1.bf16.msra.mxu0 0
  %199 = vmatprep.subr.bf16.mxu0 0
  %200 = vmatpush1.bf16.msra.mxu0 0
  %201 = vmatprep.subr.bf16.mxu0 0
  %202 = vmatpush1.bf16.msra.mxu0 0
  %203 = vmatprep.subr.bf16.mxu0 0
  %204 = vmatpush1.bf16.msra.mxu0 0
  %205 = vmatprep.subr.bf16.mxu0 0
  %206 = vmatpush1.bf16.msra.mxu0 0
  %207 = vmatprep.subr.bf16.mxu0 0
  %208 = vmatpush1.bf16.msra.mxu0 0
  %209 = vmatprep.mubr.bf16.mxu0 0
  %210 = vmatmul.mubr.bf16.gmra.mrb[0].mxu0 %v175
  %v211 = vpop.f32.mrb[0].mxu0
  %v212 = vadd.f32 0.0, %v211
  %v213 = vpop.f32.mrb[0].mxu0
  %v214 = vpop.f32.mrb[0].mxu0
  %v215 = vpop.f32.mrb[0].mxu0
  %216 = vdwg.mxu0
  %v217 = vadd.f32 %v125, %v212
  %v218 = vxor.u32 %v217, 2147483648
  %v219 = vmul.f32 %v218, 1.442695
  %v220 = vpow.pop %v219
  %v221 = vadd.f32 %v220, 1.0
  %v222 = vrcp.pop %v221
  %v223 = vmul.f32 1.0, %v222
  %224 = vrot.lane.b32.xlu0 %v160, 64
  %v225 = vpop.permute.xlu0 %224
  %v227 = vadd.f32 %v212, %v225
  %229 = vrot.lane.b32.xlu0 %v227, 64
  %v230 = vpop.permute.xlu0 %229
  %v232 = vmul.f32 %v223, %v230
  %234 = vrot.lane.b32.xlu0 %v232, 64
  %v235 = vpop.permute.xlu0 %234
  %v237 = vadd.f32 %v125, %v235
  %v238 = vtanh.pop %v237
  %v239 = vsub.f32 0.0, %v238
  %241 = vrot.lane.b32.xlu0 %v239, 96
  %v242 = vpop.permute.xlu0 %241
  %v244 = vmul.f32 %v223, %v242
  %246 = vrot.lane.b32.xlu0 %v244, 32
  %v247 = vpop.permute.xlu0 %246
  %v249 = vadd.f32 %v238, %v247
  %v250 = vpack.c.bf16 %v249, %v249
  %252 = vrot.lane.b32.xlu0 %v249, 64
  %v253 = vpop.permute.xlu0 %252
  %255 = vst.msk [vmem:[#allocation2] sm:$0xff] %vm173, %v253
  %257 = vrot.lane.b32.xlu0 %v250, 64
  %v258 = vpop.permute.xlu0 %257
  %v260 = vsel %vm173, %v258, 0
  %262 = vmatprep.subr.bf16.mxu0 0
  %263 = vmatpush1.bf16.msra.mxu0 %v169
  %264 = vmatprep.subr.bf16.mxu0 0
  %265 = vmatpush1.bf16.msra.mxu0 %v170
  %266 = vmatprep.subr.bf16.mxu0 0
  %267 = vmatpush1.bf16.msra.mxu0 0
  %268 = vmatprep.subr.bf16.mxu0 0
  %269 = vmatpush1.bf16.msra.mxu0 0
  %270 = vmatprep.subr.bf16.mxu0 0
  %271 = vmatpush1.bf16.msra.mxu0 0
  %272 = vmatprep.subr.bf16.mxu0 0
  %273 = vmatpush1.bf16.msra.mxu0 0
  %274 = vmatprep.subr.bf16.mxu0 0
  %275 = vmatpush1.bf16.msra.mxu0 0
  %276 = vmatprep.subr.bf16.mxu0 0
  %277 = vmatpush1.bf16.msra.mxu0 0
  %278 = vmatprep.subr.bf16.mxu0 0
  %279 = vmatpush1.bf16.msra.mxu0 0
  %280 = vmatprep.subr.bf16.mxu0 0
  %281 = vmatpush1.bf16.msra.mxu0 0
  %282 = vmatprep.subr.bf16.mxu0 0
  %283 = vmatpush1.bf16.msra.mxu0 0
  %284 = vmatprep.subr.bf16.mxu0 0
  %285 = vmatpush1.bf16.msra.mxu0 0
  %286 = vmatprep.subr.bf16.mxu0 0
  %287 = vmatpush1.bf16.msra.mxu0 0
  %288 = vmatprep.subr.bf16.mxu0 0
  %289 = vmatpush1.bf16.msra.mxu0 0
  %290 = vmatprep.subr.bf16.mxu0 0
  %291 = vmatpush1.bf16.msra.mxu0 0
  %292 = vmatprep.subr.bf16.mxu0 0
  %293 = vmatpush1.bf16.msra.mxu0 0
  %294 = vmatprep.mubr.bf16.mxu0 0
  %295 = vmatmul.mubr.bf16.gmra.mrb[0].mxu0 %v260
  %v296 = vpop.f32.mrb[0].mxu0
  %v297 = vadd.f32 0.0, %v296
  %v298 = vpop.f32.mrb[0].mxu0
  %v299 = vpop.f32.mrb[0].mxu0
  %v300 = vpop.f32.mrb[0].mxu0
  %301 = vdwg.mxu0
  %v302 = vadd.f32 %v128, %v297
  %v303 = vxor.u32 %v302, 2147483648
  %v304 = vmul.f32 %v303, 1.442695
  %v305 = vpow.pop %v304
  %v306 = vadd.f32 %v305, 1.0
  %v307 = vrcp.pop %v306
  %v308 = vmul.f32 1.0, %v307
  %v309 = vadd.f32 %v297, %v225
  %311 = vrot.lane.b32.xlu0 %v309, 64
  %v312 = vpop.permute.xlu0 %311
  %v314 = vmul.f32 %v308, %v312
  %316 = vrot.lane.b32.xlu0 %v314, 64
  %v317 = vpop.permute.xlu0 %316
  %v319 = vadd.f32 %v128, %v317
  %v320 = vtanh.pop %v319
  %v321 = vsub.f32 %v249, %v320
  %323 = vrot.lane.b32.xlu0 %v321, 96
  %v324 = vpop.permute.xlu0 %323
  %v326 = vmul.f32 %v308, %v324
  %328 = vrot.lane.b32.xlu0 %v326, 32
  %v329 = vpop.permute.xlu0 %328
  %v331 = vadd.f32 %v320, %v329
  %v332 = vpack.c.bf16 %v331, %v331
  %334 = vrot.lane.b32.xlu0 %v331, 64
  %v335 = vpop.permute.xlu0 %334
  %337 = vst.msk [vmem:[#allocation2 + $0x8] sm:$0xff] %vm173, %v335
  %339 = vrot.lane.b32.xlu0 %v332, 64
  %v340 = vpop.permute.xlu0 %339
  %v342 = vsel %vm173, %v340, 0
  %344 = vmatprep.subr.bf16.mxu0 0
  %345 = vmatpush1.bf16.msra.mxu0 %v169
  %346 = vmatprep.subr.bf16.mxu0 0
  %347 = vmatpush1.bf16.msra.mxu0 %v170
  %348 = vmatprep.subr.bf16.mxu0 0
  %349 = vmatpush1.bf16.msra.mxu0 0
  %350 = vmatprep.subr.bf16.mxu0 0
  %351 = vmatpush1.bf16.msra.mxu0 0
  %352 = vmatprep.subr.bf16.mxu0 0
  %353 = vmatpush1.bf16.msra.mxu0 0
  %354 = vmatprep.subr.bf16.mxu0 0
  %355 = vmatpush1.bf16.msra.mxu0 0
  %356 = vmatprep.subr.bf16.mxu0 0
  %357 = vmatpush1.bf16.msra.mxu0 0
  %358 = vmatprep.subr.bf16.mxu0 0
  %359 = vmatpush1.bf16.msra.mxu0 0
  %360 = vmatprep.subr.bf16.mxu0 0
  %361 = vmatpush1.bf16.msra.mxu0 0
  %362 = vmatprep.subr.bf16.mxu0 0
  %363 = vmatpush1.bf16.msra.mxu0 0
  %364 = vmatprep.subr.bf16.mxu0 0
  %365 = vmatpush1.bf16.msra.mxu0 0
  %366 = vmatprep.subr.bf16.mxu0 0
  %367 = vmatpush1.bf16.msra.mxu0 0
  %368 = vmatprep.subr.bf16.mxu0 0
  %369 = vmatpush1.bf16.msra.mxu0 0
  %370 = vmatprep.subr.bf16.mxu0 0
  %371 = vmatpush1.bf16.msra.mxu0 0
  %372 = vmatprep.subr.bf16.mxu0 0
  %373 = vmatpush1.bf16.msra.mxu0 0
  %374 = vmatprep.subr.bf16.mxu0 0
  %375 = vmatpush1.bf16.msra.mxu0 0
  %376 = vmatprep.mubr.bf16.mxu0 0
  %377 = vmatmul.mubr.bf16.gmra.mrb[0].mxu0 %v342
  %v378 = vpop.f32.mrb[0].mxu0
  %v379 = vadd.f32 0.0, %v378
  %v380 = vpop.f32.mrb[0].mxu0
  %v381 = vpop.f32.mrb[0].mxu0
  %v382 = vpop.f32.mrb[0].mxu0
  %383 = vdwg.mxu0
  %v384 = vadd.f32 %v133, %v379
  %v385 = vxor.u32 %v384, 2147483648
  %v386 = vmul.f32 %v385, 1.442695
  %v387 = vpow.pop %v386
  %v388 = vadd.f32 %v387, 1.0
  %v389 = vrcp.pop %v388
  %v390 = vmul.f32 1.0, %v389
  %v391 = vadd.f32 %v379, %v225
  %393 = vrot.lane.b32.xlu0 %v391, 64
  %v394 = vpop.permute.xlu0 %393
  %v396 = vmul.f32 %v390, %v394
  %398 = vrot.lane.b32.xlu0 %v396, 64
  %v399 = vpop.permute.xlu0 %398
  %v401 = vadd.f32 %v133, %v399
  %v402 = vtanh.pop %v401
  %v403 = vsub.f32 %v331, %v402
  %405 = vrot.lane.b32.xlu0 %v403, 96
  %v406 = vpop.permute.xlu0 %405
  %v408 = vmul.f32 %v390, %v406
  %410 = vrot.lane.b32.xlu0 %v408, 32
  %v411 = vpop.permute.xlu0 %410
  %v413 = vadd.f32 %v402, %v411
  %v414 = vpack.c.bf16 %v413, %v413
  %416 = vrot.lane.b32.xlu0 %v413, 64
  %v417 = vpop.permute.xlu0 %416
  %419 = vst.msk [vmem:[#allocation2 + $0x10] sm:$0xff] %vm173, %v417
  %421 = vrot.lane.b32.xlu0 %v414, 64
  %v422 = vpop.permute.xlu0 %421
  %v424 = vsel %vm173, %v422, 0
  %426 = vmatprep.subr.bf16.mxu0 0
  %427 = vmatpush1.bf16.msra.mxu0 %v169
  %428 = vmatprep.subr.bf16.mxu0 0
  %429 = vmatpush1.bf16.msra.mxu0 %v170
  %430 = vmatprep.subr.bf16.mxu0 0
  %431 = vmatpush1.bf16.msra.mxu0 0
  %432 = vmatprep.subr.bf16.mxu0 0
  %433 = vmatpush1.bf16.msra.mxu0 0
  %434 = vmatprep.subr.bf16.mxu0 0
  %435 = vmatpush1.bf16.msra.mxu0 0
  %436 = vmatprep.subr.bf16.mxu0 0
  %437 = vmatpush1.bf16.msra.mxu0 0
  %438 = vmatprep.subr.bf16.mxu0 0
  %439 = vmatpush1.bf16.msra.mxu0 0
  %440 = vmatprep.subr.bf16.mxu0 0
  %441 = vmatpush1.bf16.msra.mxu0 0
  %442 = vmatprep.subr.bf16.mxu0 0
  %443 = vmatpush1.bf16.msra.mxu0 0
  %444 = vmatprep.subr.bf16.mxu0 0
  %445 = vmatpush1.bf16.msra.mxu0 0
  %446 = vmatprep.subr.bf16.mxu0 0
  %447 = vmatpush1.bf16.msra.mxu0 0
  %448 = vmatprep.subr.bf16.mxu0 0
  %449 = vmatpush1.bf16.msra.mxu0 0
  %450 = vmatprep.subr.bf16.mxu0 0
  %451 = vmatpush1.bf16.msra.mxu0 0
  %452 = vmatprep.subr.bf16.mxu0 0
  %453 = vmatpush1.bf16.msra.mxu0 0
  %454 = vmatprep.subr.bf16.mxu0 0
  %455 = vmatpush1.bf16.msra.mxu0 0
  %456 = vmatprep.subr.bf16.mxu0 0
  %457 = vmatpush1.bf16.msra.mxu0 0
  %458 = vmatprep.mubr.bf16.mxu0 0
  %459 = vmatmul.mubr.bf16.gmra.mrb[0].mxu0 %v424
  %v460 = vpop.f32.mrb[0].mxu0
  %v461 = vadd.f32 0.0, %v460
  %v462 = vpop.f32.mrb[0].mxu0
  %v463 = vpop.f32.mrb[0].mxu0
  %v464 = vpop.f32.mrb[0].mxu0
  %465 = vdwg.mxu0
  %v466 = vadd.f32 %v136, %v461
  %v467 = vxor.u32 %v466, 2147483648
  %v468 = vmul.f32 %v467, 1.442695
  %v469 = vpow.pop %v468
  %v470 = vadd.f32 %v469, 1.0
  %v471 = vrcp.pop %v470
  %v472 = vmul.f32 1.0, %v471
  %v473 = vadd.f32 %v461, %v225
  %475 = vrot.lane.b32.xlu0 %v473, 64
  %v476 = vpop.permute.xlu0 %475
  %v478 = vmul.f32 %v472, %v476
  %480 = vrot.lane.b32.xlu0 %v478, 64
  %v481 = vpop.permute.xlu0 %480
  %v483 = vadd.f32 %v136, %v481
  %v484 = vtanh.pop %v483
  %v485 = vsub.f32 %v413, %v484
  %487 = vrot.lane.b32.xlu0 %v485, 96
  %v488 = vpop.permute.xlu0 %487
  %v490 = vmul.f32 %v472, %v488
  %492 = vrot.lane.b32.xlu0 %v490, 32
  %v493 = vpop.permute.xlu0 %492
  %v495 = vadd.f32 %v484, %v493
  %v496 = vpack.c.bf16 %v495, %v495
  %498 = vrot.lane.b32.xlu0 %v495, 64
  %v499 = vpop.permute.xlu0 %498
  %501 = vst.msk [vmem:[#allocation2 + $0x18] sm:$0xff] %vm173, %v499
  %503 = vrot.lane.b32.xlu0 %v496, 64
  %v504 = vpop.permute.xlu0 %503
  %v506 = vsel %vm173, %v504, 0
  %508 = vmatprep.subr.bf16.mxu0 0
  %509 = vmatpush1.bf16.msra.mxu0 %v169
  %510 = vmatprep.subr.bf16.mxu0 0
  %511 = vmatpush1.bf16.msra.mxu0 %v170
  %512 = vmatprep.subr.bf16.mxu0 0
  %513 = vmatpush1.bf16.msra.mxu0 0
  %514 = vmatprep.subr.bf16.mxu0 0
  %515 = vmatpush1.bf16.msra.mxu0 0
  %516 = vmatprep.subr.bf16.mxu0 0
  %517 = vmatpush1.bf16.msra.mxu0 0
  %518 = vmatprep.subr.bf16.mxu0 0
  %519 = vmatpush1.bf16.msra.mxu0 0
  %520 = vmatprep.subr.bf16.mxu0 0
  %521 = vmatpush1.bf16.msra.mxu0 0
  %522 = vmatprep.subr.bf16.mxu0 0
  %523 = vmatpush1.bf16.msra.mxu0 0
  %524 = vmatprep.subr.bf16.mxu0 0
  %525 = vmatpush1.bf16.msra.mxu0 0
  %526 = vmatprep.subr.bf16.mxu0 0
  %527 = vmatpush1.bf16.msra.mxu0 0
  %528 = vmatprep.subr.bf16.mxu0 0
  %529 = vmatpush1.bf16.msra.mxu0 0
  %530 = vmatprep.subr.bf16.mxu0 0
  %531 = vmatpush1.bf16.msra.mxu0 0
  %532 = vmatprep.subr.bf16.mxu0 0
  %533 = vmatpush1.bf16.msra.mxu0 0
  %534 = vmatprep.subr.bf16.mxu0 0
  %535 = vmatpush1.bf16.msra.mxu0 0
  %536 = vmatprep.subr.bf16.mxu0 0
  %537 = vmatpush1.bf16.msra.mxu0 0
  %538 = vmatprep.subr.bf16.mxu0 0
  %539 = vmatpush1.bf16.msra.mxu0 0
  %540 = vmatprep.mubr.bf16.mxu0 0
  %541 = vmatmul.mubr.bf16.gmra.mrb[0].mxu0 %v506
  %v542 = vpop.f32.mrb[0].mxu0
  %v543 = vadd.f32 0.0, %v542
  %v544 = vpop.f32.mrb[0].mxu0
  %v545 = vpop.f32.mrb[0].mxu0
  %v546 = vpop.f32.mrb[0].mxu0
  %547 = vdwg.mxu0
  %v548 = vadd.f32 %v141, %v543
  %v549 = vxor.u32 %v548, 2147483648
  %v550 = vmul.f32 %v549, 1.442695
  %v551 = vpow.pop %v550
  %v552 = vadd.f32 %v551, 1.0
  %v553 = vrcp.pop %v552
  %v554 = vmul.f32 1.0, %v553
  %v555 = vadd.f32 %v543, %v225
  %557 = vrot.lane.b32.xlu0 %v555, 64
  %v558 = vpop.permute.xlu0 %557
  %v560 = vmul.f32 %v554, %v558
  %562 = vrot.lane.b32.xlu0 %v560, 64
  %v563 = vpop.permute.xlu0 %562
  %v565 = vadd.f32 %v141, %v563
  %v566 = vtanh.pop %v565
  %v567 = vsub.f32 %v495, %v566
  %569 = vrot.lane.b32.xlu0 %v567, 96
  %v570 = vpop.permute.xlu0 %569
  %v572 = vmul.f32 %v554, %v570
  %574 = vrot.lane.b32.xlu0 %v572, 32
  %v575 = vpop.permute.xlu0 %574
  %v577 = vadd.f32 %v566, %v575
  %v578 = vpack.c.bf16 %v577, %v577
  %580 = vrot.lane.b32.xlu0 %v577, 64
  %v581 = vpop.permute.xlu0 %580
  %583 = vst.msk [vmem:[#allocation2 + $0x20] sm:$0xff] %vm173, %v581
  %585 = vrot.lane.b32.xlu0 %v578, 64
  %v586 = vpop.permute.xlu0 %585
  %v588 = vsel %vm173, %v586, 0
  %590 = vmatprep.subr.bf16.mxu0 0
  %591 = vmatpush1.bf16.msra.mxu0 %v169
  %592 = vmatprep.subr.bf16.mxu0 0
  %593 = vmatpush1.bf16.msra.mxu0 %v170
  %594 = vmatprep.subr.bf16.mxu0 0
  %595 = vmatpush1.bf16.msra.mxu0 0
  %596 = vmatprep.subr.bf16.mxu0 0
  %597 = vmatpush1.bf16.msra.mxu0 0
  %598 = vmatprep.subr.bf16.mxu0 0
  %599 = vmatpush1.bf16.msra.mxu0 0
  %600 = vmatprep.subr.bf16.mxu0 0
  %601 = vmatpush1.bf16.msra.mxu0 0
  %602 = vmatprep.subr.bf16.mxu0 0
  %603 = vmatpush1.bf16.msra.mxu0 0
  %604 = vmatprep.subr.bf16.mxu0 0
  %605 = vmatpush1.bf16.msra.mxu0 0
  %606 = vmatprep.subr.bf16.mxu0 0
  %607 = vmatpush1.bf16.msra.mxu0 0
  %608 = vmatprep.subr.bf16.mxu0 0
  %609 = vmatpush1.bf16.msra.mxu0 0
  %610 = vmatprep.subr.bf16.mxu0 0
  %611 = vmatpush1.bf16.msra.mxu0 0
  %612 = vmatprep.subr.bf16.mxu0 0
  %613 = vmatpush1.bf16.msra.mxu0 0
  %614 = vmatprep.subr.bf16.mxu0 0
  %615 = vmatpush1.bf16.msra.mxu0 0
  %616 = vmatprep.subr.bf16.mxu0 0
  %617 = vmatpush1.bf16.msra.mxu0 0
  %618 = vmatprep.subr.bf16.mxu0 0
  %619 = vmatpush1.bf16.msra.mxu0 0
  %620 = vmatprep.subr.bf16.mxu0 0
  %621 = vmatpush1.bf16.msra.mxu0 0
  %622 = vmatprep.mubr.bf16.mxu0 0
  %623 = vmatmul.mubr.bf16.gmra.mrb[0].mxu0 %v588
  %v624 = vpop.f32.mrb[0].mxu0
  %v625 = vadd.f32 0.0, %v624
  %v626 = vpop.f32.mrb[0].mxu0
  %v627 = vpop.f32.mrb[0].mxu0
  %v628 = vpop.f32.mrb[0].mxu0
  %629 = vdwg.mxu0
  %v630 = vadd.f32 %v144, %v625
  %v631 = vxor.u32 %v630, 2147483648
  %v632 = vmul.f32 %v631, 1.442695
  %v633 = vpow.pop %v632
  %v634 = vadd.f32 %v633, 1.0
  %v635 = vrcp.pop %v634
  %v636 = vmul.f32 1.0, %v635
  %v637 = vadd.f32 %v625, %v225
  %639 = vrot.lane.b32.xlu0 %v637, 64
  %v640 = vpop.permute.xlu0 %639
  %v642 = vmul.f32 %v636, %v640
  %644 = vrot.lane.b32.xlu0 %v642, 64
  %v645 = vpop.permute.xlu0 %644
  %v647 = vadd.f32 %v144, %v645
  %v648 = vtanh.pop %v647
  %v649 = vsub.f32 %v577, %v648
  %651 = vrot.lane.b32.xlu0 %v649, 96
  %v652 = vpop.permute.xlu0 %651
  %v654 = vmul.f32 %v636, %v652
  %656 = vrot.lane.b32.xlu0 %v654, 32
  %v657 = vpop.permute.xlu0 %656
  %v659 = vadd.f32 %v648, %v657
  %v660 = vpack.c.bf16 %v659, %v659
  %662 = vrot.lane.b32.xlu0 %v659, 64
  %v663 = vpop.permute.xlu0 %662
  %665 = vst.msk [vmem:[#allocation2 + $0x28] sm:$0xff] %vm173, %v663
  %667 = vrot.lane.b32.xlu0 %v660, 64
  %v668 = vpop.permute.xlu0 %667
  %v670 = vsel %vm173, %v668, 0
  %672 = vmatprep.subr.bf16.mxu0 0
  %673 = vmatpush1.bf16.msra.mxu0 %v169
  %674 = vmatprep.subr.bf16.mxu0 0
  %675 = vmatpush1.bf16.msra.mxu0 %v170
  %676 = vmatprep.subr.bf16.mxu0 0
  %677 = vmatpush1.bf16.msra.mxu0 0
  %678 = vmatprep.subr.bf16.mxu0 0
  %679 = vmatpush1.bf16.msra.mxu0 0
  %680 = vmatprep.subr.bf16.mxu0 0
  %681 = vmatpush1.bf16.msra.mxu0 0
  %682 = vmatprep.subr.bf16.mxu0 0
  %683 = vmatpush1.bf16.msra.mxu0 0
  %684 = vmatprep.subr.bf16.mxu0 0
  %685 = vmatpush1.bf16.msra.mxu0 0
  %686 = vmatprep.subr.bf16.mxu0 0
  %687 = vmatpush1.bf16.msra.mxu0 0
  %688 = vmatprep.subr.bf16.mxu0 0
  %689 = vmatpush1.bf16.msra.mxu0 0
  %690 = vmatprep.subr.bf16.mxu0 0
  %691 = vmatpush1.bf16.msra.mxu0 0
  %692 = vmatprep.subr.bf16.mxu0 0
  %693 = vmatpush1.bf16.msra.mxu0 0
  %694 = vmatprep.subr.bf16.mxu0 0
  %695 = vmatpush1.bf16.msra.mxu0 0
  %696 = vmatprep.subr.bf16.mxu0 0
  %697 = vmatpush1.bf16.msra.mxu0 0
  %698 = vmatprep.subr.bf16.mxu0 0
  %699 = vmatpush1.bf16.msra.mxu0 0
  %700 = vmatprep.subr.bf16.mxu0 0
  %701 = vmatpush1.bf16.msra.mxu0 0
  %702 = vmatprep.subr.bf16.mxu0 0
  %703 = vmatpush1.bf16.msra.mxu0 0
  %704 = vmatprep.mubr.bf16.mxu0 0
  %705 = vmatmul.mubr.bf16.gmra.mrb[0].mxu0 %v670
  %v706 = vpop.f32.mrb[0].mxu0
  %v707 = vadd.f32 0.0, %v706
  %v708 = vpop.f32.mrb[0].mxu0
  %v709 = vpop.f32.mrb[0].mxu0
  %v710 = vpop.f32.mrb[0].mxu0
  %711 = vdwg.mxu0
  %v712 = vadd.f32 %v149, %v707
  %v713 = vxor.u32 %v712, 2147483648
  %v714 = vmul.f32 %v713, 1.442695
  %v715 = vpow.pop %v714
  %v716 = vadd.f32 %v715, 1.0
  %v717 = vrcp.pop %v716
  %v718 = vmul.f32 1.0, %v717
  %v719 = vadd.f32 %v707, %v225
  %721 = vrot.lane.b32.xlu0 %v719, 64
  %v722 = vpop.permute.xlu0 %721
  %v724 = vmul.f32 %v718, %v722
  %726 = vrot.lane.b32.xlu0 %v724, 64
  %v727 = vpop.permute.xlu0 %726
  %v729 = vadd.f32 %v149, %v727
  %v730 = vtanh.pop %v729
  %v731 = vsub.f32 %v659, %v730
  %733 = vrot.lane.b32.xlu0 %v731, 96
  %v734 = vpop.permute.xlu0 %733
  %v736 = vmul.f32 %v718, %v734
  %738 = vrot.lane.b32.xlu0 %v736, 32
  %v739 = vpop.permute.xlu0 %738
  %v741 = vadd.f32 %v730, %v739
  %v742 = vpack.c.bf16 %v741, %v741
  %744 = vrot.lane.b32.xlu0 %v741, 64
  %v745 = vpop.permute.xlu0 %744
  %747 = vst.msk [vmem:[#allocation2 + $0x30] sm:$0xff] %vm173, %v745
  %749 = vrot.lane.b32.xlu0 %v742, 64
  %v750 = vpop.permute.xlu0 %749
  %v752 = vsel %vm173, %v750, 0
  %754 = vmatprep.subr.bf16.mxu0 0
  %755 = vmatpush1.bf16.msra.mxu0 %v169
  %756 = vmatprep.subr.bf16.mxu0 0
  %757 = vmatpush1.bf16.msra.mxu0 %v170
  %758 = vmatprep.subr.bf16.mxu0 0
  %759 = vmatpush1.bf16.msra.mxu0 0
  %760 = vmatprep.subr.bf16.mxu0 0
  %761 = vmatpush1.bf16.msra.mxu0 0
  %762 = vmatprep.subr.bf16.mxu0 0
  %763 = vmatpush1.bf16.msra.mxu0 0
  %764 = vmatprep.subr.bf16.mxu0 0
  %765 = vmatpush1.bf16.msra.mxu0 0
  %766 = vmatprep.subr.bf16.mxu0 0
  %767 = vmatpush1.bf16.msra.mxu0 0
  %768 = vmatprep.subr.bf16.mxu0 0
  %769 = vmatpush1.bf16.msra.mxu0 0
  %770 = vmatprep.subr.bf16.mxu0 0
  %771 = vmatpush1.bf16.msra.mxu0 0
  %772 = vmatprep.subr.bf16.mxu0 0
  %773 = vmatpush1.bf16.msra.mxu0 0
  %774 = vmatprep.subr.bf16.mxu0 0
  %775 = vmatpush1.bf16.msra.mxu0 0
  %776 = vmatprep.subr.bf16.mxu0 0
  %777 = vmatpush1.bf16.msra.mxu0 0
  %778 = vmatprep.subr.bf16.mxu0 0
  %779 = vmatpush1.bf16.msra.mxu0 0
  %780 = vmatprep.subr.bf16.mxu0 0
  %781 = vmatpush1.bf16.msra.mxu0 0
  %782 = vmatprep.subr.bf16.mxu0 0
  %783 = vmatpush1.bf16.msra.mxu0 0
  %784 = vmatprep.subr.bf16.mxu0 0
  %785 = vmatpush1.bf16.msra.mxu0 0
  %786 = vmatprep.mubr.bf16.mxu0 0
  %787 = vmatmul.mubr.bf16.gmra.mrb[0].mxu0 %v752
  %v788 = vpop.f32.mrb[0].mxu0
  %v789 = vadd.f32 0.0, %v788
  %v790 = vpop.f32.mrb[0].mxu0
  %v791 = vpop.f32.mrb[0].mxu0
  %v792 = vpop.f32.mrb[0].mxu0
  %793 = vdwg.mxu0
  %v794 = vadd.f32 %v152, %v789
  %v795 = vxor.u32 %v794, 2147483648
  %v796 = vmul.f32 %v795, 1.442695
  %v797 = vpow.pop %v796
  %v798 = vadd.f32 %v797, 1.0
  %v799 = vrcp.pop %v798
  %v800 = vmul.f32 1.0, %v799
  %v801 = vadd.f32 %v789, %v225
  %803 = vrot.lane.b32.xlu0 %v801, 64
  %v804 = vpop.permute.xlu0 %803
  %v806 = vmul.f32 %v800, %v804
  %808 = vrot.lane.b32.xlu0 %v806, 64
  %v809 = vpop.permute.xlu0 %808
  %v811 = vadd.f32 %v152, %v809
  %v812 = vtanh.pop %v811
  %v813 = vsub.f32 %v741, %v812
  %815 = vrot.lane.b32.xlu0 %v813, 96
  %v816 = vpop.permute.xlu0 %815
  %v818 = vmul.f32 %v800, %v816
  %820 = vrot.lane.b32.xlu0 %v818, 32
  %v821 = vpop.permute.xlu0 %820
  %v823 = vadd.f32 %v812, %v821
  %825 = vrot.lane.b32.xlu0 %v823, 64
  %v826 = vpop.permute.xlu0 %825
  %828 = vst.msk [vmem:[#allocation2 + $0x38] sm:$0xff] %vm173, %v826
  %v829 = vld [vmem:[#allocation2] sm:$0xff]
  %v830 = vld [vmem:[#allocation2 + $0x8] sm:$0xff]
  %v831 = vld [vmem:[#allocation2 + $0x10] sm:$0xff]
  %v832 = vld [vmem:[#allocation2 + $0x18] sm:$0xff]
  %v833 = vld [vmem:[#allocation2 + $0x20] sm:$0xff]
  %v834 = vld [vmem:[#allocation2 + $0x28] sm:$0xff]
  %v835 = vld [vmem:[#allocation2 + $0x30] sm:$0xff]
  %v836 = vld [vmem:[#allocation2 + $0x38] sm:$0xff]
  %v837 = vpack.c.bf16 %v830, %v829
  %v838 = vpack.c.bf16 %v832, %v831
  %v839 = vpack.c.bf16 %v834, %v833
  %v840 = vpack.c.bf16 %v836, %v835
  %v841 = vld [vmem:[%s3] sm:$0xf]
  %v842 = vld [vmem:[%s3 + $0x4] sm:$0xf]
  %v843 = vld [vmem:[%s3 + $0x8] sm:$0xf]
  %v844 = vld [vmem:[%s3 + $0xc] sm:$0xf]
  %s845 = scalar_lea.vmem %s4, 16
  %v846 = vld [vmem:[%s845] sm:$0xf]
  %v847 = vld [vmem:[%s845 + $0x4] sm:$0xf]
  %v848 = vld [vmem:[%s845 + $0x8] sm:$0xf]
  %v849 = vld [vmem:[%s845 + $0xc] sm:$0xf]
  %s850 = scalar_lea.vmem %s5, 1
  %v851 = vld [vmem:[%s850] sm:$0x1]
  %v853 = vlaneseq
  %v854 = vshrl.u32 %v853, 7
  %v855 = vsub.s32 0, %v854
  %v856 = vrot.slane %v851, %v855
  %v862 = vunpack.c.l.b16 %v841
  %v863 = vunpack.c.l.b16 %v842
  %v864 = vunpack.c.l.b16 %v843
  %v865 = vunpack.c.l.b16 %v844
  %v866 = vpack.c.b16 %v863, %v862
  %v867 = vpack.c.b16 %v865, %v864
  %v871 = vsel %vm173, %v837, 0
  %v874 = vsel %vm173, %v838, 0
  %v877 = vsel %vm173, %v839, 0
  %v880 = vsel %vm173, %v840, 0
  %882 = vmatprep.subr.bf16.mxu0 0
  %883 = vmatpush1.bf16.msra.mxu0 %v866
  %884 = vmatprep.subr.bf16.mxu0 0
  %885 = vmatpush1.bf16.msra.mxu0 %v867
  %886 = vmatprep.subr.bf16.mxu0 0
  %887 = vmatpush1.bf16.msra.mxu0 0
  %888 = vmatprep.subr.bf16.mxu0 0
  %889 = vmatpush1.bf16.msra.mxu0 0
  %890 = vmatprep.subr.bf16.mxu0 0
  %891 = vmatpush1.bf16.msra.mxu0 0
  %892 = vmatprep.subr.bf16.mxu0 0
  %893 = vmatpush1.bf16.msra.mxu0 0
  %894 = vmatprep.subr.bf16.mxu0 0
  %895 = vmatpush1.bf16.msra.mxu0 0
  %896 = vmatprep.subr.bf16.mxu0 0
  %897 = vmatpush1.bf16.msra.mxu0 0
  %898 = vmatprep.subr.bf16.mxu0 0
  %899 = vmatpush1.bf16.msra.mxu0 0
  %900 = vmatprep.subr.bf16.mxu0 0
  %901 = vmatpush1.bf16.msra.mxu0 0
  %902 = vmatprep.subr.bf16.mxu0 0
  %903 = vmatpush1.bf16.msra.mxu0 0
  %904 = vmatprep.subr.bf16.mxu0 0
  %905 = vmatpush1.bf16.msra.mxu0 0
  %906 = vmatprep.subr.bf16.mxu0 0
  %907 = vmatpush1.bf16.msra.mxu0 0
  %908 = vmatprep.subr.bf16.mxu0 0
  %909 = vmatpush1.bf16.msra.mxu0 0
  %910 = vmatprep.subr.bf16.mxu0 0
  %911 = vmatpush1.bf16.msra.mxu0 0
  %912 = vmatprep.subr.bf16.mxu0 0
  %913 = vmatpush1.bf16.msra.mxu0 0
  %914 = vmatprep.mubr.bf16.mxu0 0
  %915 = vmatmul.mubr.bf16.gmra.mrb[0].mxu0 %v871
  %v916 = vpop.f32.mrb[0].mxu0
  %v917 = vadd.f32 %v856, %v916
  %v918 = vpop.f32.mrb[0].mxu0
  %v919 = vpop.f32.mrb[0].mxu0
  %v920 = vadd.f32 %v856, %v919
  %v921 = vpop.f32.mrb[0].mxu0
  %922 = vmatprep.mubr.bf16.mxu0 0
  %923 = vmatmul.mubr.bf16.gmra.mrb[0].mxu0 %v874
  %v924 = vpop.f32.mrb[0].mxu0
  %v925 = vadd.f32 %v856, %v924
  %v926 = vpop.f32.mrb[0].mxu0
  %v927 = vpop.f32.mrb[0].mxu0
  %v928 = vadd.f32 %v856, %v927
  %v929 = vpop.f32.mrb[0].mxu0
  %930 = vmatprep.mubr.bf16.mxu0 0
  %931 = vmatmul.mubr.bf16.gmra.mrb[0].mxu0 %v877
  %v932 = vpop.f32.mrb[0].mxu0
  %v933 = vadd.f32 %v856, %v932
  %v934 = vpop.f32.mrb[0].mxu0
  %v935 = vpop.f32.mrb[0].mxu0
  %v936 = vadd.f32 %v856, %v935
  %v937 = vpop.f32.mrb[0].mxu0
  %938 = vmatprep.mubr.bf16.mxu0 0
  %939 = vmatmul.mubr.bf16.gmra.mrb[0].mxu0 %v880
  %v940 = vpop.f32.mrb[0].mxu0
  %v941 = vadd.f32 %v856, %v940
  %v942 = vpop.f32.mrb[0].mxu0
  %v943 = vpop.f32.mrb[0].mxu0
  %v944 = vadd.f32 %v856, %v943
  %v945 = vpop.f32.mrb[0].mxu0
  %946 = vdwg.mxu0
  %s947 = scalar_lea.vmem %s6, 1
  %v948 = vld [vmem:[%s947] sm:$0x1]
  %v950 = vlaneseq
  %v951 = vshrl.u32 %v950, 7
  %v952 = vsub.s32 0, %v951
  %v953 = vrot.slane %v948, %v952
  %v958 = vunpack.c.l.b16 %v846
  %v959 = vunpack.c.l.b16 %v847
  %v960 = vunpack.c.l.b16 %v848
  %v961 = vunpack.c.l.b16 %v849
  %v962 = vpack.c.b16 %v959, %v958
  %v963 = vpack.c.b16 %v961, %v960
  %966 = vmatprep.subr.bf16.mxu0 0
  %967 = vmatpush1.bf16.msra.mxu0 %v962
  %968 = vmatprep.subr.bf16.mxu0 0
  %969 = vmatpush1.bf16.msra.mxu0 %v963
  %970 = vmatprep.subr.bf16.mxu0 0
  %971 = vmatpush1.bf16.msra.mxu0 0
  %972 = vmatprep.subr.bf16.mxu0 0
  %973 = vmatpush1.bf16.msra.mxu0 0
  %974 = vmatprep.subr.bf16.mxu0 0
  %975 = vmatpush1.bf16.msra.mxu0 0
  %976 = vmatprep.subr.bf16.mxu0 0
  %977 = vmatpush1.bf16.msra.mxu0 0
  %978 = vmatprep.subr.bf16.mxu0 0
  %979 = vmatpush1.bf16.msra.mxu0 0
  %980 = vmatprep.subr.bf16.mxu0 0
  %981 = vmatpush1.bf16.msra.mxu0 0
  %982 = vmatprep.subr.bf16.mxu0 0
  %983 = vmatpush1.bf16.msra.mxu0 0
  %984 = vmatprep.subr.bf16.mxu0 0
  %985 = vmatpush1.bf16.msra.mxu0 0
  %986 = vmatprep.subr.bf16.mxu0 0
  %987 = vmatpush1.bf16.msra.mxu0 0
  %988 = vmatprep.subr.bf16.mxu0 0
  %989 = vmatpush1.bf16.msra.mxu0 0
  %990 = vmatprep.subr.bf16.mxu0 0
  %991 = vmatpush1.bf16.msra.mxu0 0
  %992 = vmatprep.subr.bf16.mxu0 0
  %993 = vmatpush1.bf16.msra.mxu0 0
  %994 = vmatprep.subr.bf16.mxu0 0
  %995 = vmatpush1.bf16.msra.mxu0 0
  %996 = vmatprep.subr.bf16.mxu0 0
  %997 = vmatpush1.bf16.msra.mxu0 0
  %998 = vmatprep.mubr.bf16.mxu0 0
  %999 = vmatmul.mubr.bf16.gmra.mrb[0].mxu0 %v175
  %v1000 = vpop.f32.mrb[0].mxu0
  %v1001 = vadd.f32 0.0, %v1000
  %v1002 = vpop.f32.mrb[0].mxu0
  %v1003 = vpop.f32.mrb[0].mxu0
  %v1004 = vpop.f32.mrb[0].mxu0
  %1005 = vdwg.mxu0
  %v1006 = vadd.f32 %v917, %v1001
  %v1007 = vxor.u32 %v1006, 2147483648
  %v1008 = vmul.f32 %v1007, 1.442695
  %v1009 = vpow.pop %v1008
  %v1010 = vadd.f32 %v1009, 1.0
  %v1011 = vrcp.pop %v1010
  %v1012 = vmul.f32 1.0, %v1011
  %1013 = vrot.lane.b32.xlu0 %v953, 64
  %v1014 = vpop.permute.xlu0 %1013
  %v1016 = vadd.f32 %v1001, %v1014
  %1018 = vrot.lane.b32.xlu0 %v1016, 64
  %v1019 = vpop.permute.xlu0 %1018
  %v1021 = vmul.f32 %v1012, %v1019
  %1023 = vrot.lane.b32.xlu0 %v1021, 64
  %v1024 = vpop.permute.xlu0 %1023
  %v1026 = vadd.f32 %v917, %v1024
  %v1027 = vtanh.pop %v1026
  %v1028 = vsub.f32 0.0, %v1027
  %1030 = vrot.lane.b32.xlu0 %v1028, 96
  %v1031 = vpop.permute.xlu0 %1030
  %v1033 = vmul.f32 %v1012, %v1031
  %1035 = vrot.lane.b32.xlu0 %v1033, 32
  %v1036 = vpop.permute.xlu0 %1035
  %v1038 = vadd.f32 %v1027, %v1036
  %v1039 = vpack.c.bf16 %v1038, %v1038
  %1041 = vrot.lane.b32.xlu0 %v1038, 64
  %v1042 = vpop.permute.xlu0 %1041
  %1044 = vst.msk [vmem:[#allocation2] sm:$0xff] %vm173, %v1042
  %1046 = vrot.lane.b32.xlu0 %v1039, 64
  %v1047 = vpop.permute.xlu0 %1046
  %v1049 = vsel %vm173, %v1047, 0
  %1051 = vmatprep.subr.bf16.mxu0 0
  %1052 = vmatpush1.bf16.msra.mxu0 %v962
  %1053 = vmatprep.subr.bf16.mxu0 0
  %1054 = vmatpush1.bf16.msra.mxu0 %v963
  %1055 = vmatprep.subr.bf16.mxu0 0
  %1056 = vmatpush1.bf16.msra.mxu0 0
  %1057 = vmatprep.subr.bf16.mxu0 0
  %1058 = vmatpush1.bf16.msra.mxu0 0
  %1059 = vmatprep.subr.bf16.mxu0 0
  %1060 = vmatpush1.bf16.msra.mxu0 0
  %1061 = vmatprep.subr.bf16.mxu0 0
  %1062 = vmatpush1.bf16.msra.mxu0 0
  %1063 = vmatprep.subr.bf16.mxu0 0
  %1064 = vmatpush1.bf16.msra.mxu0 0
  %1065 = vmatprep.subr.bf16.mxu0 0
  %1066 = vmatpush1.bf16.msra.mxu0 0
  %1067 = vmatprep.subr.bf16.mxu0 0
  %1068 = vmatpush1.bf16.msra.mxu0 0
  %1069 = vmatprep.subr.bf16.mxu0 0
  %1070 = vmatpush1.bf16.msra.mxu0 0
  %1071 = vmatprep.subr.bf16.mxu0 0
  %1072 = vmatpush1.bf16.msra.mxu0 0
  %1073 = vmatprep.subr.bf16.mxu0 0
  %1074 = vmatpush1.bf16.msra.mxu0 0
  %1075 = vmatprep.subr.bf16.mxu0 0
  %1076 = vmatpush1.bf16.msra.mxu0 0
  %1077 = vmatprep.subr.bf16.mxu0 0
  %1078 = vmatpush1.bf16.msra.mxu0 0
  %1079 = vmatprep.subr.bf16.mxu0 0
  %1080 = vmatpush1.bf16.msra.mxu0 0
  %1081 = vmatprep.subr.bf16.mxu0 0
  %1082 = vmatpush1.bf16.msra.mxu0 0
  %1083 = vmatprep.mubr.bf16.mxu0 0
  %1084 = vmatmul.mubr.bf16.gmra.mrb[0].mxu0 %v1049
  %v1085 = vpop.f32.mrb[0].mxu0
  %v1086 = vadd.f32 0.0, %v1085
  %v1087 = vpop.f32.mrb[0].mxu0
  %v1088 = vpop.f32.mrb[0].mxu0
  %v1089 = vpop.f32.mrb[0].mxu0
  %1090 = vdwg.mxu0
  %v1091 = vadd.f32 %v920, %v1086
  %v1092 = vxor.u32 %v1091, 2147483648
  %v1093 = vmul.f32 %v1092, 1.442695
  %v1094 = vpow.pop %v1093
  %v1095 = vadd.f32 %v1094, 1.0
  %v1096 = vrcp.pop %v1095
  %v1097 = vmul.f32 1.0, %v1096
  %v1098 = vadd.f32 %v1086, %v1014
  %1100 = vrot.lane.b32.xlu0 %v1098, 64
  %v1101 = vpop.permute.xlu0 %1100
  %v1103 = vmul.f32 %v1097, %v1101
  %1105 = vrot.lane.b32.xlu0 %v1103, 64
  %v1106 = vpop.permute.xlu0 %1105
  %v1108 = vadd.f32 %v920, %v1106
  %v1109 = vtanh.pop %v1108
  %v1110 = vsub.f32 %v1038, %v1109
  %1112 = vrot.lane.b32.xlu0 %v1110, 96
  %v1113 = vpop.permute.xlu0 %1112
  %v1115 = vmul.f32 %v1097, %v1113
  %1117 = vrot.lane.b32.xlu0 %v1115, 32
  %v1118 = vpop.permute.xlu0 %1117
  %v1120 = vadd.f32 %v1109, %v1118
  %v1121 = vpack.c.bf16 %v1120, %v1120
  %1123 = vrot.lane.b32.xlu0 %v1120, 64
  %v1124 = vpop.permute.xlu0 %1123
  %1126 = vst.msk [vmem:[#allocation2 + $0x8] sm:$0xff] %vm173, %v1124
  %1128 = vrot.lane.b32.xlu0 %v1121, 64
  %v1129 = vpop.permute.xlu0 %1128
  %v1131 = vsel %vm173, %v1129, 0
  %1133 = vmatprep.subr.bf16.mxu0 0
  %1134 = vmatpush1.bf16.msra.mxu0 %v962
  %1135 = vmatprep.subr.bf16.mxu0 0
  %1136 = vmatpush1.bf16.msra.mxu0 %v963
  %1137 = vmatprep.subr.bf16.mxu0 0
  %1138 = vmatpush1.bf16.msra.mxu0 0
  %1139 = vmatprep.subr.bf16.mxu0 0
  %1140 = vmatpush1.bf16.msra.mxu0 0
  %1141 = vmatprep.subr.bf16.mxu0 0
  %1142 = vmatpush1.bf16.msra.mxu0 0
  %1143 = vmatprep.subr.bf16.mxu0 0
  %1144 = vmatpush1.bf16.msra.mxu0 0
  %1145 = vmatprep.subr.bf16.mxu0 0
  %1146 = vmatpush1.bf16.msra.mxu0 0
  %1147 = vmatprep.subr.bf16.mxu0 0
  %1148 = vmatpush1.bf16.msra.mxu0 0
  %1149 = vmatprep.subr.bf16.mxu0 0
  %1150 = vmatpush1.bf16.msra.mxu0 0
  %1151 = vmatprep.subr.bf16.mxu0 0
  %1152 = vmatpush1.bf16.msra.mxu0 0
  %1153 = vmatprep.subr.bf16.mxu0 0
  %1154 = vmatpush1.bf16.msra.mxu0 0
  %1155 = vmatprep.subr.bf16.mxu0 0
  %1156 = vmatpush1.bf16.msra.mxu0 0
  %1157 = vmatprep.subr.bf16.mxu0 0
  %1158 = vmatpush1.bf16.msra.mxu0 0
  %1159 = vmatprep.subr.bf16.mxu0 0
  %1160 = vmatpush1.bf16.msra.mxu0 0
  %1161 = vmatprep.subr.bf16.mxu0 0
  %1162 = vmatpush1.bf16.msra.mxu0 0
  %1163 = vmatprep.subr.bf16.mxu0 0
  %1164 = vmatpush1.bf16.msra.mxu0 0
  %1165 = vmatprep.mubr.bf16.mxu0 0
  %1166 = vmatmul.mubr.bf16.gmra.mrb[0].mxu0 %v1131
  %v1167 = vpop.f32.mrb[0].mxu0
  %v1168 = vadd.f32 0.0, %v1167
  %v1169 = vpop.f32.mrb[0].mxu0
  %v1170 = vpop.f32.mrb[0].mxu0
  %v1171 = vpop.f32.mrb[0].mxu0
  %1172 = vdwg.mxu0
  %v1173 = vadd.f32 %v925, %v1168
  %v1174 = vxor.u32 %v1173, 2147483648
  %v1175 = vmul.f32 %v1174, 1.442695
  %v1176 = vpow.pop %v1175
  %v1177 = vadd.f32 %v1176, 1.0
  %v1178 = vrcp.pop %v1177
  %v1179 = vmul.f32 1.0, %v1178
  %v1180 = vadd.f32 %v1168, %v1014
  %1182 = vrot.lane.b32.xlu0 %v1180, 64
  %v1183 = vpop.permute.xlu0 %1182
  %v1185 = vmul.f32 %v1179, %v1183
  %1187 = vrot.lane.b32.xlu0 %v1185, 64
  %v1188 = vpop.permute.xlu0 %1187
  %v1190 = vadd.f32 %v925, %v1188
  %v1191 = vtanh.pop %v1190
  %v1192 = vsub.f32 %v1120, %v1191
  %1194 = vrot.lane.b32.xlu0 %v1192, 96
  %v1195 = vpop.permute.xlu0 %1194
  %v1197 = vmul.f32 %v1179, %v1195
  %1199 = vrot.lane.b32.xlu0 %v1197, 32
  %v1200 = vpop.permute.xlu0 %1199
  %v1202 = vadd.f32 %v1191, %v1200
  %v1203 = vpack.c.bf16 %v1202, %v1202
  %1205 = vrot.lane.b32.xlu0 %v1202, 64
  %v1206 = vpop.permute.xlu0 %1205
  %1208 = vst.msk [vmem:[#allocation2 + $0x10] sm:$0xff] %vm173, %v1206
  %1210 = vrot.lane.b32.xlu0 %v1203, 64
  %v1211 = vpop.permute.xlu0 %1210
  %v1213 = vsel %vm173, %v1211, 0
  %1215 = vmatprep.subr.bf16.mxu0 0
  %1216 = vmatpush1.bf16.msra.mxu0 %v962
  %1217 = vmatprep.subr.bf16.mxu0 0
  %1218 = vmatpush1.bf16.msra.mxu0 %v963
  %1219 = vmatprep.subr.bf16.mxu0 0
  %1220 = vmatpush1.bf16.msra.mxu0 0
  %1221 = vmatprep.subr.bf16.mxu0 0
  %1222 = vmatpush1.bf16.msra.mxu0 0
  %1223 = vmatprep.subr.bf16.mxu0 0
  %1224 = vmatpush1.bf16.msra.mxu0 0
  %1225 = vmatprep.subr.bf16.mxu0 0
  %1226 = vmatpush1.bf16.msra.mxu0 0
  %1227 = vmatprep.subr.bf16.mxu0 0
  %1228 = vmatpush1.bf16.msra.mxu0 0
  %1229 = vmatprep.subr.bf16.mxu0 0
  %1230 = vmatpush1.bf16.msra.mxu0 0
  %1231 = vmatprep.subr.bf16.mxu0 0
  %1232 = vmatpush1.bf16.msra.mxu0 0
  %1233 = vmatprep.subr.bf16.mxu0 0
  %1234 = vmatpush1.bf16.msra.mxu0 0
  %1235 = vmatprep.subr.bf16.mxu0 0
  %1236 = vmatpush1.bf16.msra.mxu0 0
  %1237 = vmatprep.subr.bf16.mxu0 0
  %1238 = vmatpush1.bf16.msra.mxu0 0
  %1239 = vmatprep.subr.bf16.mxu0 0
  %1240 = vmatpush1.bf16.msra.mxu0 0
  %1241 = vmatprep.subr.bf16.mxu0 0
  %1242 = vmatpush1.bf16.msra.mxu0 0
  %1243 = vmatprep.subr.bf16.mxu0 0
  %1244 = vmatpush1.bf16.msra.mxu0 0
  %1245 = vmatprep.subr.bf16.mxu0 0
  %1246 = vmatpush1.bf16.msra.mxu0 0
  %1247 = vmatprep.mubr.bf16.mxu0 0
  %1248 = vmatmul.mubr.bf16.gmra.mrb[0].mxu0 %v1213
  %v1249 = vpop.f32.mrb[0].mxu0
  %v1250 = vadd.f32 0.0, %v1249
  %v1251 = vpop.f32.mrb[0].mxu0
  %v1252 = vpop.f32.mrb[0].mxu0
  %v1253 = vpop.f32.mrb[0].mxu0
  %1254 = vdwg.mxu0
  %v1255 = vadd.f32 %v928, %v1250
  %v1256 = vxor.u32 %v1255, 2147483648
  %v1257 = vmul.f32 %v1256, 1.442695
  %v1258 = vpow.pop %v1257
  %v1259 = vadd.f32 %v1258, 1.0
  %v1260 = vrcp.pop %v1259
  %v1261 = vmul.f32 1.0, %v1260
  %v1262 = vadd.f32 %v1250, %v1014
  %1264 = vrot.lane.b32.xlu0 %v1262, 64
  %v1265 = vpop.permute.xlu0 %1264
  %v1267 = vmul.f32 %v1261, %v1265
  %1269 = vrot.lane.b32.xlu0 %v1267, 64
  %v1270 = vpop.permute.xlu0 %1269
  %v1272 = vadd.f32 %v928, %v1270
  %v1273 = vtanh.pop %v1272
  %v1274 = vsub.f32 %v1202, %v1273
  %1276 = vrot.lane.b32.xlu0 %v1274, 96
  %v1277 = vpop.permute.xlu0 %1276
  %v1279 = vmul.f32 %v1261, %v1277
  %1281 = vrot.lane.b32.xlu0 %v1279, 32
  %v1282 = vpop.permute.xlu0 %1281
  %v1284 = vadd.f32 %v1273, %v1282
  %v1285 = vpack.c.bf16 %v1284, %v1284
  %1287 = vrot.lane.b32.xlu0 %v1284, 64
  %v1288 = vpop.permute.xlu0 %1287
  %1290 = vst.msk [vmem:[#allocation2 + $0x18] sm:$0xff] %vm173, %v1288
  %1292 = vrot.lane.b32.xlu0 %v1285, 64
  %v1293 = vpop.permute.xlu0 %1292
  %v1295 = vsel %vm173, %v1293, 0
  %1297 = vmatprep.subr.bf16.mxu0 0
  %1298 = vmatpush1.bf16.msra.mxu0 %v962
  %1299 = vmatprep.subr.bf16.mxu0 0
  %1300 = vmatpush1.bf16.msra.mxu0 %v963
  %1301 = vmatprep.subr.bf16.mxu0 0
  %1302 = vmatpush1.bf16.msra.mxu0 0
  %1303 = vmatprep.subr.bf16.mxu0 0
  %1304 = vmatpush1.bf16.msra.mxu0 0
  %1305 = vmatprep.subr.bf16.mxu0 0
  %1306 = vmatpush1.bf16.msra.mxu0 0
  %1307 = vmatprep.subr.bf16.mxu0 0
  %1308 = vmatpush1.bf16.msra.mxu0 0
  %1309 = vmatprep.subr.bf16.mxu0 0
  %1310 = vmatpush1.bf16.msra.mxu0 0
  %1311 = vmatprep.subr.bf16.mxu0 0
  %1312 = vmatpush1.bf16.msra.mxu0 0
  %1313 = vmatprep.subr.bf16.mxu0 0
  %1314 = vmatpush1.bf16.msra.mxu0 0
  %1315 = vmatprep.subr.bf16.mxu0 0
  %1316 = vmatpush1.bf16.msra.mxu0 0
  %1317 = vmatprep.subr.bf16.mxu0 0
  %1318 = vmatpush1.bf16.msra.mxu0 0
  %1319 = vmatprep.subr.bf16.mxu0 0
  %1320 = vmatpush1.bf16.msra.mxu0 0
  %1321 = vmatprep.subr.bf16.mxu0 0
  %1322 = vmatpush1.bf16.msra.mxu0 0
  %1323 = vmatprep.subr.bf16.mxu0 0
  %1324 = vmatpush1.bf16.msra.mxu0 0
  %1325 = vmatprep.subr.bf16.mxu0 0
  %1326 = vmatpush1.bf16.msra.mxu0 0
  %1327 = vmatprep.subr.bf16.mxu0 0
  %1328 = vmatpush1.bf16.msra.mxu0 0
  %1329 = vmatprep.mubr.bf16.mxu0 0
  %1330 = vmatmul.mubr.bf16.gmra.mrb[0].mxu0 %v1295
  %v1331 = vpop.f32.mrb[0].mxu0
  %v1332 = vadd.f32 0.0, %v1331
  %v1333 = vpop.f32.mrb[0].mxu0
  %v1334 = vpop.f32.mrb[0].mxu0
  %v1335 = vpop.f32.mrb[0].mxu0
  %1336 = vdwg.mxu0
  %v1337 = vadd.f32 %v933, %v1332
  %v1338 = vxor.u32 %v1337, 2147483648
  %v1339 = vmul.f32 %v1338, 1.442695
  %v1340 = vpow.pop %v1339
  %v1341 = vadd.f32 %v1340, 1.0
  %v1342 = vrcp.pop %v1341
  %v1343 = vmul.f32 1.0, %v1342
  %v1344 = vadd.f32 %v1332, %v1014
  %1346 = vrot.lane.b32.xlu0 %v1344, 64
  %v1347 = vpop.permute.xlu0 %1346
  %v1349 = vmul.f32 %v1343, %v1347
  %1351 = vrot.lane.b32.xlu0 %v1349, 64
  %v1352 = vpop.permute.xlu0 %1351
  %v1354 = vadd.f32 %v933, %v1352
  %v1355 = vtanh.pop %v1354
  %v1356 = vsub.f32 %v1284, %v1355
  %1358 = vrot.lane.b32.xlu0 %v1356, 96
  %v1359 = vpop.permute.xlu0 %1358
  %v1361 = vmul.f32 %v1343, %v1359
  %1363 = vrot.lane.b32.xlu0 %v1361, 32
  %v1364 = vpop.permute.xlu0 %1363
  %v1366 = vadd.f32 %v1355, %v1364
  %v1367 = vpack.c.bf16 %v1366, %v1366
  %1369 = vrot.lane.b32.xlu0 %v1366, 64
  %v1370 = vpop.permute.xlu0 %1369
  %1372 = vst.msk [vmem:[#allocation2 + $0x20] sm:$0xff] %vm173, %v1370
  %1374 = vrot.lane.b32.xlu0 %v1367, 64
  %v1375 = vpop.permute.xlu0 %1374
  %v1377 = vsel %vm173, %v1375, 0
  %1379 = vmatprep.subr.bf16.mxu0 0
  %1380 = vmatpush1.bf16.msra.mxu0 %v962
  %1381 = vmatprep.subr.bf16.mxu0 0
  %1382 = vmatpush1.bf16.msra.mxu0 %v963
  %1383 = vmatprep.subr.bf16.mxu0 0
  %1384 = vmatpush1.bf16.msra.mxu0 0
  %1385 = vmatprep.subr.bf16.mxu0 0
  %1386 = vmatpush1.bf16.msra.mxu0 0
  %1387 = vmatprep.subr.bf16.mxu0 0
  %1388 = vmatpush1.bf16.msra.mxu0 0
  %1389 = vmatprep.subr.bf16.mxu0 0
  %1390 = vmatpush1.bf16.msra.mxu0 0
  %1391 = vmatprep.subr.bf16.mxu0 0
  %1392 = vmatpush1.bf16.msra.mxu0 0
  %1393 = vmatprep.subr.bf16.mxu0 0
  %1394 = vmatpush1.bf16.msra.mxu0 0
  %1395 = vmatprep.subr.bf16.mxu0 0
  %1396 = vmatpush1.bf16.msra.mxu0 0
  %1397 = vmatprep.subr.bf16.mxu0 0
  %1398 = vmatpush1.bf16.msra.mxu0 0
  %1399 = vmatprep.subr.bf16.mxu0 0
  %1400 = vmatpush1.bf16.msra.mxu0 0
  %1401 = vmatprep.subr.bf16.mxu0 0
  %1402 = vmatpush1.bf16.msra.mxu0 0
  %1403 = vmatprep.subr.bf16.mxu0 0
  %1404 = vmatpush1.bf16.msra.mxu0 0
  %1405 = vmatprep.subr.bf16.mxu0 0
  %1406 = vmatpush1.bf16.msra.mxu0 0
  %1407 = vmatprep.subr.bf16.mxu0 0
  %1408 = vmatpush1.bf16.msra.mxu0 0
  %1409 = vmatprep.subr.bf16.mxu0 0
  %1410 = vmatpush1.bf16.msra.mxu0 0
  %1411 = vmatprep.mubr.bf16.mxu0 0
  %1412 = vmatmul.mubr.bf16.gmra.mrb[0].mxu0 %v1377
  %v1413 = vpop.f32.mrb[0].mxu0
  %v1414 = vadd.f32 0.0, %v1413
  %v1415 = vpop.f32.mrb[0].mxu0
  %v1416 = vpop.f32.mrb[0].mxu0
  %v1417 = vpop.f32.mrb[0].mxu0
  %1418 = vdwg.mxu0
  %v1419 = vadd.f32 %v936, %v1414
  %v1420 = vxor.u32 %v1419, 2147483648
  %v1421 = vmul.f32 %v1420, 1.442695
  %v1422 = vpow.pop %v1421
  %v1423 = vadd.f32 %v1422, 1.0
  %v1424 = vrcp.pop %v1423
  %v1425 = vmul.f32 1.0, %v1424
  %v1426 = vadd.f32 %v1414, %v1014
  %1428 = vrot.lane.b32.xlu0 %v1426, 64
  %v1429 = vpop.permute.xlu0 %1428
  %v1431 = vmul.f32 %v1425, %v1429
  %1433 = vrot.lane.b32.xlu0 %v1431, 64
  %v1434 = vpop.permute.xlu0 %1433
  %v1436 = vadd.f32 %v936, %v1434
  %v1437 = vtanh.pop %v1436
  %v1438 = vsub.f32 %v1366, %v1437
  %1440 = vrot.lane.b32.xlu0 %v1438, 96
  %v1441 = vpop.permute.xlu0 %1440
  %v1443 = vmul.f32 %v1425, %v1441
  %1445 = vrot.lane.b32.xlu0 %v1443, 32
  %v1446 = vpop.permute.xlu0 %1445
  %v1448 = vadd.f32 %v1437, %v1446
  %v1449 = vpack.c.bf16 %v1448, %v1448
  %1451 = vrot.lane.b32.xlu0 %v1448, 64
  %v1452 = vpop.permute.xlu0 %1451
  %1454 = vst.msk [vmem:[#allocation2 + $0x28] sm:$0xff] %vm173, %v1452
  %1456 = vrot.lane.b32.xlu0 %v1449, 64
  %v1457 = vpop.permute.xlu0 %1456
  %v1459 = vsel %vm173, %v1457, 0
  %1461 = vmatprep.subr.bf16.mxu0 0
  %1462 = vmatpush1.bf16.msra.mxu0 %v962
  %1463 = vmatprep.subr.bf16.mxu0 0
  %1464 = vmatpush1.bf16.msra.mxu0 %v963
  %1465 = vmatprep.subr.bf16.mxu0 0
  %1466 = vmatpush1.bf16.msra.mxu0 0
  %1467 = vmatprep.subr.bf16.mxu0 0
  %1468 = vmatpush1.bf16.msra.mxu0 0
  %1469 = vmatprep.subr.bf16.mxu0 0
  %1470 = vmatpush1.bf16.msra.mxu0 0
  %1471 = vmatprep.subr.bf16.mxu0 0
  %1472 = vmatpush1.bf16.msra.mxu0 0
  %1473 = vmatprep.subr.bf16.mxu0 0
  %1474 = vmatpush1.bf16.msra.mxu0 0
  %1475 = vmatprep.subr.bf16.mxu0 0
  %1476 = vmatpush1.bf16.msra.mxu0 0
  %1477 = vmatprep.subr.bf16.mxu0 0
  %1478 = vmatpush1.bf16.msra.mxu0 0
  %1479 = vmatprep.subr.bf16.mxu0 0
  %1480 = vmatpush1.bf16.msra.mxu0 0
  %1481 = vmatprep.subr.bf16.mxu0 0
  %1482 = vmatpush1.bf16.msra.mxu0 0
  %1483 = vmatprep.subr.bf16.mxu0 0
  %1484 = vmatpush1.bf16.msra.mxu0 0
  %1485 = vmatprep.subr.bf16.mxu0 0
  %1486 = vmatpush1.bf16.msra.mxu0 0
  %1487 = vmatprep.subr.bf16.mxu0 0
  %1488 = vmatpush1.bf16.msra.mxu0 0
  %1489 = vmatprep.subr.bf16.mxu0 0
  %1490 = vmatpush1.bf16.msra.mxu0 0
  %1491 = vmatprep.subr.bf16.mxu0 0
  %1492 = vmatpush1.bf16.msra.mxu0 0
  %1493 = vmatprep.mubr.bf16.mxu0 0
  %1494 = vmatmul.mubr.bf16.gmra.mrb[0].mxu0 %v1459
  %v1495 = vpop.f32.mrb[0].mxu0
  %v1496 = vadd.f32 0.0, %v1495
  %v1497 = vpop.f32.mrb[0].mxu0
  %v1498 = vpop.f32.mrb[0].mxu0
  %v1499 = vpop.f32.mrb[0].mxu0
  %1500 = vdwg.mxu0
  %v1501 = vadd.f32 %v941, %v1496
  %v1502 = vxor.u32 %v1501, 2147483648
  %v1503 = vmul.f32 %v1502, 1.442695
  %v1504 = vpow.pop %v1503
  %v1505 = vadd.f32 %v1504, 1.0
  %v1506 = vrcp.pop %v1505
  %v1507 = vmul.f32 1.0, %v1506
  %v1508 = vadd.f32 %v1496, %v1014
  %1510 = vrot.lane.b32.xlu0 %v1508, 64
  %v1511 = vpop.permute.xlu0 %1510
  %v1513 = vmul.f32 %v1507, %v1511
  %1515 = vrot.lane.b32.xlu0 %v1513, 64
  %v1516 = vpop.permute.xlu0 %1515
  %v1518 = vadd.f32 %v941, %v1516
  %v1519 = vtanh.pop %v1518
  %v1520 = vsub.f32 %v1448, %v1519
  %1522 = vrot.lane.b32.xlu0 %v1520, 96
  %v1523 = vpop.permute.xlu0 %1522
  %v1525 = vmul.f32 %v1507, %v1523
  %1527 = vrot.lane.b32.xlu0 %v1525, 32
  %v1528 = vpop.permute.xlu0 %1527
  %v1530 = vadd.f32 %v1519, %v1528
  %v1531 = vpack.c.bf16 %v1530, %v1530
  %1533 = vrot.lane.b32.xlu0 %v1530, 64
  %v1534 = vpop.permute.xlu0 %1533
  %1536 = vst.msk [vmem:[#allocation2 + $0x30] sm:$0xff] %vm173, %v1534
  %1538 = vrot.lane.b32.xlu0 %v1531, 64
  %v1539 = vpop.permute.xlu0 %1538
  %v1541 = vsel %vm173, %v1539, 0
  %1543 = vmatprep.subr.bf16.mxu0 0
  %1544 = vmatpush1.bf16.msra.mxu0 %v962
  %1545 = vmatprep.subr.bf16.mxu0 0
  %1546 = vmatpush1.bf16.msra.mxu0 %v963
  %1547 = vmatprep.subr.bf16.mxu0 0
  %1548 = vmatpush1.bf16.msra.mxu0 0
  %1549 = vmatprep.subr.bf16.mxu0 0
  %1550 = vmatpush1.bf16.msra.mxu0 0
  %1551 = vmatprep.subr.bf16.mxu0 0
  %1552 = vmatpush1.bf16.msra.mxu0 0
  %1553 = vmatprep.subr.bf16.mxu0 0
  %1554 = vmatpush1.bf16.msra.mxu0 0
  %1555 = vmatprep.subr.bf16.mxu0 0
  %1556 = vmatpush1.bf16.msra.mxu0 0
  %1557 = vmatprep.subr.bf16.mxu0 0
  %1558 = vmatpush1.bf16.msra.mxu0 0
  %1559 = vmatprep.subr.bf16.mxu0 0
  %1560 = vmatpush1.bf16.msra.mxu0 0
  %1561 = vmatprep.subr.bf16.mxu0 0
  %1562 = vmatpush1.bf16.msra.mxu0 0
  %1563 = vmatprep.subr.bf16.mxu0 0
  %1564 = vmatpush1.bf16.msra.mxu0 0
  %1565 = vmatprep.subr.bf16.mxu0 0
  %1566 = vmatpush1.bf16.msra.mxu0 0
  %1567 = vmatprep.subr.bf16.mxu0 0
  %1568 = vmatpush1.bf16.msra.mxu0 0
  %1569 = vmatprep.subr.bf16.mxu0 0
  %1570 = vmatpush1.bf16.msra.mxu0 0
  %1571 = vmatprep.subr.bf16.mxu0 0
  %1572 = vmatpush1.bf16.msra.mxu0 0
  %1573 = vmatprep.subr.bf16.mxu0 0
  %1574 = vmatpush1.bf16.msra.mxu0 0
  %1575 = vmatprep.mubr.bf16.mxu0 0
  %1576 = vmatmul.mubr.bf16.gmra.mrb[0].mxu0 %v1541
  %v1577 = vpop.f32.mrb[0].mxu0
  %v1578 = vadd.f32 0.0, %v1577
  %v1579 = vpop.f32.mrb[0].mxu0
  %v1580 = vpop.f32.mrb[0].mxu0
  %v1581 = vpop.f32.mrb[0].mxu0
  %1582 = vdwg.mxu0
  %v1583 = vadd.f32 %v944, %v1578
  %v1584 = vxor.u32 %v1583, 2147483648
  %v1585 = vmul.f32 %v1584, 1.442695
  %v1586 = vpow.pop %v1585
  %v1587 = vadd.f32 %v1586, 1.0
  %v1588 = vrcp.pop %v1587
  %v1589 = vmul.f32 1.0, %v1588
  %v1590 = vadd.f32 %v1578, %v1014
  %1592 = vrot.lane.b32.xlu0 %v1590, 64
  %v1593 = vpop.permute.xlu0 %1592
  %v1595 = vmul.f32 %v1589, %v1593
  %1597 = vrot.lane.b32.xlu0 %v1595, 64
  %v1598 = vpop.permute.xlu0 %1597
  %v1600 = vadd.f32 %v944, %v1598
  %v1601 = vtanh.pop %v1600
  %v1602 = vsub.f32 %v1530, %v1601
  %1604 = vrot.lane.b32.xlu0 %v1602, 96
  %v1605 = vpop.permute.xlu0 %1604
  %v1607 = vmul.f32 %v1589, %v1605
  %1609 = vrot.lane.b32.xlu0 %v1607, 32
  %v1610 = vpop.permute.xlu0 %1609
  %v1612 = vadd.f32 %v1601, %v1610
  %1614 = vrot.lane.b32.xlu0 %v1612, 64
  %v1615 = vpop.permute.xlu0 %1614
  %1617 = vst.msk [vmem:[#allocation2 + $0x38] sm:$0xff] %vm173, %v1615
  %v1618 = vld [vmem:[#allocation2] sm:$0xff]
  %v1619 = vld [vmem:[#allocation2 + $0x8] sm:$0xff]
  %v1620 = vld [vmem:[#allocation2 + $0x10] sm:$0xff]
  %v1621 = vld [vmem:[#allocation2 + $0x18] sm:$0xff]
  %v1622 = vld [vmem:[#allocation2 + $0x20] sm:$0xff]
  %v1623 = vld [vmem:[#allocation2 + $0x28] sm:$0xff]
  %v1624 = vld [vmem:[#allocation2 + $0x30] sm:$0xff]
  %v1625 = vld [vmem:[#allocation2 + $0x38] sm:$0xff]
  %v1626 = vpack.c.bf16 %v1619, %v1618
  %v1627 = vpack.c.bf16 %v1621, %v1620
  %v1628 = vpack.c.bf16 %v1623, %v1622
  %v1629 = vpack.c.bf16 %v1625, %v1624
  %s1630 = scalar_lea.vmem %s3, 16
  %v1631 = vld [vmem:[%s1630] sm:$0xf]
  %v1632 = vld [vmem:[%s1630 + $0x4] sm:$0xf]
  %v1633 = vld [vmem:[%s1630 + $0x8] sm:$0xf]
  %v1634 = vld [vmem:[%s1630 + $0xc] sm:$0xf]
  %s1635 = scalar_lea.vmem %s4, 32
  %v1636 = vld [vmem:[%s1635] sm:$0xf]
  %v1637 = vld [vmem:[%s1635 + $0x4] sm:$0xf]
  %v1638 = vld [vmem:[%s1635 + $0x8] sm:$0xf]
  %v1639 = vld [vmem:[%s1635 + $0xc] sm:$0xf]
  %s1640 = scalar_lea.vmem %s5, 2
  %v1641 = vld [vmem:[%s1640] sm:$0x1]
  %v1643 = vlaneseq
  %v1644 = vshrl.u32 %v1643, 7
  %v1645 = vsub.s32 0, %v1644
  %v1646 = vrot.slane %v1641, %v1645
  %v1652 = vunpack.c.l.b16 %v1631
  %v1653 = vunpack.c.l.b16 %v1632
  %v1654 = vunpack.c.l.b16 %v1633
  %v1655 = vunpack.c.l.b16 %v1634
  %v1656 = vpack.c.b16 %v1653, %v1652
  %v1657 = vpack.c.b16 %v1655, %v1654
  %v1661 = vsel %vm173, %v1626, 0
  %v1664 = vsel %vm173, %v1627, 0
  %v1667 = vsel %vm173, %v1628, 0
  %v1670 = vsel %vm173, %v1629, 0
  %1672 = vmatprep.subr.bf16.mxu0 0
  %1673 = vmatpush1.bf16.msra.mxu0 %v1656
  %1674 = vmatprep.subr.bf16.mxu0 0
  %1675 = vmatpush1.bf16.msra.mxu0 %v1657
  %1676 = vmatprep.subr.bf16.mxu0 0
  %1677 = vmatpush1.bf16.msra.mxu0 0
  %1678 = vmatprep.subr.bf16.mxu0 0
  %1679 = vmatpush1.bf16.msra.mxu0 0
  %1680 = vmatprep.subr.bf16.mxu0 0
  %1681 = vmatpush1.bf16.msra.mxu0 0
  %1682 = vmatprep.subr.bf16.mxu0 0
  %1683 = vmatpush1.bf16.msra.mxu0 0
  %1684 = vmatprep.subr.bf16.mxu0 0
  %1685 = vmatpush1.bf16.msra.mxu0 0
  %1686 = vmatprep.subr.bf16.mxu0 0
  %1687 = vmatpush1.bf16.msra.mxu0 0
  %1688 = vmatprep.subr.bf16.mxu0 0
  %1689 = vmatpush1.bf16.msra.mxu0 0
  %1690 = vmatprep.subr.bf16.mxu0 0
  %1691 = vmatpush1.bf16.msra.mxu0 0
  %1692 = vmatprep.subr.bf16.mxu0 0
  %1693 = vmatpush1.bf16.msra.mxu0 0
  %1694 = vmatprep.subr.bf16.mxu0 0
  %1695 = vmatpush1.bf16.msra.mxu0 0
  %1696 = vmatprep.subr.bf16.mxu0 0
  %1697 = vmatpush1.bf16.msra.mxu0 0
  %1698 = vmatprep.subr.bf16.mxu0 0
  %1699 = vmatpush1.bf16.msra.mxu0 0
  %1700 = vmatprep.subr.bf16.mxu0 0
  %1701 = vmatpush1.bf16.msra.mxu0 0
  %1702 = vmatprep.subr.bf16.mxu0 0
  %1703 = vmatpush1.bf16.msra.mxu0 0
  %1704 = vmatprep.mubr.bf16.mxu0 0
  %1705 = vmatmul.mubr.bf16.gmra.mrb[0].mxu0 %v1661
  %v1706 = vpop.f32.mrb[0].mxu0
  %v1707 = vadd.f32 %v1646, %v1706
  %v1708 = vpop.f32.mrb[0].mxu0
  %v1709 = vpop.f32.mrb[0].mxu0
  %v1710 = vadd.f32 %v1646, %v1709
  %v1711 = vpop.f32.mrb[0].mxu0
  %1712 = vmatprep.mubr.bf16.mxu0 0
  %1713 = vmatmul.mubr.bf16.gmra.mrb[0].mxu0 %v1664
  %v1714 = vpop.f32.mrb[0].mxu0
  %v1715 = vadd.f32 %v1646, %v1714
  %v1716 = vpop.f32.mrb[0].mxu0
  %v1717 = vpop.f32.mrb[0].mxu0
  %v1718 = vadd.f32 %v1646, %v1717
  %v1719 = vpop.f32.mrb[0].mxu0
  %1720 = vmatprep.mubr.bf16.mxu0 0
  %1721 = vmatmul.mubr.bf16.gmra.mrb[0].mxu0 %v1667
  %v1722 = vpop.f32.mrb[0].mxu0
  %v1723 = vadd.f32 %v1646, %v1722
  %v1724 = vpop.f32.mrb[0].mxu0
  %v1725 = vpop.f32.mrb[0].mxu0
  %v1726 = vadd.f32 %v1646, %v1725
  %v1727 = vpop.f32.mrb[0].mxu0
  %1728 = vmatprep.mubr.bf16.mxu0 0
  %1729 = vmatmul.mubr.bf16.gmra.mrb[0].mxu0 %v1670
  %v1730 = vpop.f32.mrb[0].mxu0
  %v1731 = vadd.f32 %v1646, %v1730
  %v1732 = vpop.f32.mrb[0].mxu0
  %v1733 = vpop.f32.mrb[0].mxu0
  %v1734 = vadd.f32 %v1646, %v1733
  %v1735 = vpop.f32.mrb[0].mxu0
  %1736 = vdwg.mxu0
  %s1737 = scalar_lea.vmem %s6, 2
  %v1738 = vld [vmem:[%s1737] sm:$0x1]
  %v1740 = vlaneseq
  %v1741 = vshrl.u32 %v1740, 7
  %v1742 = vsub.s32 0, %v1741
  %v1743 = vrot.slane %v1738, %v1742
  %v1748 = vunpack.c.l.b16 %v1636
  %v1749 = vunpack.c.l.b16 %v1637
  %v1750 = vunpack.c.l.b16 %v1638
  %v1751 = vunpack.c.l.b16 %v1639
  %v1752 = vpack.c.b16 %v1749, %v1748
  %v1753 = vpack.c.b16 %v1751, %v1750
  %1756 = vmatprep.subr.bf16.mxu0 0
  %1757 = vmatpush1.bf16.msra.mxu0 %v1752
  %1758 = vmatprep.subr.bf16.mxu0 0
  %1759 = vmatpush1.bf16.msra.mxu0 %v1753
  %1760 = vmatprep.subr.bf16.mxu0 0
  %1761 = vmatpush1.bf16.msra.mxu0 0
  %1762 = vmatprep.subr.bf16.mxu0 0
  %1763 = vmatpush1.bf16.msra.mxu0 0
  %1764 = vmatprep.subr.bf16.mxu0 0
  %1765 = vmatpush1.bf16.msra.mxu0 0
  %1766 = vmatprep.subr.bf16.mxu0 0
  %1767 = vmatpush1.bf16.msra.mxu0 0
  %1768 = vmatprep.subr.bf16.mxu0 0
  %1769 = vmatpush1.bf16.msra.mxu0 0
  %1770 = vmatprep.subr.bf16.mxu0 0
  %1771 = vmatpush1.bf16.msra.mxu0 0
  %1772 = vmatprep.subr.bf16.mxu0 0
  %1773 = vmatpush1.bf16.msra.mxu0 0
  %1774 = vmatprep.subr.bf16.mxu0 0
  %1775 = vmatpush1.bf16.msra.mxu0 0
  %1776 = vmatprep.subr.bf16.mxu0 0
  %1777 = vmatpush1.bf16.msra.mxu0 0
  %1778 = vmatprep.subr.bf16.mxu0 0
  %1779 = vmatpush1.bf16.msra.mxu0 0
  %1780 = vmatprep.subr.bf16.mxu0 0
  %1781 = vmatpush1.bf16.msra.mxu0 0
  %1782 = vmatprep.subr.bf16.mxu0 0
  %1783 = vmatpush1.bf16.msra.mxu0 0
  %1784 = vmatprep.subr.bf16.mxu0 0
  %1785 = vmatpush1.bf16.msra.mxu0 0
  %1786 = vmatprep.subr.bf16.mxu0 0
  %1787 = vmatpush1.bf16.msra.mxu0 0
  %1788 = vmatprep.mubr.bf16.mxu0 0
  %1789 = vmatmul.mubr.bf16.gmra.mrb[0].mxu0 %v175
  %v1790 = vpop.f32.mrb[0].mxu0
  %v1791 = vadd.f32 0.0, %v1790
  %v1792 = vpop.f32.mrb[0].mxu0
  %v1793 = vpop.f32.mrb[0].mxu0
  %v1794 = vpop.f32.mrb[0].mxu0
  %1795 = vdwg.mxu0
  %v1796 = vadd.f32 %v1707, %v1791
  %v1797 = vxor.u32 %v1796, 2147483648
  %v1798 = vmul.f32 %v1797, 1.442695
  %v1799 = vpow.pop %v1798
  %v1800 = vadd.f32 %v1799, 1.0
  %v1801 = vrcp.pop %v1800
  %v1802 = vmul.f32 1.0, %v1801
  %1803 = vrot.lane.b32.xlu0 %v1743, 64
  %v1804 = vpop.permute.xlu0 %1803
  %v1806 = vadd.f32 %v1791, %v1804
  %1808 = vrot.lane.b32.xlu0 %v1806, 64
  %v1809 = vpop.permute.xlu0 %1808
  %v1811 = vmul.f32 %v1802, %v1809
  %1813 = vrot.lane.b32.xlu0 %v1811, 64
  %v1814 = vpop.permute.xlu0 %1813
  %v1816 = vadd.f32 %v1707, %v1814
  %v1817 = vtanh.pop %v1816
  %v1818 = vsub.f32 0.0, %v1817
  %1820 = vrot.lane.b32.xlu0 %v1818, 96
  %v1821 = vpop.permute.xlu0 %1820
  %v1823 = vmul.f32 %v1802, %v1821
  %1825 = vrot.lane.b32.xlu0 %v1823, 32
  %v1826 = vpop.permute.xlu0 %1825
  %v1828 = vadd.f32 %v1817, %v1826
  %v1829 = vpack.c.bf16 %v1828, %v1828
  %1831 = vrot.lane.b32.xlu0 %v1829, 64
  %v1832 = vpop.permute.xlu0 %1831
  %v1834 = vsel %vm173, %v1832, 0
  %1836 = vmatprep.subr.bf16.mxu0 0
  %1837 = vmatpush1.bf16.msra.mxu0 %v1752
  %1838 = vmatprep.subr.bf16.mxu0 0
  %1839 = vmatpush1.bf16.msra.mxu0 %v1753
  %1840 = vmatprep.subr.bf16.mxu0 0
  %1841 = vmatpush1.bf16.msra.mxu0 0
  %1842 = vmatprep.subr.bf16.mxu0 0
  %1843 = vmatpush1.bf16.msra.mxu0 0
  %1844 = vmatprep.subr.bf16.mxu0 0
  %1845 = vmatpush1.bf16.msra.mxu0 0
  %1846 = vmatprep.subr.bf16.mxu0 0
  %1847 = vmatpush1.bf16.msra.mxu0 0
  %1848 = vmatprep.subr.bf16.mxu0 0
  %1849 = vmatpush1.bf16.msra.mxu0 0
  %1850 = vmatprep.subr.bf16.mxu0 0
  %1851 = vmatpush1.bf16.msra.mxu0 0
  %1852 = vmatprep.subr.bf16.mxu0 0
  %1853 = vmatpush1.bf16.msra.mxu0 0
  %1854 = vmatprep.subr.bf16.mxu0 0
  %1855 = vmatpush1.bf16.msra.mxu0 0
  %1856 = vmatprep.subr.bf16.mxu0 0
  %1857 = vmatpush1.bf16.msra.mxu0 0
  %1858 = vmatprep.subr.bf16.mxu0 0
  %1859 = vmatpush1.bf16.msra.mxu0 0
  %1860 = vmatprep.subr.bf16.mxu0 0
  %1861 = vmatpush1.bf16.msra.mxu0 0
  %1862 = vmatprep.subr.bf16.mxu0 0
  %1863 = vmatpush1.bf16.msra.mxu0 0
  %1864 = vmatprep.subr.bf16.mxu0 0
  %1865 = vmatpush1.bf16.msra.mxu0 0
  %1866 = vmatprep.subr.bf16.mxu0 0
  %1867 = vmatpush1.bf16.msra.mxu0 0
  %1868 = vmatprep.mubr.bf16.mxu0 0
  %1869 = vmatmul.mubr.bf16.gmra.mrb[0].mxu0 %v1834
  %v1870 = vpop.f32.mrb[0].mxu0
  %v1871 = vadd.f32 0.0, %v1870
  %v1872 = vpop.f32.mrb[0].mxu0
  %v1873 = vpop.f32.mrb[0].mxu0
  %v1874 = vpop.f32.mrb[0].mxu0
  %1875 = vdwg.mxu0
  %v1876 = vadd.f32 %v1710, %v1871
  %v1877 = vxor.u32 %v1876, 2147483648
  %v1878 = vmul.f32 %v1877, 1.442695
  %v1879 = vpow.pop %v1878
  %v1880 = vadd.f32 %v1879, 1.0
  %v1881 = vrcp.pop %v1880
  %v1882 = vmul.f32 1.0, %v1881
  %v1883 = vadd.f32 %v1871, %v1804
  %1885 = vrot.lane.b32.xlu0 %v1883, 64
  %v1886 = vpop.permute.xlu0 %1885
  %v1888 = vmul.f32 %v1882, %v1886
  %1890 = vrot.lane.b32.xlu0 %v1888, 64
  %v1891 = vpop.permute.xlu0 %1890
  %v1893 = vadd.f32 %v1710, %v1891
  %v1894 = vtanh.pop %v1893
  %v1895 = vsub.f32 %v1828, %v1894
  %1897 = vrot.lane.b32.xlu0 %v1895, 96
  %v1898 = vpop.permute.xlu0 %1897
  %v1900 = vmul.f32 %v1882, %v1898
  %1902 = vrot.lane.b32.xlu0 %v1900, 32
  %v1903 = vpop.permute.xlu0 %1902
  %v1905 = vadd.f32 %v1894, %v1903
  %v1906 = vpack.c.bf16 %v1905, %v1905
  %1908 = vrot.lane.b32.xlu0 %v1906, 64
  %v1909 = vpop.permute.xlu0 %1908
  %v1911 = vsel %vm173, %v1909, 0
  %1913 = vmatprep.subr.bf16.mxu0 0
  %1914 = vmatpush1.bf16.msra.mxu0 %v1752
  %1915 = vmatprep.subr.bf16.mxu0 0
  %1916 = vmatpush1.bf16.msra.mxu0 %v1753
  %1917 = vmatprep.subr.bf16.mxu0 0
  %1918 = vmatpush1.bf16.msra.mxu0 0
  %1919 = vmatprep.subr.bf16.mxu0 0
  %1920 = vmatpush1.bf16.msra.mxu0 0
  %1921 = vmatprep.subr.bf16.mxu0 0
  %1922 = vmatpush1.bf16.msra.mxu0 0
  %1923 = vmatprep.subr.bf16.mxu0 0
  %1924 = vmatpush1.bf16.msra.mxu0 0
  %1925 = vmatprep.subr.bf16.mxu0 0
  %1926 = vmatpush1.bf16.msra.mxu0 0
  %1927 = vmatprep.subr.bf16.mxu0 0
  %1928 = vmatpush1.bf16.msra.mxu0 0
  %1929 = vmatprep.subr.bf16.mxu0 0
  %1930 = vmatpush1.bf16.msra.mxu0 0
  %1931 = vmatprep.subr.bf16.mxu0 0
  %1932 = vmatpush1.bf16.msra.mxu0 0
  %1933 = vmatprep.subr.bf16.mxu0 0
  %1934 = vmatpush1.bf16.msra.mxu0 0
  %1935 = vmatprep.subr.bf16.mxu0 0
  %1936 = vmatpush1.bf16.msra.mxu0 0
  %1937 = vmatprep.subr.bf16.mxu0 0
  %1938 = vmatpush1.bf16.msra.mxu0 0
  %1939 = vmatprep.subr.bf16.mxu0 0
  %1940 = vmatpush1.bf16.msra.mxu0 0
  %1941 = vmatprep.subr.bf16.mxu0 0
  %1942 = vmatpush1.bf16.msra.mxu0 0
  %1943 = vmatprep.subr.bf16.mxu0 0
  %1944 = vmatpush1.bf16.msra.mxu0 0
  %1945 = vmatprep.mubr.bf16.mxu0 0
  %1946 = vmatmul.mubr.bf16.gmra.mrb[0].mxu0 %v1911
  %v1947 = vpop.f32.mrb[0].mxu0
  %v1948 = vadd.f32 0.0, %v1947
  %v1949 = vpop.f32.mrb[0].mxu0
  %v1950 = vpop.f32.mrb[0].mxu0
  %v1951 = vpop.f32.mrb[0].mxu0
  %1952 = vdwg.mxu0
  %v1953 = vadd.f32 %v1715, %v1948
  %v1954 = vxor.u32 %v1953, 2147483648
  %v1955 = vmul.f32 %v1954, 1.442695
  %v1956 = vpow.pop %v1955
  %v1957 = vadd.f32 %v1956, 1.0
  %v1958 = vrcp.pop %v1957
  %v1959 = vmul.f32 1.0, %v1958
  %v1960 = vadd.f32 %v1948, %v1804
  %1962 = vrot.lane.b32.xlu0 %v1960, 64
  %v1963 = vpop.permute.xlu0 %1962
  %v1965 = vmul.f32 %v1959, %v1963
  %1967 = vrot.lane.b32.xlu0 %v1965, 64
  %v1968 = vpop.permute.xlu0 %1967
  %v1970 = vadd.f32 %v1715, %v1968
  %v1971 = vtanh.pop %v1970
  %v1972 = vsub.f32 %v1905, %v1971
  %1974 = vrot.lane.b32.xlu0 %v1972, 96
  %v1975 = vpop.permute.xlu0 %1974
  %v1977 = vmul.f32 %v1959, %v1975
  %1979 = vrot.lane.b32.xlu0 %v1977, 32
  %v1980 = vpop.permute.xlu0 %1979
  %v1982 = vadd.f32 %v1971, %v1980
  %v1983 = vpack.c.bf16 %v1982, %v1982
  %1985 = vrot.lane.b32.xlu0 %v1983, 64
  %v1986 = vpop.permute.xlu0 %1985
  %v1988 = vsel %vm173, %v1986, 0
  %1990 = vmatprep.subr.bf16.mxu0 0
  %1991 = vmatpush1.bf16.msra.mxu0 %v1752
  %1992 = vmatprep.subr.bf16.mxu0 0
  %1993 = vmatpush1.bf16.msra.mxu0 %v1753
  %1994 = vmatprep.subr.bf16.mxu0 0
  %1995 = vmatpush1.bf16.msra.mxu0 0
  %1996 = vmatprep.subr.bf16.mxu0 0
  %1997 = vmatpush1.bf16.msra.mxu0 0
  %1998 = vmatprep.subr.bf16.mxu0 0
  %1999 = vmatpush1.bf16.msra.mxu0 0
  %2000 = vmatprep.subr.bf16.mxu0 0
  %2001 = vmatpush1.bf16.msra.mxu0 0
  %2002 = vmatprep.subr.bf16.mxu0 0
  %2003 = vmatpush1.bf16.msra.mxu0 0
  %2004 = vmatprep.subr.bf16.mxu0 0
  %2005 = vmatpush1.bf16.msra.mxu0 0
  %2006 = vmatprep.subr.bf16.mxu0 0
  %2007 = vmatpush1.bf16.msra.mxu0 0
  %2008 = vmatprep.subr.bf16.mxu0 0
  %2009 = vmatpush1.bf16.msra.mxu0 0
  %2010 = vmatprep.subr.bf16.mxu0 0
  %2011 = vmatpush1.bf16.msra.mxu0 0
  %2012 = vmatprep.subr.bf16.mxu0 0
  %2013 = vmatpush1.bf16.msra.mxu0 0
  %2014 = vmatprep.subr.bf16.mxu0 0
  %2015 = vmatpush1.bf16.msra.mxu0 0
  %2016 = vmatprep.subr.bf16.mxu0 0
  %2017 = vmatpush1.bf16.msra.mxu0 0
  %2018 = vmatprep.subr.bf16.mxu0 0
  %2019 = vmatpush1.bf16.msra.mxu0 0
  %2020 = vmatprep.subr.bf16.mxu0 0
  %2021 = vmatpush1.bf16.msra.mxu0 0
  %2022 = vmatprep.mubr.bf16.mxu0 0
  %2023 = vmatmul.mubr.bf16.gmra.mrb[0].mxu0 %v1988
  %v2024 = vpop.f32.mrb[0].mxu0
  %v2025 = vadd.f32 0.0, %v2024
  %v2026 = vpop.f32.mrb[0].mxu0
  %v2027 = vpop.f32.mrb[0].mxu0
  %v2028 = vpop.f32.mrb[0].mxu0
  %2029 = vdwg.mxu0
  %v2030 = vadd.f32 %v1718, %v2025
  %v2031 = vxor.u32 %v2030, 2147483648
  %v2032 = vmul.f32 %v2031, 1.442695
  %v2033 = vpow.pop %v2032
  %v2034 = vadd.f32 %v2033, 1.0
  %v2035 = vrcp.pop %v2034
  %v2036 = vmul.f32 1.0, %v2035
  %v2037 = vadd.f32 %v2025, %v1804
  %2039 = vrot.lane.b32.xlu0 %v2037, 64
  %v2040 = vpop.permute.xlu0 %2039
  %v2042 = vmul.f32 %v2036, %v2040
  %2044 = vrot.lane.b32.xlu0 %v2042, 64
  %v2045 = vpop.permute.xlu0 %2044
  %v2047 = vadd.f32 %v1718, %v2045
  %v2048 = vtanh.pop %v2047
  %v2049 = vsub.f32 %v1982, %v2048
  %2051 = vrot.lane.b32.xlu0 %v2049, 96
  %v2052 = vpop.permute.xlu0 %2051
  %v2054 = vmul.f32 %v2036, %v2052
  %2056 = vrot.lane.b32.xlu0 %v2054, 32
  %v2057 = vpop.permute.xlu0 %2056
  %v2059 = vadd.f32 %v2048, %v2057
  %v2060 = vpack.c.bf16 %v2059, %v2059
  %2062 = vrot.lane.b32.xlu0 %v2060, 64
  %v2063 = vpop.permute.xlu0 %2062
  %v2065 = vsel %vm173, %v2063, 0
  %2067 = vmatprep.subr.bf16.mxu0 0
  %2068 = vmatpush1.bf16.msra.mxu0 %v1752
  %2069 = vmatprep.subr.bf16.mxu0 0
  %2070 = vmatpush1.bf16.msra.mxu0 %v1753
  %2071 = vmatprep.subr.bf16.mxu0 0
  %2072 = vmatpush1.bf16.msra.mxu0 0
  %2073 = vmatprep.subr.bf16.mxu0 0
  %2074 = vmatpush1.bf16.msra.mxu0 0
  %2075 = vmatprep.subr.bf16.mxu0 0
  %2076 = vmatpush1.bf16.msra.mxu0 0
  %2077 = vmatprep.subr.bf16.mxu0 0
  %2078 = vmatpush1.bf16.msra.mxu0 0
  %2079 = vmatprep.subr.bf16.mxu0 0
  %2080 = vmatpush1.bf16.msra.mxu0 0
  %2081 = vmatprep.subr.bf16.mxu0 0
  %2082 = vmatpush1.bf16.msra.mxu0 0
  %2083 = vmatprep.subr.bf16.mxu0 0
  %2084 = vmatpush1.bf16.msra.mxu0 0
  %2085 = vmatprep.subr.bf16.mxu0 0
  %2086 = vmatpush1.bf16.msra.mxu0 0
  %2087 = vmatprep.subr.bf16.mxu0 0
  %2088 = vmatpush1.bf16.msra.mxu0 0
  %2089 = vmatprep.subr.bf16.mxu0 0
  %2090 = vmatpush1.bf16.msra.mxu0 0
  %2091 = vmatprep.subr.bf16.mxu0 0
  %2092 = vmatpush1.bf16.msra.mxu0 0
  %2093 = vmatprep.subr.bf16.mxu0 0
  %2094 = vmatpush1.bf16.msra.mxu0 0
  %2095 = vmatprep.subr.bf16.mxu0 0
  %2096 = vmatpush1.bf16.msra.mxu0 0
  %2097 = vmatprep.subr.bf16.mxu0 0
  %2098 = vmatpush1.bf16.msra.mxu0 0
  %2099 = vmatprep.mubr.bf16.mxu0 0
  %2100 = vmatmul.mubr.bf16.gmra.mrb[0].mxu0 %v2065
  %v2101 = vpop.f32.mrb[0].mxu0
  %v2102 = vadd.f32 0.0, %v2101
  %v2103 = vpop.f32.mrb[0].mxu0
  %v2104 = vpop.f32.mrb[0].mxu0
  %v2105 = vpop.f32.mrb[0].mxu0
  %2106 = vdwg.mxu0
  %v2107 = vadd.f32 %v1723, %v2102
  %v2108 = vxor.u32 %v2107, 2147483648
  %v2109 = vmul.f32 %v2108, 1.442695
  %v2110 = vpow.pop %v2109
  %v2111 = vadd.f32 %v2110, 1.0
  %v2112 = vrcp.pop %v2111
  %v2113 = vmul.f32 1.0, %v2112
  %v2114 = vadd.f32 %v2102, %v1804
  %2116 = vrot.lane.b32.xlu0 %v2114, 64
  %v2117 = vpop.permute.xlu0 %2116
  %v2119 = vmul.f32 %v2113, %v2117
  %2121 = vrot.lane.b32.xlu0 %v2119, 64
  %v2122 = vpop.permute.xlu0 %2121
  %v2124 = vadd.f32 %v1723, %v2122
  %v2125 = vtanh.pop %v2124
  %v2126 = vsub.f32 %v2059, %v2125
  %2128 = vrot.lane.b32.xlu0 %v2126, 96
  %v2129 = vpop.permute.xlu0 %2128
  %v2131 = vmul.f32 %v2113, %v2129
  %2133 = vrot.lane.b32.xlu0 %v2131, 32
  %v2134 = vpop.permute.xlu0 %2133
  %v2136 = vadd.f32 %v2125, %v2134
  %v2137 = vpack.c.bf16 %v2136, %v2136
  %2139 = vrot.lane.b32.xlu0 %v2137, 64
  %v2140 = vpop.permute.xlu0 %2139
  %v2142 = vsel %vm173, %v2140, 0
  %2144 = vmatprep.subr.bf16.mxu0 0
  %2145 = vmatpush1.bf16.msra.mxu0 %v1752
  %2146 = vmatprep.subr.bf16.mxu0 0
  %2147 = vmatpush1.bf16.msra.mxu0 %v1753
  %2148 = vmatprep.subr.bf16.mxu0 0
  %2149 = vmatpush1.bf16.msra.mxu0 0
  %2150 = vmatprep.subr.bf16.mxu0 0
  %2151 = vmatpush1.bf16.msra.mxu0 0
  %2152 = vmatprep.subr.bf16.mxu0 0
  %2153 = vmatpush1.bf16.msra.mxu0 0
  %2154 = vmatprep.subr.bf16.mxu0 0
  %2155 = vmatpush1.bf16.msra.mxu0 0
  %2156 = vmatprep.subr.bf16.mxu0 0
  %2157 = vmatpush1.bf16.msra.mxu0 0
  %2158 = vmatprep.subr.bf16.mxu0 0
  %2159 = vmatpush1.bf16.msra.mxu0 0
  %2160 = vmatprep.subr.bf16.mxu0 0
  %2161 = vmatpush1.bf16.msra.mxu0 0
  %2162 = vmatprep.subr.bf16.mxu0 0
  %2163 = vmatpush1.bf16.msra.mxu0 0
  %2164 = vmatprep.subr.bf16.mxu0 0
  %2165 = vmatpush1.bf16.msra.mxu0 0
  %2166 = vmatprep.subr.bf16.mxu0 0
  %2167 = vmatpush1.bf16.msra.mxu0 0
  %2168 = vmatprep.subr.bf16.mxu0 0
  %2169 = vmatpush1.bf16.msra.mxu0 0
  %2170 = vmatprep.subr.bf16.mxu0 0
  %2171 = vmatpush1.bf16.msra.mxu0 0
  %2172 = vmatprep.subr.bf16.mxu0 0
  %2173 = vmatpush1.bf16.msra.mxu0 0
  %2174 = vmatprep.subr.bf16.mxu0 0
  %2175 = vmatpush1.bf16.msra.mxu0 0
  %2176 = vmatprep.mubr.bf16.mxu0 0
  %2177 = vmatmul.mubr.bf16.gmra.mrb[0].mxu0 %v2142
  %v2178 = vpop.f32.mrb[0].mxu0
  %v2179 = vadd.f32 0.0, %v2178
  %v2180 = vpop.f32.mrb[0].mxu0
  %v2181 = vpop.f32.mrb[0].mxu0
  %v2182 = vpop.f32.mrb[0].mxu0
  %2183 = vdwg.mxu0
  %v2184 = vadd.f32 %v1726, %v2179
  %v2185 = vxor.u32 %v2184, 2147483648
  %v2186 = vmul.f32 %v2185, 1.442695
  %v2187 = vpow.pop %v2186
  %v2188 = vadd.f32 %v2187, 1.0
  %v2189 = vrcp.pop %v2188
  %v2190 = vmul.f32 1.0, %v2189
  %v2191 = vadd.f32 %v2179, %v1804
  %2193 = vrot.lane.b32.xlu0 %v2191, 64
  %v2194 = vpop.permute.xlu0 %2193
  %v2196 = vmul.f32 %v2190, %v2194
  %2198 = vrot.lane.b32.xlu0 %v2196, 64
  %v2199 = vpop.permute.xlu0 %2198
  %v2201 = vadd.f32 %v1726, %v2199
  %v2202 = vtanh.pop %v2201
  %v2203 = vsub.f32 %v2136, %v2202
  %2205 = vrot.lane.b32.xlu0 %v2203, 96
  %v2206 = vpop.permute.xlu0 %2205
  %v2208 = vmul.f32 %v2190, %v2206
  %2210 = vrot.lane.b32.xlu0 %v2208, 32
  %v2211 = vpop.permute.xlu0 %2210
  %v2213 = vadd.f32 %v2202, %v2211
  %v2214 = vpack.c.bf16 %v2213, %v2213
  %2216 = vrot.lane.b32.xlu0 %v2214, 64
  %v2217 = vpop.permute.xlu0 %2216
  %v2219 = vsel %vm173, %v2217, 0
  %2221 = vmatprep.subr.bf16.mxu0 0
  %2222 = vmatpush1.bf16.msra.mxu0 %v1752
  %2223 = vmatprep.subr.bf16.mxu0 0
  %2224 = vmatpush1.bf16.msra.mxu0 %v1753
  %2225 = vmatprep.subr.bf16.mxu0 0
  %2226 = vmatpush1.bf16.msra.mxu0 0
  %2227 = vmatprep.subr.bf16.mxu0 0
  %2228 = vmatpush1.bf16.msra.mxu0 0
  %2229 = vmatprep.subr.bf16.mxu0 0
  %2230 = vmatpush1.bf16.msra.mxu0 0
  %2231 = vmatprep.subr.bf16.mxu0 0
  %2232 = vmatpush1.bf16.msra.mxu0 0
  %2233 = vmatprep.subr.bf16.mxu0 0
  %2234 = vmatpush1.bf16.msra.mxu0 0
  %2235 = vmatprep.subr.bf16.mxu0 0
  %2236 = vmatpush1.bf16.msra.mxu0 0
  %2237 = vmatprep.subr.bf16.mxu0 0
  %2238 = vmatpush1.bf16.msra.mxu0 0
  %2239 = vmatprep.subr.bf16.mxu0 0
  %2240 = vmatpush1.bf16.msra.mxu0 0
  %2241 = vmatprep.subr.bf16.mxu0 0
  %2242 = vmatpush1.bf16.msra.mxu0 0
  %2243 = vmatprep.subr.bf16.mxu0 0
  %2244 = vmatpush1.bf16.msra.mxu0 0
  %2245 = vmatprep.subr.bf16.mxu0 0
  %2246 = vmatpush1.bf16.msra.mxu0 0
  %2247 = vmatprep.subr.bf16.mxu0 0
  %2248 = vmatpush1.bf16.msra.mxu0 0
  %2249 = vmatprep.subr.bf16.mxu0 0
  %2250 = vmatpush1.bf16.msra.mxu0 0
  %2251 = vmatprep.subr.bf16.mxu0 0
  %2252 = vmatpush1.bf16.msra.mxu0 0
  %2253 = vmatprep.mubr.bf16.mxu0 0
  %2254 = vmatmul.mubr.bf16.gmra.mrb[0].mxu0 %v2219
  %v2255 = vpop.f32.mrb[0].mxu0
  %v2256 = vadd.f32 0.0, %v2255
  %v2257 = vpop.f32.mrb[0].mxu0
  %v2258 = vpop.f32.mrb[0].mxu0
  %v2259 = vpop.f32.mrb[0].mxu0
  %2260 = vdwg.mxu0
  %v2261 = vadd.f32 %v1731, %v2256
  %v2262 = vxor.u32 %v2261, 2147483648
  %v2263 = vmul.f32 %v2262, 1.442695
  %v2264 = vpow.pop %v2263
  %v2265 = vadd.f32 %v2264, 1.0
  %v2266 = vrcp.pop %v2265
  %v2267 = vmul.f32 1.0, %v2266
  %v2268 = vadd.f32 %v2256, %v1804
  %2270 = vrot.lane.b32.xlu0 %v2268, 64
  %v2271 = vpop.permute.xlu0 %2270
  %v2273 = vmul.f32 %v2267, %v2271
  %2275 = vrot.lane.b32.xlu0 %v2273, 64
  %v2276 = vpop.permute.xlu0 %2275
  %v2278 = vadd.f32 %v1731, %v2276
  %v2279 = vtanh.pop %v2278
  %v2280 = vsub.f32 %v2213, %v2279
  %2282 = vrot.lane.b32.xlu0 %v2280, 96
  %v2283 = vpop.permute.xlu0 %2282
  %v2285 = vmul.f32 %v2267, %v2283
  %2287 = vrot.lane.b32.xlu0 %v2285, 32
  %v2288 = vpop.permute.xlu0 %2287
  %v2290 = vadd.f32 %v2279, %v2288
  %v2291 = vpack.c.bf16 %v2290, %v2290
  %2293 = vrot.lane.b32.xlu0 %v2291, 64
  %v2294 = vpop.permute.xlu0 %2293
  %v2296 = vsel %vm173, %v2294, 0
  %2298 = vmatprep.subr.bf16.mxu0 0
  %2299 = vmatpush1.bf16.msra.mxu0 %v1752
  %2300 = vmatprep.subr.bf16.mxu0 0
  %2301 = vmatpush1.bf16.msra.mxu0 %v1753
  %2302 = vmatprep.subr.bf16.mxu0 0
  %2303 = vmatpush1.bf16.msra.mxu0 0
  %2304 = vmatprep.subr.bf16.mxu0 0
  %2305 = vmatpush1.bf16.msra.mxu0 0
  %2306 = vmatprep.subr.bf16.mxu0 0
  %2307 = vmatpush1.bf16.msra.mxu0 0
  %2308 = vmatprep.subr.bf16.mxu0 0
  %2309 = vmatpush1.bf16.msra.mxu0 0
  %2310 = vmatprep.subr.bf16.mxu0 0
  %2311 = vmatpush1.bf16.msra.mxu0 0
  %2312 = vmatprep.subr.bf16.mxu0 0
  %2313 = vmatpush1.bf16.msra.mxu0 0
  %2314 = vmatprep.subr.bf16.mxu0 0
  %2315 = vmatpush1.bf16.msra.mxu0 0
  %2316 = vmatprep.subr.bf16.mxu0 0
  %2317 = vmatpush1.bf16.msra.mxu0 0
  %2318 = vmatprep.subr.bf16.mxu0 0
  %2319 = vmatpush1.bf16.msra.mxu0 0
  %2320 = vmatprep.subr.bf16.mxu0 0
  %2321 = vmatpush1.bf16.msra.mxu0 0
  %2322 = vmatprep.subr.bf16.mxu0 0
  %2323 = vmatpush1.bf16.msra.mxu0 0
  %2324 = vmatprep.subr.bf16.mxu0 0
  %2325 = vmatpush1.bf16.msra.mxu0 0
  %2326 = vmatprep.subr.bf16.mxu0 0
  %2327 = vmatpush1.bf16.msra.mxu0 0
  %2328 = vmatprep.subr.bf16.mxu0 0
  %2329 = vmatpush1.bf16.msra.mxu0 0
  %2330 = vmatprep.mubr.bf16.mxu0 0
  %2331 = vmatmul.mubr.bf16.gmra.mrb[0].mxu0 %v2296
  %v2332 = vpop.f32.mrb[0].mxu0
  %v2333 = vadd.f32 0.0, %v2332
  %v2334 = vpop.f32.mrb[0].mxu0
  %v2335 = vpop.f32.mrb[0].mxu0
  %v2336 = vpop.f32.mrb[0].mxu0
  %2337 = vdwg.mxu0
  %v2338 = vadd.f32 %v1734, %v2333
  %v2339 = vxor.u32 %v2338, 2147483648
  %v2340 = vmul.f32 %v2339, 1.442695
  %v2341 = vpow.pop %v2340
  %v2342 = vadd.f32 %v2341, 1.0
  %v2343 = vrcp.pop %v2342
  %v2344 = vmul.f32 1.0, %v2343
  %v2345 = vadd.f32 %v2333, %v1804
  %2347 = vrot.lane.b32.xlu0 %v2345, 64
  %v2348 = vpop.permute.xlu0 %2347
  %v2350 = vmul.f32 %v2344, %v2348
  %2352 = vrot.lane.b32.xlu0 %v2350, 64
  %v2353 = vpop.permute.xlu0 %2352
  %v2355 = vadd.f32 %v1734, %v2353
  %v2356 = vtanh.pop %v2355
  %v2357 = vsub.f32 %v2290, %v2356
  %2359 = vrot.lane.b32.xlu0 %v2357, 96
  %v2360 = vpop.permute.xlu0 %2359
  %v2362 = vmul.f32 %v2344, %v2360
  %2364 = vrot.lane.b32.xlu0 %v2362, 32
  %v2365 = vpop.permute.xlu0 %2364
  %v2367 = vadd.f32 %v2356, %v2365
  %v2368 = vld [vmem:[%s1] sm:$0xff]
  %2370 = vrot.lane.b32.xlu0 %v2368, 64
  %v2371 = vpop.permute.xlu0 %2370
  %v2373 = vmul.f32 %v2367, %v2371
  %v2374 = vld [vmem:[%s7] sm:$0xff]
  %v2375 = vld [vmem:[%s7 + $0x8] sm:$0xff]
  %v2376 = vld [vmem:[%s7 + $0x10] sm:$0xff]
  %v2377 = vld [vmem:[%s7 + $0x18] sm:$0xff]
  %v2378 = vld [vmem:[%s8] sm:$0x1]
  %v2380 = vlaneseq
  %v2381 = vshrl.u32 %v2380, 7
  %v2382 = vsub.s32 0, %v2381
  %v2383 = vrot.slane %v2378, %v2382
  %2386 = vrot.lane.b32.xlu0 %v2373, 64
  %v2387 = vpop.permute.xlu0 %2386
  %v2388 = vsel %vm173, %v2387, 0
  %2390 = vmatprep.subr.mxu0 0.0
  %2391 = vmatpush1.msra.mxu0 %v2374
  %2392 = vmatprep.subr.mxu0 0.0
  %2393 = vmatpush1.msra.mxu0 %v2375
  %2394 = vmatprep.subr.mxu0 0.0
  %2395 = vmatpush1.msra.mxu0 %v2376
  %2396 = vmatprep.subr.mxu0 0.0
  %2397 = vmatpush1.msra.mxu0 %v2377
  %2398 = vmatprep.subr.mxu0 0.0
  %2399 = vmatpush1.msra.mxu0 0.0
  %2400 = vmatprep.subr.mxu0 0.0
  %2401 = vmatpush1.msra.mxu0 0.0
  %2402 = vmatprep.subr.mxu0 0.0
  %2403 = vmatpush1.msra.mxu0 0.0
  %2404 = vmatprep.subr.mxu0 0.0
  %2405 = vmatpush1.msra.mxu0 0.0
  %2406 = vmatprep.subr.mxu0 0.0
  %2407 = vmatpush1.msra.mxu0 0.0
  %2408 = vmatprep.subr.mxu0 0.0
  %2409 = vmatpush1.msra.mxu0 0.0
  %2410 = vmatprep.subr.mxu0 0.0
  %2411 = vmatpush1.msra.mxu0 0.0
  %2412 = vmatprep.subr.mxu0 0.0
  %2413 = vmatpush1.msra.mxu0 0.0
  %2414 = vmatprep.subr.mxu0 0.0
  %2415 = vmatpush1.msra.mxu0 0.0
  %2416 = vmatprep.subr.mxu0 0.0
  %2417 = vmatpush1.msra.mxu0 0.0
  %2418 = vmatprep.subr.mxu0 0.0
  %2419 = vmatpush1.msra.mxu0 0.0
  %2420 = vmatprep.subr.mxu0 0.0
  %2421 = vmatpush1.msra.mxu0 0.0
  %2422 = vmatprep.subr.mxu0 0.0
  %2423 = vmatpush1.msra.mxu0 0.0
  %2424 = vmatprep.subr.mxu0 0.0
  %2425 = vmatpush1.msra.mxu0 0.0
  %2426 = vmatprep.subr.mxu0 0.0
  %2427 = vmatpush1.msra.mxu0 0.0
  %2428 = vmatprep.subr.mxu0 0.0
  %2429 = vmatpush1.msra.mxu0 0.0
  %2430 = vmatprep.subr.mxu0 0.0
  %2431 = vmatpush1.msra.mxu0 0.0
  %2432 = vmatprep.subr.mxu0 0.0
  %2433 = vmatpush1.msra.mxu0 0.0
  %2434 = vmatprep.subr.mxu0 0.0
  %2435 = vmatpush1.msra.mxu0 0.0
  %2436 = vmatprep.subr.mxu0 0.0
  %2437 = vmatpush1.msra.mxu0 0.0
  %2438 = vmatprep.subr.mxu0 0.0
  %2439 = vmatpush1.msra.mxu0 0.0
  %2440 = vmatprep.subr.mxu0 0.0
  %2441 = vmatpush1.msra.mxu0 0.0
  %2442 = vmatprep.subr.mxu0 0.0
  %2443 = vmatpush1.msra.mxu0 0.0
  %2444 = vmatprep.subr.mxu0 0.0
  %2445 = vmatpush1.msra.mxu0 0.0
  %2446 = vmatprep.subr.mxu0 0.0
  %2447 = vmatpush1.msra.mxu0 0.0
  %2448 = vmatprep.subr.mxu0 0.0
  %2449 = vmatpush1.msra.mxu0 0.0
  %2450 = vmatprep.subr.mxu0 0.0
  %2451 = vmatpush1.msra.mxu0 0.0
  %2452 = vmatprep.subr.mxu0 0.0
  %2453 = vmatpush1.msra.mxu0 0.0
  %2454 = vmatprep.mubr.f32.mxu0 0.0
  %2455 = vmatmul.mubr.f32.gmra.mrb[0].mxu0 %v2388
  %v2456 = vpop.f32.mrb[0].mxu0
  %v2457 = vadd.f32 %v2383, %v2456
  %v2458 = vpop.f32.mrb[0].mxu0
  %2459 = vdwg.mxu0
  %vm2460 = vcmask 31744
  %2461 = vst.msk [vmem:[%s9] sm:$0xff] %vm2460, %v2457
  // Predicated region
  $region38: #{_gru_forward_impl.1} parent=0 // pred_check
    _
  $region39: #{_gru_forward_impl.1} parent=0 // pred_check_branch
    %2463 = sbr.rel (0) target = $region41
  $region40: #{_gru_forward_impl.1} parent=0 // pred_region
    _
  $region41: #{_gru_forward_impl.1} parent=0 // pred_fallthru
    _
  // Predicated region
  $region42: #{_gru_forward_impl.1} parent=0 // pred_check
    _
  $region43: #{_gru_forward_impl.1} parent=0 // pred_check_branch
    %2465 = sbr.rel (0) target = $region45
  $region44: #{_gru_forward_impl.1} parent=0 // pred_region
    _
  $region45: #{_gru_forward_impl.1} parent=0 // pred_fallthru
    _

</llo_original>
